<compile_context>
chip_gen: v6e
topology: v6e:2x2x1
jax: 0.10.0
libtpu: 0.0.40
codegen_flags: <defaults>
</compile_context>

<pallas_src>
import functools

import jax
import jax.numpy as jnp
from jax.experimental import pallas as pl
from jax.experimental.pallas import tpu as pltpu

_KSIZE = 5            # nn.Conv2d(..., 5) in the reference module
_COPY_CHUNK = 1024    # lane chunk for im2col copies (bounds live vreg ranges)


# --------------------------------------------------------------------------
# Generation / padding aware sizing helpers.
# --------------------------------------------------------------------------
def _round_up(x, m):
    return ((x + m - 1) // m) * m


def _vmem_budget_bytes():
    """VMEM limit with headroom (v5e/v6e: 128 MiB parts, v7x: 64 MiB)."""
    try:
        cap = int(pltpu.get_tpu_info().vmem_capacity_bytes)
    except Exception:
        cap = 64 * 1024 * 1024
    cap = max(min(cap, 128 * 1024 * 1024), 32 * 1024 * 1024)
    return (cap * 3) // 4


def _pick_conv_row_tile(Ho, W, Cin, Cout, KH, KW, budget):
    """Largest row tile TH (divisor of Ho, 128-aligned TH*W lanes or full) whose
    padded im2col scratch + double-buffered slab/output blocks fit the budget."""
    K = Cin * KH * KW
    for th in range(Ho, 0, -1):
        if Ho % th:
            continue
        if (th * W) % 128 != 0 and th != Ho:
            continue
        thw_pad = _round_up(th * W, 128)
        patch = _round_up(K, 8) * thw_pad * 4
        slab = _round_up(Cin, 8) * _round_up((th + KH - 1) * W + KW - 1, 128) * 4
        outb = _round_up(Cout, 8) * thw_pad * 4
        if patch + 2 * (slab + outb) <= budget:
            return th
    raise ValueError("no feasible conv row tile for the VMEM budget")


def _pick_hd_tile(Hd):
    """Split the hidden dim into 2 blocks when possible so the dominant fc_in_w
    stream can run on both v7x TensorCores (harmless no-op on v5e/v6e)."""
    if Hd >= 256 and Hd % 256 == 0:
        return Hd // 2
    return Hd


def _pick_f_tile(F, THd, N, budget):
    """Largest multiple-of-128 F chunk that divides F and whose double-buffered
    bf16 weight/activation blocks fit the budget (prefers 8192/4096)."""
    tk = (min(F, 8192) // 128) * 128
    while tk >= 128:
        if F % tk == 0 and 2 * THd * tk * 2 + 2 * max(N, 8) * tk * 2 <= budget:
            return tk
        tk -= 128
    need = 2 * THd * F * 2 + 2 * max(N, 8) * F * 2
    assert need <= budget, f"fc_in reduction block (F={F}) does not fit VMEM"
    return F


# --------------------------------------------------------------------------
# Kernel 1: valid conv (stride 1) + bias + ReLU, channel-major / lane-dense.
# --------------------------------------------------------------------------
def _conv_relu_kernel(x_ref, w_ref, b_ref, o_ref, patch_ref, *, kh, kw, w_stride):
    """One (batch, row-tile) step.

    x_ref     : (1, 1, Cin, SLAB)      input row slab (rows flattened, stride w_stride)
    w_ref     : (Cout, K)              K ordered (dy, dx, cin)
    b_ref     : (Cout, 1)
    o_ref     : (1, Cout, TH*w_stride) full-width output rows (cols >= valid are garbage)
    patch_ref : (K, TH*w_stride)       lane-dense im2col scratch
    """
    cin = x_ref.shape[2]
    thw = patch_ref.shape[1]
    chunks = [(c0, min(_COPY_CHUNK, thw - c0)) for c0 in range(0, thw, _COPY_CHUNK)]
    # Lane-dense im2col: each (dy, dx) writes `cin` full-width patch rows from a
    # statically-offset contiguous slice of the slab (no reshapes, no masked lanes).
    for dy in range(kh):
        for dx in range(kw):
            row = (dy * kw + dx) * cin
            src = dy * w_stride + dx
            for c0, cl in chunks:
                patch_ref[row:row + cin, c0:c0 + cl] = (
                    x_ref[0, 0, :, src + c0:src + c0 + cl])
    acc = jnp.dot(w_ref[...], patch_ref[...], preferred_element_type=jnp.float32)
    o_ref[0] = jnp.maximum(acc + b_ref[...], 0.0).astype(o_ref.dtype)


def _build_row_slabs(x_flat, TH, KH, KW, W, R):
    """(N, C, H*W) -> (N, R, C, SLAB): overlapping row slabs so all in-kernel
    offsets are static.  Cheap XLA copy (~(TH+KH-1)/TH of the activation)."""
    N, C, L = x_flat.shape
    slab_len = (TH + KH - 1) * W + KW - 1
    need = (R - 1) * TH * W + slab_len
    xp = jnp.pad(x_flat, ((0, 0), (0, 0), (0, need - L)))
    slabs = [jax.lax.slice_in_dim(xp, r * TH * W, r * TH * W + slab_len, axis=2)
             for r in range(R)]
    return jnp.stack(slabs, axis=1)


def conv2d_relu(x_flat, w_k, b_col, *, H, W, KH, KW, out_dtype=jnp.float32):
    """Valid, stride-1 conv + bias + ReLU over row-flattened NCHW images.

    x_flat : (N, Cin, H*W)  rows with stride-width W (columns beyond the valid
             width may hold garbage; they only ever pollute garbage columns).
    Returns (N, Cout, Ho*W), Ho = H-KH+1; valid output cols j < valid_w - KW + 1.
    """
    N, Cin, L = x_flat.shape
    assert L == H * W
    Cout, K = w_k.shape
    assert K == Cin * KH * KW
    Ho = H - KH + 1

    limit = _vmem_budget_bytes()
    TH = _pick_conv_row_tile(Ho, W, Cin, Cout, KH, KW, budget=(limit * 7) // 10)
    R = Ho // TH
    slabs = _build_row_slabs(x_flat, TH, KH, KW, W, R)
    slab_len = slabs.shape[-1]

    return pl.pallas_call(
        functools.partial(_conv_relu_kernel, kh=KH, kw=KW, w_stride=W),
        out_shape=jax.ShapeDtypeStruct((N, Cout, Ho * W), out_dtype),
        grid=(N, R),
        in_specs=[
            pl.BlockSpec((1, 1, Cin, slab_len), lambda n, r: (n, r, 0, 0)),
            pl.BlockSpec((Cout, K), lambda n, r: (0, 0)),
            pl.BlockSpec((Cout, 1), lambda n, r: (0, 0)),
        ],
        out_specs=pl.BlockSpec((1, Cout, TH * W), lambda n, r: (n, 0, r)),
        scratch_shapes=[pltpu.VMEM((K, TH * W), x_flat.dtype)],
        compiler_params=pltpu.CompilerParams(
            dimension_semantics=("parallel", "parallel"),
            vmem_limit_bytes=limit),
    )(slabs, w_k, b_col)


# --------------------------------------------------------------------------
# Kernel 2: FC_input + LeakyReLU(0.2), bf16 weight stream, tiled F reduction,
#           hidden dim as a parallel axis (v7x dual-TC).
# --------------------------------------------------------------------------
def _fc_in_kernel(h_ref, w_ref, b_ref, h1_ref, acc_ref):
    kb = pl.program_id(1)

    @pl.when(kb == 0)
    def _init():
        acc_ref[...] = jnp.zeros_like(acc_ref)

    # fc_in_w streamed in its native (hidden, F) layout; contract over F (q@k.T style).
    acc_ref[...] += jnp.dot(h_ref[...], w_ref[...].T,
                            preferred_element_type=jnp.float32)

    @pl.when(kb == pl.num_programs(1) - 1)
    def _finish():
        a = acc_ref[...] + b_ref[...]
        h1_ref[...] = jnp.where(a > 0, a, 0.2 * a)          # LeakyReLU(0.2)


def fc_input_leaky(h_bf16, w_bf16, b_row):
    N, F = h_bf16.shape
    Hd, F2 = w_bf16.shape
    assert F == F2

    limit = _vmem_budget_bytes()
    THd = _pick_hd_tile(Hd)
    TK = _pick_f_tile(F, THd, N, budget=(limit * 7) // 10)
    HB, KB = Hd // THd, F // TK

    return pl.pallas_call(
        _fc_in_kernel,
        out_shape=jax.ShapeDtypeStruct((N, Hd), jnp.float32),
        grid=(HB, KB),
        in_specs=[
            pl.BlockSpec((N, TK), lambda hb, kb: (0, kb)),     # lane-dense activations
            pl.BlockSpec((THd, TK), lambda hb, kb: (hb, kb)),  # bf16 weight stream
            pl.BlockSpec((1, THd), lambda hb, kb: (0, hb)),
        ],
        out_specs=pl.BlockSpec((N, THd), lambda hb, kb: (0, hb)),
        scratch_shapes=[pltpu.VMEM((N, THd), jnp.float32)],
        compiler_params=pltpu.CompilerParams(
            dimension_semantics=("parallel", "arbitrary"),
            vmem_limit_bytes=limit),
    )(h_bf16, w_bf16, b_row)


# --------------------------------------------------------------------------
# Kernel 3: fused mean / log_var heads (tiny).
# --------------------------------------------------------------------------
def _heads_kernel(h1_ref, w_ref, b_ref, o_ref):
    o_ref[...] = (jnp.dot(h1_ref[...], w_ref[...],
                          preferred_element_type=jnp.float32) + b_ref[...])


def vae_heads(h1, wmv_t, bmv_row):
    N, Hd = h1.shape
    L2 = wmv_t.shape[1]
    return pl.pallas_call(
        _heads_kernel,
        out_shape=jax.ShapeDtypeStruct((N, L2), jnp.float32),
        grid=(1,),
        in_specs=[
            pl.BlockSpec((N, Hd), lambda i: (0, 0)),
            pl.BlockSpec((Hd, L2), lambda i: (0, 0)),
            pl.BlockSpec((1, L2), lambda i: (0, 0)),
        ],
        out_specs=pl.BlockSpec((N, L2), lambda i: (0, 0)),
        compiler_params=pltpu.CompilerParams(
            dimension_semantics=("arbitrary",),
            vmem_limit_bytes=_vmem_budget_bytes()),
    )(h1, wmv_t, bmv_row)


# --------------------------------------------------------------------------
# One-time parameter prep (outside the jitted forward) + the forward pass.
# --------------------------------------------------------------------------
def prepare_params(params):
    """All weight permutations / casts happen here, once, at load time."""
    c1o = params["conv1_w"].shape[0]
    c2o = params["conv2_w"].shape[0]
    return {
        # OIHW -> (Cout, K) with K ordered (dy, dx, cin) to match the im2col rows.
        "conv1_w": jnp.transpose(params["conv1_w"], (0, 2, 3, 1)).reshape(c1o, -1),
        "conv1_b": params["conv1_b"].reshape(-1, 1),
        "conv2_w": jnp.transpose(params["conv2_w"], (0, 2, 3, 1)).reshape(c2o, -1),
        "conv2_b": params["conv2_b"].reshape(-1, 1),
        # fc_in_w stays in its native (hidden, F) NCHW-flatten layout; bf16 stream.
        "fc_in_w": params["fc_in_w"].astype(jnp.bfloat16),
        "fc_in_b": params["fc_in_b"].reshape(1, -1),
        # mean / log_var heads fused into one (hidden, 2L) matmul.
        "wmv_t": jnp.concatenate([params["fc_mean_w"], params["fc_var_w"]], 0).T,
        "bmv": jnp.concatenate([params["fc_mean_b"], params["fc_var_b"]], 0).reshape(1, -1),
    }


def encoder_forward(x_nchw, prep):
    N, Cin, H, W = x_nchw.shape
    k = _KSIZE

    # Conv1 + ReLU (channel-major, full-stride-width outputs).
    h = conv2d_relu(x_nchw.reshape(N, Cin, H * W), prep["conv1_w"], prep["conv1_b"],
                    H=H, W=W, KH=k, KW=k, out_dtype=jnp.float32)
    H1 = H - k + 1                      # conv1 output height; stride width stays W

    # Conv2 + ReLU; emit bf16 directly to feed the bandwidth-bound MLP stream.
    h = conv2d_relu(h, prep["conv2_w"], prep["conv2_b"],
                    H=H1, W=W, KH=k, KW=k, out_dtype=jnp.bfloat16)
    H2 = H1 - k + 1
    W2 = (W - k + 1) - k + 1            # valid output width after both convs
    C2 = prep["conv2_w"].shape[0]

    # Drop padded garbage columns; flatten in PyTorch's NCHW (c, h, w) order.
    h_flat = h.reshape(N, C2, H2, W)[:, :, :, :W2].reshape(N, C2 * H2 * W2)

    # FC_input + LeakyReLU (streamed bf16, f32 accumulation), then fused heads.
    h1 = fc_input_leaky(h_flat, prep["fc_in_w"], prep["fc_in_b"])
    out = vae_heads(h1, prep["wmv_t"], prep["bmv"])
    L = prep["wmv_t"].shape[1] // 2
    return out[:, :L], out[:, L:]


# --------------------------------------------------------------------------
# Pure-JAX reference + deterministic synthetic params.
# --------------------------------------------------------------------------
def _reference_forward(x_nchw, params):
    out = jax.lax.conv_general_dilated(
        x_nchw, params["conv1_w"], (1, 1), "VALID",
        dimension_numbers=("NCHW", "OIHW", "NCHW"),
        precision=jax.lax.Precision.HIGHEST)
    out = jax.nn.relu(out + params["conv1_b"][None, :, None, None])
    out = jax.lax.conv_general_dilated(
        out, params["conv2_w"], (1, 1), "VALID",
        dimension_numbers=("NCHW", "OIHW", "NCHW"),
        precision=jax.lax.Precision.HIGHEST)
    out = jax.nn.relu(out + params["conv2_b"][None, :, None, None])
    hf = out.reshape(out.shape[0], -1)
    h1 = hf @ params["fc_in_w"].T + params["fc_in_b"]
    h1 = jnp.where(h1 > 0, h1, 0.2 * h1)
    mean = h1 @ params["fc_mean_w"].T + params["fc_mean_b"]
    log_var = h1 @ params["fc_var_w"].T + params["fc_var_b"]
    return mean, log_var


def make_params(key, in_ch, spatial, hidden_dim, latent_dim):
    s_out = spatial - 8                  # after two valid 5x5 convs
    feat = 32 * s_out * s_out
    ks = jax.random.split(key, 10)
    scale = 0.05
    return {
        "conv1_w": scale * jax.random.normal(ks[0], (16, in_ch, 5, 5), jnp.float32),
        "conv1_b": scale * jax.random.normal(ks[1], (16,), jnp.float32),
        "conv2_w": scale * jax.random.normal(ks[2], (32, 16, 5, 5), jnp.float32),
        "conv2_b": scale * jax.random.normal(ks[3], (32,), jnp.float32),
        "fc_in_w": scale * jax.random.normal(ks[4], (hidden_dim, feat), jnp.float32),
        "fc_in_b": scale * jax.random.normal(ks[5], (hidden_dim,), jnp.float32),
        "fc_mean_w": scale * jax.random.normal(ks[6], (latent_dim, hidden_dim), jnp.float32),
        "fc_mean_b": scale * jax.random.normal(ks[7], (latent_dim,), jnp.float32),
        "fc_var_w": scale * jax.random.normal(ks[8], (latent_dim, hidden_dim), jnp.float32),
        "fc_var_b": scale * jax.random.normal(ks[9], (latent_dim,), jnp.float32),
    }


if __name__ == "__main__":
    # Small shapes consistent with the module's structure (the original uses
    # 200x200 inputs -> 192x192 after two valid 5x5 convs; here 16x16 -> 8x8).
    N, Cin, S = 2, 4, 16
    hidden_dim, latent_dim = 32, 8

    key = jax.random.PRNGKey(0)
    k_x, k_p = jax.random.split(key)
    x = jax.random.normal(k_x, (N, Cin, S, S), jnp.float32)      # NCHW like PyTorch
    params = make_params(k_p, Cin, S, hidden_dim, latent_dim)

    prep = prepare_params(params)        # one-time weight prep, outside the jit
    fwd = jax.jit(encoder_forward)
    mean, log_var = fwd(x, prep)
    jax.block_until_ready((mean, log_var))
    assert mean.shape == (N, latent_dim) and log_var.shape == (N, latent_dim)

    # Sanity check against a pure-JAX reference (bf16 stream -> loose tolerance).
    mean_ref, log_var_ref = _reference_forward(x, params)
    assert jnp.allclose(mean, mean_ref, rtol=2e-2, atol=2e-2)
    assert jnp.allclose(log_var, log_var_ref, rtol=2e-2, atol=2e-2)

    print("KERNEL_OK")
</pallas_src>

<mosaic_0001>
module attributes {stable_mosaic.version = 11 : i64} {
  func.func @_conv_relu_kernel(%arg0: i32, %arg1: i32, %arg2: memref<1x1x4x260xf32, #tpu.memory_space<vmem>>, %arg3: memref<16x100xf32, #tpu.memory_space<vmem>>, %arg4: memref<16x1xf32, #tpu.memory_space<vmem>>, %arg5: memref<1x16x192xf32, #tpu.memory_space<vmem>>, %arg6: memref<100x192xf32, #tpu.memory_space<vmem>>) attributes {dimension_semantics = [#tpu.dimension_semantics<parallel>, #tpu.dimension_semantics<parallel>], iteration_bounds = array<i64: 2, 1>, scalar_prefetch = 0 : i64, scratch_operands = 1 : i64, tpu.core_type = #tpu.core_type<tc>, window_params = [{transform_indices = @transform_0, window_bounds = array<i64: 1, 1, 4, 260>}, {pipeline_mode = #tpu.pipeline_mode<synchronous>, transform_indices = @transform_1, window_bounds = array<i64: 16, 100>}, {pipeline_mode = #tpu.pipeline_mode<synchronous>, transform_indices = @transform_2, window_bounds = array<i64: 16, 1>}, {transform_indices = @transform_3, window_bounds = array<i64: 1, 16, 192>}]} {
    %c0 = arith.constant 0 : index
    %c0_0 = arith.constant 0 : index
    %c0_1 = arith.constant 0 : index
    %c0_2 = arith.constant 0 : index
    %0 = vector.load %arg2[%c0, %c0_0, %c0_1, %c0_2] : memref<1x1x4x260xf32, #tpu.memory_space<vmem>>, vector<1x1x4x192xf32>
    %1 = vector.shape_cast %0 : vector<1x1x4x192xf32> to vector<4x192xf32>
    %c0_3 = arith.constant 0 : index
    %c0_4 = arith.constant 0 : index
    %2 = vector.load %arg6[%c0_3, %c0_4] : memref<100x192xf32, #tpu.memory_space<vmem>>, vector<4x192xf32>
    tpu.vector_store %arg6[%c0_3, %c0_4], %1 {strides = array<i32>} : memref<100x192xf32, #tpu.memory_space<vmem>>, vector<4x192xf32>,
    %c0_5 = arith.constant 0 : index
    %c0_6 = arith.constant 0 : index
    %c0_7 = arith.constant 0 : index
    %c1 = arith.constant 1 : index
    %3 = vector.load %arg2[%c0_5, %c0_6, %c0_7, %c1] : memref<1x1x4x260xf32, #tpu.memory_space<vmem>>, vector<1x1x4x192xf32>
    %4 = vector.shape_cast %3 : vector<1x1x4x192xf32> to vector<4x192xf32>
    %c4 = arith.constant 4 : index
    %c0_8 = arith.constant 0 : index
    %5 = vector.load %arg6[%c4, %c0_8] : memref<100x192xf32, #tpu.memory_space<vmem>>, vector<4x192xf32>
    tpu.vector_store %arg6[%c4, %c0_8], %4 {strides = array<i32>} : memref<100x192xf32, #tpu.memory_space<vmem>>, vector<4x192xf32>,
    %c0_9 = arith.constant 0 : index
    %c0_10 = arith.constant 0 : index
    %c0_11 = arith.constant 0 : index
    %c2 = arith.constant 2 : index
    %6 = vector.load %arg2[%c0_9, %c0_10, %c0_11, %c2] : memref<1x1x4x260xf32, #tpu.memory_space<vmem>>, vector<1x1x4x192xf32>
    %7 = vector.shape_cast %6 : vector<1x1x4x192xf32> to vector<4x192xf32>
    %c8 = arith.constant 8 : index
    %c0_12 = arith.constant 0 : index
    %8 = vector.load %arg6[%c8, %c0_12] : memref<100x192xf32, #tpu.memory_space<vmem>>, vector<4x192xf32>
    tpu.vector_store %arg6[%c8, %c0_12], %7 {strides = array<i32>} : memref<100x192xf32, #tpu.memory_space<vmem>>, vector<4x192xf32>,
    %c0_13 = arith.constant 0 : index
    %c0_14 = arith.constant 0 : index
    %c0_15 = arith.constant 0 : index
    %c3 = arith.constant 3 : index
    %9 = vector.load %arg2[%c0_13, %c0_14, %c0_15, %c3] : memref<1x1x4x260xf32, #tpu.memory_space<vmem>>, vector<1x1x4x192xf32>
    %10 = vector.shape_cast %9 : vector<1x1x4x192xf32> to vector<4x192xf32>
    %c12 = arith.constant 12 : index
    %c0_16 = arith.constant 0 : index
    %11 = vector.load %arg6[%c12, %c0_16] : memref<100x192xf32, #tpu.memory_space<vmem>>, vector<4x192xf32>
    tpu.vector_store %arg6[%c12, %c0_16], %10 {strides = array<i32>} : memref<100x192xf32, #tpu.memory_space<vmem>>, vector<4x192xf32>,
    %c0_17 = arith.constant 0 : index
    %c0_18 = arith.constant 0 : index
    %c0_19 = arith.constant 0 : index
    %c4_20 = arith.constant 4 : index
    %12 = vector.load %arg2[%c0_17, %c0_18, %c0_19, %c4_20] : memref<1x1x4x260xf32, #tpu.memory_space<vmem>>, vector<1x1x4x192xf32>
    %13 = vector.shape_cast %12 : vector<1x1x4x192xf32> to vector<4x192xf32>
    %c16 = arith.constant 16 : index
    %c0_21 = arith.constant 0 : index
    %14 = vector.load %arg6[%c16, %c0_21] : memref<100x192xf32, #tpu.memory_space<vmem>>, vector<4x192xf32>
    tpu.vector_store %arg6[%c16, %c0_21], %13 {strides = array<i32>} : memref<100x192xf32, #tpu.memory_space<vmem>>, vector<4x192xf32>,
    %c0_22 = arith.constant 0 : index
    %c0_23 = arith.constant 0 : index
    %c0_24 = arith.constant 0 : index
    %c16_25 = arith.constant 16 : index
    %15 = vector.load %arg2[%c0_22, %c0_23, %c0_24, %c16_25] : memref<1x1x4x260xf32, #tpu.memory_space<vmem>>, vector<1x1x4x192xf32>
    %16 = vector.shape_cast %15 : vector<1x1x4x192xf32> to vector<4x192xf32>
    %c20 = arith.constant 20 : index
    %c0_26 = arith.constant 0 : index
    %17 = vector.load %arg6[%c20, %c0_26] : memref<100x192xf32, #tpu.memory_space<vmem>>, vector<4x192xf32>
    tpu.vector_store %arg6[%c20, %c0_26], %16 {strides = array<i32>} : memref<100x192xf32, #tpu.memory_space<vmem>>, vector<4x192xf32>,
    %c0_27 = arith.constant 0 : index
    %c0_28 = arith.constant 0 : index
    %c0_29 = arith.constant 0 : index
    %c17 = arith.constant 17 : index
    %18 = vector.load %arg2[%c0_27, %c0_28, %c0_29, %c17] : memref<1x1x4x260xf32, #tpu.memory_space<vmem>>, vector<1x1x4x192xf32>
    %19 = vector.shape_cast %18 : vector<1x1x4x192xf32> to vector<4x192xf32>
    %c24 = arith.constant 24 : index
    %c0_30 = arith.constant 0 : index
    %20 = vector.load %arg6[%c24, %c0_30] : memref<100x192xf32, #tpu.memory_space<vmem>>, vector<4x192xf32>
    tpu.vector_store %arg6[%c24, %c0_30], %19 {strides = array<i32>} : memref<100x192xf32, #tpu.memory_space<vmem>>, vector<4x192xf32>,
    %c0_31 = arith.constant 0 : index
    %c0_32 = arith.constant 0 : index
    %c0_33 = arith.constant 0 : index
    %c18 = arith.constant 18 : index
    %21 = vector.load %arg2[%c0_31, %c0_32, %c0_33, %c18] : memref<1x1x4x260xf32, #tpu.memory_space<vmem>>, vector<1x1x4x192xf32>
    %22 = vector.shape_cast %21 : vector<1x1x4x192xf32> to vector<4x192xf32>
    %c28 = arith.constant 28 : index
    %c0_34 = arith.constant 0 : index
    %23 = vector.load %arg6[%c28, %c0_34] : memref<100x192xf32, #tpu.memory_space<vmem>>, vector<4x192xf32>
    tpu.vector_store %arg6[%c28, %c0_34], %22 {strides = array<i32>} : memref<100x192xf32, #tpu.memory_space<vmem>>, vector<4x192xf32>,
    %c0_35 = arith.constant 0 : index
    %c0_36 = arith.constant 0 : index
    %c0_37 = arith.constant 0 : index
    %c19 = arith.constant 19 : index
    %24 = vector.load %arg2[%c0_35, %c0_36, %c0_37, %c19] : memref<1x1x4x260xf32, #tpu.memory_space<vmem>>, vector<1x1x4x192xf32>
    %25 = vector.shape_cast %24 : vector<1x1x4x192xf32> to vector<4x192xf32>
    %c32 = arith.constant 32 : index
    %c0_38 = arith.constant 0 : index
    %26 = vector.load %arg6[%c32, %c0_38] : memref<100x192xf32, #tpu.memory_space<vmem>>, vector<4x192xf32>
    tpu.vector_store %arg6[%c32, %c0_38], %25 {strides = array<i32>} : memref<100x192xf32, #tpu.memory_space<vmem>>, vector<4x192xf32>,
    %c0_39 = arith.constant 0 : index
    %c0_40 = arith.constant 0 : index
    %c0_41 = arith.constant 0 : index
    %c20_42 = arith.constant 20 : index
    %27 = vector.load %arg2[%c0_39, %c0_40, %c0_41, %c20_42] : memref<1x1x4x260xf32, #tpu.memory_space<vmem>>, vector<1x1x4x192xf32>
    %28 = vector.shape_cast %27 : vector<1x1x4x192xf32> to vector<4x192xf32>
    %c36 = arith.constant 36 : index
    %c0_43 = arith.constant 0 : index
    %29 = vector.load %arg6[%c36, %c0_43] : memref<100x192xf32, #tpu.memory_space<vmem>>, vector<4x192xf32>
    tpu.vector_store %arg6[%c36, %c0_43], %28 {strides = array<i32>} : memref<100x192xf32, #tpu.memory_space<vmem>>, vector<4x192xf32>,
    %c0_44 = arith.constant 0 : index
    %c0_45 = arith.constant 0 : index
    %c0_46 = arith.constant 0 : index
    %c32_47 = arith.constant 32 : index
    %30 = vector.load %arg2[%c0_44, %c0_45, %c0_46, %c32_47] : memref<1x1x4x260xf32, #tpu.memory_space<vmem>>, vector<1x1x4x192xf32>
    %31 = vector.shape_cast %30 : vector<1x1x4x192xf32> to vector<4x192xf32>
    %c40 = arith.constant 40 : index
    %c0_48 = arith.constant 0 : index
    %32 = vector.load %arg6[%c40, %c0_48] : memref<100x192xf32, #tpu.memory_space<vmem>>, vector<4x192xf32>
    tpu.vector_store %arg6[%c40, %c0_48], %31 {strides = array<i32>} : memref<100x192xf32, #tpu.memory_space<vmem>>, vector<4x192xf32>,
    %c0_49 = arith.constant 0 : index
    %c0_50 = arith.constant 0 : index
    %c0_51 = arith.constant 0 : index
    %c33 = arith.constant 33 : index
    %33 = vector.load %arg2[%c0_49, %c0_50, %c0_51, %c33] : memref<1x1x4x260xf32, #tpu.memory_space<vmem>>, vector<1x1x4x192xf32>
    %34 = vector.shape_cast %33 : vector<1x1x4x192xf32> to vector<4x192xf32>
    %c44 = arith.constant 44 : index
    %c0_52 = arith.constant 0 : index
    %35 = vector.load %arg6[%c44, %c0_52] : memref<100x192xf32, #tpu.memory_space<vmem>>, vector<4x192xf32>
    tpu.vector_store %arg6[%c44, %c0_52], %34 {strides = array<i32>} : memref<100x192xf32, #tpu.memory_space<vmem>>, vector<4x192xf32>,
    %c0_53 = arith.constant 0 : index
    %c0_54 = arith.constant 0 : index
    %c0_55 = arith.constant 0 : index
    %c34 = arith.constant 34 : index
    %36 = vector.load %arg2[%c0_53, %c0_54, %c0_55, %c34] : memref<1x1x4x260xf32, #tpu.memory_space<vmem>>, vector<1x1x4x192xf32>
    %37 = vector.shape_cast %36 : vector<1x1x4x192xf32> to vector<4x192xf32>
    %c48 = arith.constant 48 : index
    %c0_56 = arith.constant 0 : index
    %38 = vector.load %arg6[%c48, %c0_56] : memref<100x192xf32, #tpu.memory_space<vmem>>, vector<4x192xf32>
    tpu.vector_store %arg6[%c48, %c0_56], %37 {strides = array<i32>} : memref<100x192xf32, #tpu.memory_space<vmem>>, vector<4x192xf32>,
    %c0_57 = arith.constant 0 : index
    %c0_58 = arith.constant 0 : index
    %c0_59 = arith.constant 0 : index
    %c35 = arith.constant 35 : index
    %39 = vector.load %arg2[%c0_57, %c0_58, %c0_59, %c35] : memref<1x1x4x260xf32, #tpu.memory_space<vmem>>, vector<1x1x4x192xf32>
    %40 = vector.shape_cast %39 : vector<1x1x4x192xf32> to vector<4x192xf32>
    %c52 = arith.constant 52 : index
    %c0_60 = arith.constant 0 : index
    %41 = vector.load %arg6[%c52, %c0_60] : memref<100x192xf32, #tpu.memory_space<vmem>>, vector<4x192xf32>
    tpu.vector_store %arg6[%c52, %c0_60], %40 {strides = array<i32>} : memref<100x192xf32, #tpu.memory_space<vmem>>, vector<4x192xf32>,
    %c0_61 = arith.constant 0 : index
    %c0_62 = arith.constant 0 : index
    %c0_63 = arith.constant 0 : index
    %c36_64 = arith.constant 36 : index
    %42 = vector.load %arg2[%c0_61, %c0_62, %c0_63, %c36_64] : memref<1x1x4x260xf32, #tpu.memory_space<vmem>>, vector<1x1x4x192xf32>
    %43 = vector.shape_cast %42 : vector<1x1x4x192xf32> to vector<4x192xf32>
    %c56 = arith.constant 56 : index
    %c0_65 = arith.constant 0 : index
    %44 = vector.load %arg6[%c56, %c0_65] : memref<100x192xf32, #tpu.memory_space<vmem>>, vector<4x192xf32>
    tpu.vector_store %arg6[%c56, %c0_65], %43 {strides = array<i32>} : memref<100x192xf32, #tpu.memory_space<vmem>>, vector<4x192xf32>,
    %c0_66 = arith.constant 0 : index
    %c0_67 = arith.constant 0 : index
    %c0_68 = arith.constant 0 : index
    %c48_69 = arith.constant 48 : index
    %45 = vector.load %arg2[%c0_66, %c0_67, %c0_68, %c48_69] : memref<1x1x4x260xf32, #tpu.memory_space<vmem>>, vector<1x1x4x192xf32>
    %46 = vector.shape_cast %45 : vector<1x1x4x192xf32> to vector<4x192xf32>
    %c60 = arith.constant 60 : index
    %c0_70 = arith.constant 0 : index
    %47 = vector.load %arg6[%c60, %c0_70] : memref<100x192xf32, #tpu.memory_space<vmem>>, vector<4x192xf32>
    tpu.vector_store %arg6[%c60, %c0_70], %46 {strides = array<i32>} : memref<100x192xf32, #tpu.memory_space<vmem>>, vector<4x192xf32>,
    %c0_71 = arith.constant 0 : index
    %c0_72 = arith.constant 0 : index
    %c0_73 = arith.constant 0 : index
    %c49 = arith.constant 49 : index
    %48 = vector.load %arg2[%c0_71, %c0_72, %c0_73, %c49] : memref<1x1x4x260xf32, #tpu.memory_space<vmem>>, vector<1x1x4x192xf32>
    %49 = vector.shape_cast %48 : vector<1x1x4x192xf32> to vector<4x192xf32>
    %c64 = arith.constant 64 : index
    %c0_74 = arith.constant 0 : index
    %50 = vector.load %arg6[%c64, %c0_74] : memref<100x192xf32, #tpu.memory_space<vmem>>, vector<4x192xf32>
    tpu.vector_store %arg6[%c64, %c0_74], %49 {strides = array<i32>} : memref<100x192xf32, #tpu.memory_space<vmem>>, vector<4x192xf32>,
    %c0_75 = arith.constant 0 : index
    %c0_76 = arith.constant 0 : index
    %c0_77 = arith.constant 0 : index
    %c50 = arith.constant 50 : index
    %51 = vector.load %arg2[%c0_75, %c0_76, %c0_77, %c50] : memref<1x1x4x260xf32, #tpu.memory_space<vmem>>, vector<1x1x4x192xf32>
    %52 = vector.shape_cast %51 : vector<1x1x4x192xf32> to vector<4x192xf32>
    %c68 = arith.constant 68 : index
    %c0_78 = arith.constant 0 : index
    %53 = vector.load %arg6[%c68, %c0_78] : memref<100x192xf32, #tpu.memory_space<vmem>>, vector<4x192xf32>
    tpu.vector_store %arg6[%c68, %c0_78], %52 {strides = array<i32>} : memref<100x192xf32, #tpu.memory_space<vmem>>, vector<4x192xf32>,
    %c0_79 = arith.constant 0 : index
    %c0_80 = arith.constant 0 : index
    %c0_81 = arith.constant 0 : index
    %c51 = arith.constant 51 : index
    %54 = vector.load %arg2[%c0_79, %c0_80, %c0_81, %c51] : memref<1x1x4x260xf32, #tpu.memory_space<vmem>>, vector<1x1x4x192xf32>
    %55 = vector.shape_cast %54 : vector<1x1x4x192xf32> to vector<4x192xf32>
    %c72 = arith.constant 72 : index
    %c0_82 = arith.constant 0 : index
    %56 = vector.load %arg6[%c72, %c0_82] : memref<100x192xf32, #tpu.memory_space<vmem>>, vector<4x192xf32>
    tpu.vector_store %arg6[%c72, %c0_82], %55 {strides = array<i32>} : memref<100x192xf32, #tpu.memory_space<vmem>>, vector<4x192xf32>,
    %c0_83 = arith.constant 0 : index
    %c0_84 = arith.constant 0 : index
    %c0_85 = arith.constant 0 : index
    %c52_86 = arith.constant 52 : index
    %57 = vector.load %arg2[%c0_83, %c0_84, %c0_85, %c52_86] : memref<1x1x4x260xf32, #tpu.memory_space<vmem>>, vector<1x1x4x192xf32>
    %58 = vector.shape_cast %57 : vector<1x1x4x192xf32> to vector<4x192xf32>
    %c76 = arith.constant 76 : index
    %c0_87 = arith.constant 0 : index
    %59 = vector.load %arg6[%c76, %c0_87] : memref<100x192xf32, #tpu.memory_space<vmem>>, vector<4x192xf32>
    tpu.vector_store %arg6[%c76, %c0_87], %58 {strides = array<i32>} : memref<100x192xf32, #tpu.memory_space<vmem>>, vector<4x192xf32>,
    %c0_88 = arith.constant 0 : index
    %c0_89 = arith.constant 0 : index
    %c0_90 = arith.constant 0 : index
    %c64_91 = arith.constant 64 : index
    %60 = vector.load %arg2[%c0_88, %c0_89, %c0_90, %c64_91] : memref<1x1x4x260xf32, #tpu.memory_space<vmem>>, vector<1x1x4x192xf32>
    %61 = vector.shape_cast %60 : vector<1x1x4x192xf32> to vector<4x192xf32>
    %c80 = arith.constant 80 : index
    %c0_92 = arith.constant 0 : index
    %62 = vector.load %arg6[%c80, %c0_92] : memref<100x192xf32, #tpu.memory_space<vmem>>, vector<4x192xf32>
    tpu.vector_store %arg6[%c80, %c0_92], %61 {strides = array<i32>} : memref<100x192xf32, #tpu.memory_space<vmem>>, vector<4x192xf32>,
    %c0_93 = arith.constant 0 : index
    %c0_94 = arith.constant 0 : index
    %c0_95 = arith.constant 0 : index
    %c65 = arith.constant 65 : index
    %63 = vector.load %arg2[%c0_93, %c0_94, %c0_95, %c65] : memref<1x1x4x260xf32, #tpu.memory_space<vmem>>, vector<1x1x4x192xf32>
    %64 = vector.shape_cast %63 : vector<1x1x4x192xf32> to vector<4x192xf32>
    %c84 = arith.constant 84 : index
    %c0_96 = arith.constant 0 : index
    %65 = vector.load %arg6[%c84, %c0_96] : memref<100x192xf32, #tpu.memory_space<vmem>>, vector<4x192xf32>
    tpu.vector_store %arg6[%c84, %c0_96], %64 {strides = array<i32>} : memref<100x192xf32, #tpu.memory_space<vmem>>, vector<4x192xf32>,
    %c0_97 = arith.constant 0 : index
    %c0_98 = arith.constant 0 : index
    %c0_99 = arith.constant 0 : index
    %c66 = arith.constant 66 : index
    %66 = vector.load %arg2[%c0_97, %c0_98, %c0_99, %c66] : memref<1x1x4x260xf32, #tpu.memory_space<vmem>>, vector<1x1x4x192xf32>
    %67 = vector.shape_cast %66 : vector<1x1x4x192xf32> to vector<4x192xf32>
    %c88 = arith.constant 88 : index
    %c0_100 = arith.constant 0 : index
    %68 = vector.load %arg6[%c88, %c0_100] : memref<100x192xf32, #tpu.memory_space<vmem>>, vector<4x192xf32>
    tpu.vector_store %arg6[%c88, %c0_100], %67 {strides = array<i32>} : memref<100x192xf32, #tpu.memory_space<vmem>>, vector<4x192xf32>,
    %c0_101 = arith.constant 0 : index
    %c0_102 = arith.constant 0 : index
    %c0_103 = arith.constant 0 : index
    %c67 = arith.constant 67 : index
    %69 = vector.load %arg2[%c0_101, %c0_102, %c0_103, %c67] : memref<1x1x4x260xf32, #tpu.memory_space<vmem>>, vector<1x1x4x192xf32>
    %70 = vector.shape_cast %69 : vector<1x1x4x192xf32> to vector<4x192xf32>
    %c92 = arith.constant 92 : index
    %c0_104 = arith.constant 0 : index
    %71 = vector.load %arg6[%c92, %c0_104] : memref<100x192xf32, #tpu.memory_space<vmem>>, vector<4x192xf32>
    tpu.vector_store %arg6[%c92, %c0_104], %70 {strides = array<i32>} : memref<100x192xf32, #tpu.memory_space<vmem>>, vector<4x192xf32>,
    %c0_105 = arith.constant 0 : index
    %c0_106 = arith.constant 0 : index
    %c0_107 = arith.constant 0 : index
    %c68_108 = arith.constant 68 : index
    %72 = vector.load %arg2[%c0_105, %c0_106, %c0_107, %c68_108] : memref<1x1x4x260xf32, #tpu.memory_space<vmem>>, vector<1x1x4x192xf32>
    %73 = vector.shape_cast %72 : vector<1x1x4x192xf32> to vector<4x192xf32>
    %c96 = arith.constant 96 : index
    %c0_109 = arith.constant 0 : index
    %74 = vector.load %arg6[%c96, %c0_109] : memref<100x192xf32, #tpu.memory_space<vmem>>, vector<4x192xf32>
    tpu.vector_store %arg6[%c96, %c0_109], %73 {strides = array<i32>} : memref<100x192xf32, #tpu.memory_space<vmem>>, vector<4x192xf32>,
    %c0_110 = arith.constant 0 : index
    %c0_111 = arith.constant 0 : index
    %75 = vector.load %arg3[%c0_110, %c0_111] : memref<16x100xf32, #tpu.memory_space<vmem>>, vector<16x100xf32>
    %c0_112 = arith.constant 0 : index
    %c0_113 = arith.constant 0 : index
    %76 = vector.load %arg6[%c0_112, %c0_113] : memref<100x192xf32, #tpu.memory_space<vmem>>, vector<100x192xf32>
    %cst = arith.constant dense<0.000000e+00> : vector<16x192xf32>
    %77 = tpu.matmul %75, %76, %cst {dimension_numbers = #tpu.dot_dimension_numbers<[1], [0], [0], [1], [0, 0, 1, 1], [], []>} : vector<16x100xf32>, vector<100x192xf32>, vector<16x192xf32> -> vector<16x192xf32>
    %c0_114 = arith.constant 0 : index
    %c0_115 = arith.constant 0 : index
    %78 = vector.load %arg4[%c0_114, %c0_115] : memref<16x1xf32, #tpu.memory_space<vmem>>, vector<16x1xf32>
    %79 = vector.broadcast %78 : vector<16x1xf32> to vector<16x192xf32>
    %80 = arith.addf %77, %79 : vector<16x192xf32>
    %cst_116 = arith.constant 0.000000e+00 : f32
    %81 = vector.broadcast %cst_116 : f32 to vector<16x192xf32>
    %82 = arith.maximumf %80, %81 : vector<16x192xf32>
    %c0_117 = arith.constant 0 : index
    %c0_118 = arith.constant 0 : index
    %c0_119 = arith.constant 0 : index
    %83 = vector.load %arg5[%c0_117, %c0_118, %c0_119] : memref<1x16x192xf32, #tpu.memory_space<vmem>>, vector<1x16x192xf32>
    %84 = vector.shape_cast %83 : vector<1x16x192xf32> to vector<16x192xf32>
    %85 = vector.shape_cast %82 : vector<16x192xf32> to vector<1x16x192xf32>
    tpu.vector_store %arg5[%c0_117, %c0_118, %c0_119], %85 {strides = array<i32>} : memref<1x16x192xf32, #tpu.memory_space<vmem>>, vector<1x16x192xf32>,
    return
  }
  func.func @transform_0(%arg0: i32, %arg1: i32) -> (i32, i32, i32, i32) {
    %c0_i32 = arith.constant 0 : i32
    %c0_i32_0 = arith.constant 0 : i32
    %c0_i32_1 = arith.constant 0 : i32
    return %arg0, %arg1, %c0_i32, %c0_i32_0 : i32, i32, i32, i32
  }
  func.func @transform_1(%arg0: i32, %arg1: i32) -> (i32, i32) {
    %c0_i32 = arith.constant 0 : i32
    %c0_i32_0 = arith.constant 0 : i32
    %c0_i32_1 = arith.constant 0 : i32
    return %c0_i32, %c0_i32_0 : i32, i32
  }
  func.func @transform_2(%arg0: i32, %arg1: i32) -> (i32, i32) {
    %c0_i32 = arith.constant 0 : i32
    %c0_i32_0 = arith.constant 0 : i32
    %c0_i32_1 = arith.constant 0 : i32
    return %c0_i32, %c0_i32_0 : i32, i32
  }
  func.func @transform_3(%arg0: i32, %arg1: i32) -> (i32, i32, i32) {
    %c0_i32 = arith.constant 0 : i32
    %c0_i32_0 = arith.constant 0 : i32
    return %arg0, %c0_i32, %arg1 : i32, i32, i32
  }
}

module attributes {stable_mosaic.version = 11 : i64} {
  func.func @_conv_relu_kernel(%arg0: i32, %arg1: i32, %arg2: memref<1x1x16x196xf32, #tpu.memory_space<vmem>>, %arg3: memref<32x400xf32, #tpu.memory_space<vmem>>, %arg4: memref<32x1xf32, #tpu.memory_space<vmem>>, %arg5: memref<1x32x128xbf16, #tpu.memory_space<vmem>>, %arg6: memref<400x128xf32, #tpu.memory_space<vmem>>) attributes {dimension_semantics = [#tpu.dimension_semantics<parallel>, #tpu.dimension_semantics<parallel>], iteration_bounds = array<i64: 2, 1>, scalar_prefetch = 0 : i64, scratch_operands = 1 : i64, tpu.core_type = #tpu.core_type<tc>, window_params = [{transform_indices = @transform_0, window_bounds = array<i64: 1, 1, 16, 196>}, {pipeline_mode = #tpu.pipeline_mode<synchronous>, transform_indices = @transform_1, window_bounds = array<i64: 32, 400>}, {pipeline_mode = #tpu.pipeline_mode<synchronous>, transform_indices = @transform_2, window_bounds = array<i64: 32, 1>}, {transform_indices = @transform_3, window_bounds = array<i64: 1, 32, 128>}]} {
    %c0 = arith.constant 0 : index
    %c0_0 = arith.constant 0 : index
    %c0_1 = arith.constant 0 : index
    %c0_2 = arith.constant 0 : index
    %0 = vector.load %arg2[%c0, %c0_0, %c0_1, %c0_2] : memref<1x1x16x196xf32, #tpu.memory_space<vmem>>, vector<1x1x16x128xf32>
    %1 = vector.shape_cast %0 : vector<1x1x16x128xf32> to vector<16x128xf32>
    %c0_3 = arith.constant 0 : index
    %c0_4 = arith.constant 0 : index
    %2 = vector.load %arg6[%c0_3, %c0_4] : memref<400x128xf32, #tpu.memory_space<vmem>>, vector<16x128xf32>
    tpu.vector_store %arg6[%c0_3, %c0_4], %1 {strides = array<i32>} : memref<400x128xf32, #tpu.memory_space<vmem>>, vector<16x128xf32>,
    %c0_5 = arith.constant 0 : index
    %c0_6 = arith.constant 0 : index
    %c0_7 = arith.constant 0 : index
    %c1 = arith.constant 1 : index
    %3 = vector.load %arg2[%c0_5, %c0_6, %c0_7, %c1] : memref<1x1x16x196xf32, #tpu.memory_space<vmem>>, vector<1x1x16x128xf32>
    %4 = vector.shape_cast %3 : vector<1x1x16x128xf32> to vector<16x128xf32>
    %c16 = arith.constant 16 : index
    %c0_8 = arith.constant 0 : index
    %5 = vector.load %arg6[%c16, %c0_8] : memref<400x128xf32, #tpu.memory_space<vmem>>, vector<16x128xf32>
    tpu.vector_store %arg6[%c16, %c0_8], %4 {strides = array<i32>} : memref<400x128xf32, #tpu.memory_space<vmem>>, vector<16x128xf32>,
    %c0_9 = arith.constant 0 : index
    %c0_10 = arith.constant 0 : index
    %c0_11 = arith.constant 0 : index
    %c2 = arith.constant 2 : index
    %6 = vector.load %arg2[%c0_9, %c0_10, %c0_11, %c2] : memref<1x1x16x196xf32, #tpu.memory_space<vmem>>, vector<1x1x16x128xf32>
    %7 = vector.shape_cast %6 : vector<1x1x16x128xf32> to vector<16x128xf32>
    %c32 = arith.constant 32 : index
    %c0_12 = arith.constant 0 : index
    %8 = vector.load %arg6[%c32, %c0_12] : memref<400x128xf32, #tpu.memory_space<vmem>>, vector<16x128xf32>
    tpu.vector_store %arg6[%c32, %c0_12], %7 {strides = array<i32>} : memref<400x128xf32, #tpu.memory_space<vmem>>, vector<16x128xf32>,
    %c0_13 = arith.constant 0 : index
    %c0_14 = arith.constant 0 : index
    %c0_15 = arith.constant 0 : index
    %c3 = arith.constant 3 : index
    %9 = vector.load %arg2[%c0_13, %c0_14, %c0_15, %c3] : memref<1x1x16x196xf32, #tpu.memory_space<vmem>>, vector<1x1x16x128xf32>
    %10 = vector.shape_cast %9 : vector<1x1x16x128xf32> to vector<16x128xf32>
    %c48 = arith.constant 48 : index
    %c0_16 = arith.constant 0 : index
    %11 = vector.load %arg6[%c48, %c0_16] : memref<400x128xf32, #tpu.memory_space<vmem>>, vector<16x128xf32>
    tpu.vector_store %arg6[%c48, %c0_16], %10 {strides = array<i32>} : memref<400x128xf32, #tpu.memory_space<vmem>>, vector<16x128xf32>,
    %c0_17 = arith.constant 0 : index
    %c0_18 = arith.constant 0 : index
    %c0_19 = arith.constant 0 : index
    %c4 = arith.constant 4 : index
    %12 = vector.load %arg2[%c0_17, %c0_18, %c0_19, %c4] : memref<1x1x16x196xf32, #tpu.memory_space<vmem>>, vector<1x1x16x128xf32>
    %13 = vector.shape_cast %12 : vector<1x1x16x128xf32> to vector<16x128xf32>
    %c64 = arith.constant 64 : index
    %c0_20 = arith.constant 0 : index
    %14 = vector.load %arg6[%c64, %c0_20] : memref<400x128xf32, #tpu.memory_space<vmem>>, vector<16x128xf32>
    tpu.vector_store %arg6[%c64, %c0_20], %13 {strides = array<i32>} : memref<400x128xf32, #tpu.memory_space<vmem>>, vector<16x128xf32>,
    %c0_21 = arith.constant 0 : index
    %c0_22 = arith.constant 0 : index
    %c0_23 = arith.constant 0 : index
    %c16_24 = arith.constant 16 : index
    %15 = vector.load %arg2[%c0_21, %c0_22, %c0_23, %c16_24] : memref<1x1x16x196xf32, #tpu.memory_space<vmem>>, vector<1x1x16x128xf32>
    %16 = vector.shape_cast %15 : vector<1x1x16x128xf32> to vector<16x128xf32>
    %c80 = arith.constant 80 : index
    %c0_25 = arith.constant 0 : index
    %17 = vector.load %arg6[%c80, %c0_25] : memref<400x128xf32, #tpu.memory_space<vmem>>, vector<16x128xf32>
    tpu.vector_store %arg6[%c80, %c0_25], %16 {strides = array<i32>} : memref<400x128xf32, #tpu.memory_space<vmem>>, vector<16x128xf32>,
    %c0_26 = arith.constant 0 : index
    %c0_27 = arith.constant 0 : index
    %c0_28 = arith.constant 0 : index
    %c17 = arith.constant 17 : index
    %18 = vector.load %arg2[%c0_26, %c0_27, %c0_28, %c17] : memref<1x1x16x196xf32, #tpu.memory_space<vmem>>, vector<1x1x16x128xf32>
    %19 = vector.shape_cast %18 : vector<1x1x16x128xf32> to vector<16x128xf32>
    %c96 = arith.constant 96 : index
    %c0_29 = arith.constant 0 : index
    %20 = vector.load %arg6[%c96, %c0_29] : memref<400x128xf32, #tpu.memory_space<vmem>>, vector<16x128xf32>
    tpu.vector_store %arg6[%c96, %c0_29], %19 {strides = array<i32>} : memref<400x128xf32, #tpu.memory_space<vmem>>, vector<16x128xf32>,
    %c0_30 = arith.constant 0 : index
    %c0_31 = arith.constant 0 : index
    %c0_32 = arith.constant 0 : index
    %c18 = arith.constant 18 : index
    %21 = vector.load %arg2[%c0_30, %c0_31, %c0_32, %c18] : memref<1x1x16x196xf32, #tpu.memory_space<vmem>>, vector<1x1x16x128xf32>
    %22 = vector.shape_cast %21 : vector<1x1x16x128xf32> to vector<16x128xf32>
    %c112 = arith.constant 112 : index
    %c0_33 = arith.constant 0 : index
    %23 = vector.load %arg6[%c112, %c0_33] : memref<400x128xf32, #tpu.memory_space<vmem>>, vector<16x128xf32>
    tpu.vector_store %arg6[%c112, %c0_33], %22 {strides = array<i32>} : memref<400x128xf32, #tpu.memory_space<vmem>>, vector<16x128xf32>,
    %c0_34 = arith.constant 0 : index
    %c0_35 = arith.constant 0 : index
    %c0_36 = arith.constant 0 : index
    %c19 = arith.constant 19 : index
    %24 = vector.load %arg2[%c0_34, %c0_35, %c0_36, %c19] : memref<1x1x16x196xf32, #tpu.memory_space<vmem>>, vector<1x1x16x128xf32>
    %25 = vector.shape_cast %24 : vector<1x1x16x128xf32> to vector<16x128xf32>
    %c128 = arith.constant 128 : index
    %c0_37 = arith.constant 0 : index
    %26 = vector.load %arg6[%c128, %c0_37] : memref<400x128xf32, #tpu.memory_space<vmem>>, vector<16x128xf32>
    tpu.vector_store %arg6[%c128, %c0_37], %25 {strides = array<i32>} : memref<400x128xf32, #tpu.memory_space<vmem>>, vector<16x128xf32>,
    %c0_38 = arith.constant 0 : index
    %c0_39 = arith.constant 0 : index
    %c0_40 = arith.constant 0 : index
    %c20 = arith.constant 20 : index
    %27 = vector.load %arg2[%c0_38, %c0_39, %c0_40, %c20] : memref<1x1x16x196xf32, #tpu.memory_space<vmem>>, vector<1x1x16x128xf32>
    %28 = vector.shape_cast %27 : vector<1x1x16x128xf32> to vector<16x128xf32>
    %c144 = arith.constant 144 : index
    %c0_41 = arith.constant 0 : index
    %29 = vector.load %arg6[%c144, %c0_41] : memref<400x128xf32, #tpu.memory_space<vmem>>, vector<16x128xf32>
    tpu.vector_store %arg6[%c144, %c0_41], %28 {strides = array<i32>} : memref<400x128xf32, #tpu.memory_space<vmem>>, vector<16x128xf32>,
    %c0_42 = arith.constant 0 : index
    %c0_43 = arith.constant 0 : index
    %c0_44 = arith.constant 0 : index
    %c32_45 = arith.constant 32 : index
    %30 = vector.load %arg2[%c0_42, %c0_43, %c0_44, %c32_45] : memref<1x1x16x196xf32, #tpu.memory_space<vmem>>, vector<1x1x16x128xf32>
    %31 = vector.shape_cast %30 : vector<1x1x16x128xf32> to vector<16x128xf32>
    %c160 = arith.constant 160 : index
    %c0_46 = arith.constant 0 : index
    %32 = vector.load %arg6[%c160, %c0_46] : memref<400x128xf32, #tpu.memory_space<vmem>>, vector<16x128xf32>
    tpu.vector_store %arg6[%c160, %c0_46], %31 {strides = array<i32>} : memref<400x128xf32, #tpu.memory_space<vmem>>, vector<16x128xf32>,
    %c0_47 = arith.constant 0 : index
    %c0_48 = arith.constant 0 : index
    %c0_49 = arith.constant 0 : index
    %c33 = arith.constant 33 : index
    %33 = vector.load %arg2[%c0_47, %c0_48, %c0_49, %c33] : memref<1x1x16x196xf32, #tpu.memory_space<vmem>>, vector<1x1x16x128xf32>
    %34 = vector.shape_cast %33 : vector<1x1x16x128xf32> to vector<16x128xf32>
    %c176 = arith.constant 176 : index
    %c0_50 = arith.constant 0 : index
    %35 = vector.load %arg6[%c176, %c0_50] : memref<400x128xf32, #tpu.memory_space<vmem>>, vector<16x128xf32>
    tpu.vector_store %arg6[%c176, %c0_50], %34 {strides = array<i32>} : memref<400x128xf32, #tpu.memory_space<vmem>>, vector<16x128xf32>,
    %c0_51 = arith.constant 0 : index
    %c0_52 = arith.constant 0 : index
    %c0_53 = arith.constant 0 : index
    %c34 = arith.constant 34 : index
    %36 = vector.load %arg2[%c0_51, %c0_52, %c0_53, %c34] : memref<1x1x16x196xf32, #tpu.memory_space<vmem>>, vector<1x1x16x128xf32>
    %37 = vector.shape_cast %36 : vector<1x1x16x128xf32> to vector<16x128xf32>
    %c192 = arith.constant 192 : index
    %c0_54 = arith.constant 0 : index
    %38 = vector.load %arg6[%c192, %c0_54] : memref<400x128xf32, #tpu.memory_space<vmem>>, vector<16x128xf32>
    tpu.vector_store %arg6[%c192, %c0_54], %37 {strides = array<i32>} : memref<400x128xf32, #tpu.memory_space<vmem>>, vector<16x128xf32>,
    %c0_55 = arith.constant 0 : index
    %c0_56 = arith.constant 0 : index
    %c0_57 = arith.constant 0 : index
    %c35 = arith.constant 35 : index
    %39 = vector.load %arg2[%c0_55, %c0_56, %c0_57, %c35] : memref<1x1x16x196xf32, #tpu.memory_space<vmem>>, vector<1x1x16x128xf32>
    %40 = vector.shape_cast %39 : vector<1x1x16x128xf32> to vector<16x128xf32>
    %c208 = arith.constant 208 : index
    %c0_58 = arith.constant 0 : index
    %41 = vector.load %arg6[%c208, %c0_58] : memref<400x128xf32, #tpu.memory_space<vmem>>, vector<16x128xf32>
    tpu.vector_store %arg6[%c208, %c0_58], %40 {strides = array<i32>} : memref<400x128xf32, #tpu.memory_space<vmem>>, vector<16x128xf32>,
    %c0_59 = arith.constant 0 : index
    %c0_60 = arith.constant 0 : index
    %c0_61 = arith.constant 0 : index
    %c36 = arith.constant 36 : index
    %42 = vector.load %arg2[%c0_59, %c0_60, %c0_61, %c36] : memref<1x1x16x196xf32, #tpu.memory_space<vmem>>, vector<1x1x16x128xf32>
    %43 = vector.shape_cast %42 : vector<1x1x16x128xf32> to vector<16x128xf32>
    %c224 = arith.constant 224 : index
    %c0_62 = arith.constant 0 : index
    %44 = vector.load %arg6[%c224, %c0_62] : memref<400x128xf32, #tpu.memory_space<vmem>>, vector<16x128xf32>
    tpu.vector_store %arg6[%c224, %c0_62], %43 {strides = array<i32>} : memref<400x128xf32, #tpu.memory_space<vmem>>, vector<16x128xf32>,
    %c0_63 = arith.constant 0 : index
    %c0_64 = arith.constant 0 : index
    %c0_65 = arith.constant 0 : index
    %c48_66 = arith.constant 48 : index
    %45 = vector.load %arg2[%c0_63, %c0_64, %c0_65, %c48_66] : memref<1x1x16x196xf32, #tpu.memory_space<vmem>>, vector<1x1x16x128xf32>
    %46 = vector.shape_cast %45 : vector<1x1x16x128xf32> to vector<16x128xf32>
    %c240 = arith.constant 240 : index
    %c0_67 = arith.constant 0 : index
    %47 = vector.load %arg6[%c240, %c0_67] : memref<400x128xf32, #tpu.memory_space<vmem>>, vector<16x128xf32>
    tpu.vector_store %arg6[%c240, %c0_67], %46 {strides = array<i32>} : memref<400x128xf32, #tpu.memory_space<vmem>>, vector<16x128xf32>,
    %c0_68 = arith.constant 0 : index
    %c0_69 = arith.constant 0 : index
    %c0_70 = arith.constant 0 : index
    %c49 = arith.constant 49 : index
    %48 = vector.load %arg2[%c0_68, %c0_69, %c0_70, %c49] : memref<1x1x16x196xf32, #tpu.memory_space<vmem>>, vector<1x1x16x128xf32>
    %49 = vector.shape_cast %48 : vector<1x1x16x128xf32> to vector<16x128xf32>
    %c256 = arith.constant 256 : index
    %c0_71 = arith.constant 0 : index
    %50 = vector.load %arg6[%c256, %c0_71] : memref<400x128xf32, #tpu.memory_space<vmem>>, vector<16x128xf32>
    tpu.vector_store %arg6[%c256, %c0_71], %49 {strides = array<i32>} : memref<400x128xf32, #tpu.memory_space<vmem>>, vector<16x128xf32>,
    %c0_72 = arith.constant 0 : index
    %c0_73 = arith.constant 0 : index
    %c0_74 = arith.constant 0 : index
    %c50 = arith.constant 50 : index
    %51 = vector.load %arg2[%c0_72, %c0_73, %c0_74, %c50] : memref<1x1x16x196xf32, #tpu.memory_space<vmem>>, vector<1x1x16x128xf32>
    %52 = vector.shape_cast %51 : vector<1x1x16x128xf32> to vector<16x128xf32>
    %c272 = arith.constant 272 : index
    %c0_75 = arith.constant 0 : index
    %53 = vector.load %arg6[%c272, %c0_75] : memref<400x128xf32, #tpu.memory_space<vmem>>, vector<16x128xf32>
    tpu.vector_store %arg6[%c272, %c0_75], %52 {strides = array<i32>} : memref<400x128xf32, #tpu.memory_space<vmem>>, vector<16x128xf32>,
    %c0_76 = arith.constant 0 : index
    %c0_77 = arith.constant 0 : index
    %c0_78 = arith.constant 0 : index
    %c51 = arith.constant 51 : index
    %54 = vector.load %arg2[%c0_76, %c0_77, %c0_78, %c51] : memref<1x1x16x196xf32, #tpu.memory_space<vmem>>, vector<1x1x16x128xf32>
    %55 = vector.shape_cast %54 : vector<1x1x16x128xf32> to vector<16x128xf32>
    %c288 = arith.constant 288 : index
    %c0_79 = arith.constant 0 : index
    %56 = vector.load %arg6[%c288, %c0_79] : memref<400x128xf32, #tpu.memory_space<vmem>>, vector<16x128xf32>
    tpu.vector_store %arg6[%c288, %c0_79], %55 {strides = array<i32>} : memref<400x128xf32, #tpu.memory_space<vmem>>, vector<16x128xf32>,
    %c0_80 = arith.constant 0 : index
    %c0_81 = arith.constant 0 : index
    %c0_82 = arith.constant 0 : index
    %c52 = arith.constant 52 : index
    %57 = vector.load %arg2[%c0_80, %c0_81, %c0_82, %c52] : memref<1x1x16x196xf32, #tpu.memory_space<vmem>>, vector<1x1x16x128xf32>
    %58 = vector.shape_cast %57 : vector<1x1x16x128xf32> to vector<16x128xf32>
    %c304 = arith.constant 304 : index
    %c0_83 = arith.constant 0 : index
    %59 = vector.load %arg6[%c304, %c0_83] : memref<400x128xf32, #tpu.memory_space<vmem>>, vector<16x128xf32>
    tpu.vector_store %arg6[%c304, %c0_83], %58 {strides = array<i32>} : memref<400x128xf32, #tpu.memory_space<vmem>>, vector<16x128xf32>,
    %c0_84 = arith.constant 0 : index
    %c0_85 = arith.constant 0 : index
    %c0_86 = arith.constant 0 : index
    %c64_87 = arith.constant 64 : index
    %60 = vector.load %arg2[%c0_84, %c0_85, %c0_86, %c64_87] : memref<1x1x16x196xf32, #tpu.memory_space<vmem>>, vector<1x1x16x128xf32>
    %61 = vector.shape_cast %60 : vector<1x1x16x128xf32> to vector<16x128xf32>
    %c320 = arith.constant 320 : index
    %c0_88 = arith.constant 0 : index
    %62 = vector.load %arg6[%c320, %c0_88] : memref<400x128xf32, #tpu.memory_space<vmem>>, vector<16x128xf32>
    tpu.vector_store %arg6[%c320, %c0_88], %61 {strides = array<i32>} : memref<400x128xf32, #tpu.memory_space<vmem>>, vector<16x128xf32>,
    %c0_89 = arith.constant 0 : index
    %c0_90 = arith.constant 0 : index
    %c0_91 = arith.constant 0 : index
    %c65 = arith.constant 65 : index
    %63 = vector.load %arg2[%c0_89, %c0_90, %c0_91, %c65] : memref<1x1x16x196xf32, #tpu.memory_space<vmem>>, vector<1x1x16x128xf32>
    %64 = vector.shape_cast %63 : vector<1x1x16x128xf32> to vector<16x128xf32>
    %c336 = arith.constant 336 : index
    %c0_92 = arith.constant 0 : index
    %65 = vector.load %arg6[%c336, %c0_92] : memref<400x128xf32, #tpu.memory_space<vmem>>, vector<16x128xf32>
    tpu.vector_store %arg6[%c336, %c0_92], %64 {strides = array<i32>} : memref<400x128xf32, #tpu.memory_space<vmem>>, vector<16x128xf32>,
    %c0_93 = arith.constant 0 : index
    %c0_94 = arith.constant 0 : index
    %c0_95 = arith.constant 0 : index
    %c66 = arith.constant 66 : index
    %66 = vector.load %arg2[%c0_93, %c0_94, %c0_95, %c66] : memref<1x1x16x196xf32, #tpu.memory_space<vmem>>, vector<1x1x16x128xf32>
    %67 = vector.shape_cast %66 : vector<1x1x16x128xf32> to vector<16x128xf32>
    %c352 = arith.constant 352 : index
    %c0_96 = arith.constant 0 : index
    %68 = vector.load %arg6[%c352, %c0_96] : memref<400x128xf32, #tpu.memory_space<vmem>>, vector<16x128xf32>
    tpu.vector_store %arg6[%c352, %c0_96], %67 {strides = array<i32>} : memref<400x128xf32, #tpu.memory_space<vmem>>, vector<16x128xf32>,
    %c0_97 = arith.constant 0 : index
    %c0_98 = arith.constant 0 : index
    %c0_99 = arith.constant 0 : index
    %c67 = arith.constant 67 : index
    %69 = vector.load %arg2[%c0_97, %c0_98, %c0_99, %c67] : memref<1x1x16x196xf32, #tpu.memory_space<vmem>>, vector<1x1x16x128xf32>
    %70 = vector.shape_cast %69 : vector<1x1x16x128xf32> to vector<16x128xf32>
    %c368 = arith.constant 368 : index
    %c0_100 = arith.constant 0 : index
    %71 = vector.load %arg6[%c368, %c0_100] : memref<400x128xf32, #tpu.memory_space<vmem>>, vector<16x128xf32>
    tpu.vector_store %arg6[%c368, %c0_100], %70 {strides = array<i32>} : memref<400x128xf32, #tpu.memory_space<vmem>>, vector<16x128xf32>,
    %c0_101 = arith.constant 0 : index
    %c0_102 = arith.constant 0 : index
    %c0_103 = arith.constant 0 : index
    %c68 = arith.constant 68 : index
    %72 = vector.load %arg2[%c0_101, %c0_102, %c0_103, %c68] : memref<1x1x16x196xf32, #tpu.memory_space<vmem>>, vector<1x1x16x128xf32>
    %73 = vector.shape_cast %72 : vector<1x1x16x128xf32> to vector<16x128xf32>
    %c384 = arith.constant 384 : index
    %c0_104 = arith.constant 0 : index
    %74 = vector.load %arg6[%c384, %c0_104] : memref<400x128xf32, #tpu.memory_space<vmem>>, vector<16x128xf32>
    tpu.vector_store %arg6[%c384, %c0_104], %73 {strides = array<i32>} : memref<400x128xf32, #tpu.memory_space<vmem>>, vector<16x128xf32>,
    %c0_105 = arith.constant 0 : index
    %c0_106 = arith.constant 0 : index
    %75 = vector.load %arg3[%c0_105, %c0_106] : memref<32x400xf32, #tpu.memory_space<vmem>>, vector<32x400xf32>
    %c0_107 = arith.constant 0 : index
    %c0_108 = arith.constant 0 : index
    %76 = vector.load %arg6[%c0_107, %c0_108] : memref<400x128xf32, #tpu.memory_space<vmem>>, vector<400x128xf32>
    %cst = arith.constant dense<0.000000e+00> : vector<32x128xf32>
    %77 = tpu.matmul %75, %76, %cst {dimension_numbers = #tpu.dot_dimension_numbers<[1], [0], [0], [1], [0, 0, 1, 1], [], []>} : vector<32x400xf32>, vector<400x128xf32>, vector<32x128xf32> -> vector<32x128xf32>
    %c0_109 = arith.constant 0 : index
    %c0_110 = arith.constant 0 : index
    %78 = vector.load %arg4[%c0_109, %c0_110] : memref<32x1xf32, #tpu.memory_space<vmem>>, vector<32x1xf32>
    %79 = vector.broadcast %78 : vector<32x1xf32> to vector<32x128xf32>
    %80 = arith.addf %77, %79 : vector<32x128xf32>
    %cst_111 = arith.constant 0.000000e+00 : f32
    %81 = vector.broadcast %cst_111 : f32 to vector<32x128xf32>
    %82 = arith.maximumf %80, %81 : vector<32x128xf32>
    %83 = arith.truncf %82 : vector<32x128xf32> to vector<32x128xbf16>
    %c0_112 = arith.constant 0 : index
    %c0_113 = arith.constant 0 : index
    %c0_114 = arith.constant 0 : index
    %84 = vector.load %arg5[%c0_112, %c0_113, %c0_114] : memref<1x32x128xbf16, #tpu.memory_space<vmem>>, vector<1x32x128xbf16>
    %85 = vector.shape_cast %84 : vector<1x32x128xbf16> to vector<32x128xbf16>
    %86 = vector.shape_cast %83 : vector<32x128xbf16> to vector<1x32x128xbf16>
    tpu.vector_store %arg5[%c0_112, %c0_113, %c0_114], %86 {strides = array<i32>} : memref<1x32x128xbf16, #tpu.memory_space<vmem>>, vector<1x32x128xbf16>,
    return
  }
  func.func @transform_0(%arg0: i32, %arg1: i32) -> (i32, i32, i32, i32) {
    %c0_i32 = arith.constant 0 : i32
    %c0_i32_0 = arith.constant 0 : i32
    %c0_i32_1 = arith.constant 0 : i32
    return %arg0, %arg1, %c0_i32, %c0_i32_0 : i32, i32, i32, i32
  }
  func.func @transform_1(%arg0: i32, %arg1: i32) -> (i32, i32) {
    %c0_i32 = arith.constant 0 : i32
    %c0_i32_0 = arith.constant 0 : i32
    %c0_i32_1 = arith.constant 0 : i32
    return %c0_i32, %c0_i32_0 : i32, i32
  }
  func.func @transform_2(%arg0: i32, %arg1: i32) -> (i32, i32) {
    %c0_i32 = arith.constant 0 : i32
    %c0_i32_0 = arith.constant 0 : i32
    %c0_i32_1 = arith.constant 0 : i32
    return %c0_i32, %c0_i32_0 : i32, i32
  }
  func.func @transform_3(%arg0: i32, %arg1: i32) -> (i32, i32, i32) {
    %c0_i32 = arith.constant 0 : i32
    %c0_i32_0 = arith.constant 0 : i32
    return %arg0, %c0_i32, %arg1 : i32, i32, i32
  }
}

module attributes {stable_mosaic.version = 11 : i64} {
  func.func @_fc_in_kernel(%arg0: i32, %arg1: i32, %arg2: memref<2x2048xbf16, #tpu.memory_space<vmem>>, %arg3: memref<32x2048xbf16, #tpu.memory_space<vmem>>, %arg4: memref<1x32xf32, #tpu.memory_space<vmem>>, %arg5: memref<2x32xf32, #tpu.memory_space<vmem>>, %arg6: memref<2x32xf32, #tpu.memory_space<vmem>>) attributes {dimension_semantics = [#tpu.dimension_semantics<parallel>, #tpu.dimension_semantics<arbitrary>], iteration_bounds = array<i64: 1, 1>, scalar_prefetch = 0 : i64, scratch_operands = 1 : i64, tpu.core_type = #tpu.core_type<tc>, window_params = [{transform_indices = @transform_0, window_bounds = array<i64: 2, 2048>}, {transform_indices = @transform_1, window_bounds = array<i64: 32, 2048>}, {transform_indices = @transform_2, window_bounds = array<i64: 1, 32>}, {transform_indices = @transform_3, window_bounds = array<i64: 2, 32>}]} {
    %c0_i32 = arith.constant 0 : i32
    %0 = arith.cmpi eq, %arg1, %c0_i32 : i32
    %1 = arith.extui %0 : i1 to i32
    %c0_i32_0 = arith.constant 0 : i32
    %2 = arith.cmpi ne, %1, %c0_i32_0 : i32
    scf.if %2 {
      %cst_10 = arith.constant 0.000000e+00 : f32
      %13 = vector.broadcast %cst_10 : f32 to vector<2x32xf32>
      %c0_11 = arith.constant 0 : index
      %c0_12 = arith.constant 0 : index
      %14 = vector.load %arg6[%c0_11, %c0_12] : memref<2x32xf32, #tpu.memory_space<vmem>>, vector<2x32xf32>
      tpu.vector_store %arg6[%c0_11, %c0_12], %13 {strides = array<i32>} : memref<2x32xf32, #tpu.memory_space<vmem>>, vector<2x32xf32>,
    } else {
    }
    %c0 = arith.constant 0 : index
    %c0_1 = arith.constant 0 : index
    %3 = vector.load %arg6[%c0, %c0_1] : memref<2x32xf32, #tpu.memory_space<vmem>>, vector<2x32xf32>
    %c0_2 = arith.constant 0 : index
    %c0_3 = arith.constant 0 : index
    %4 = vector.load %arg2[%c0_2, %c0_3] : memref<2x2048xbf16, #tpu.memory_space<vmem>>, vector<2x2048xbf16>
    %c0_4 = arith.constant 0 : index
    %c0_5 = arith.constant 0 : index
    %5 = vector.load %arg3[%c0_4, %c0_5] : memref<32x2048xbf16, #tpu.memory_space<vmem>>, vector<32x2048xbf16>
    %6 = tpu.transpose %5, [1, 0] : vector<32x2048xbf16> -> vector<2048x32xbf16>
    %cst = arith.constant dense<0.000000e+00> : vector<2x32xf32>
    %7 = tpu.matmul %4, %6, %cst {dimension_numbers = #tpu.dot_dimension_numbers<[1], [0], [0], [1], [0, 0, 1, 1], [], []>} : vector<2x2048xbf16>, vector<2048x32xbf16>, vector<2x32xf32> -> vector<2x32xf32>
    %8 = arith.addf %3, %7 : vector<2x32xf32>
    %c0_6 = arith.constant 0 : index
    %c0_7 = arith.constant 0 : index
    %9 = vector.load %arg6[%c0_6, %c0_7] : memref<2x32xf32, #tpu.memory_space<vmem>>, vector<2x32xf32>
    tpu.vector_store %arg6[%c0_6, %c0_7], %8 {strides = array<i32>} : memref<2x32xf32, #tpu.memory_space<vmem>>, vector<2x32xf32>,
    %c0_i32_8 = arith.constant 0 : i32
    %10 = arith.cmpi eq, %arg1, %c0_i32_8 : i32
    %11 = arith.extui %10 : i1 to i32
    %c0_i32_9 = arith.constant 0 : i32
    %12 = arith.cmpi ne, %11, %c0_i32_9 : i32
    scf.if %12 {
      %c0_10 = arith.constant 0 : index
      %c0_11 = arith.constant 0 : index
      %13 = vector.load %arg6[%c0_10, %c0_11] : memref<2x32xf32, #tpu.memory_space<vmem>>, vector<2x32xf32>
      %c0_12 = arith.constant 0 : index
      %c0_13 = arith.constant 0 : index
      %14 = vector.load %arg4[%c0_12, %c0_13] : memref<1x32xf32, #tpu.memory_space<vmem>>, vector<1x32xf32>
      %15 = vector.broadcast %14 : vector<1x32xf32> to vector<2x32xf32>
      %16 = arith.addf %13, %15 : vector<2x32xf32>
      %cst_14 = arith.constant 0.000000e+00 : f32
      %17 = vector.broadcast %cst_14 : f32 to vector<2x32xf32>
      %18 = arith.cmpf ogt, %16, %17 : vector<2x32xf32>
      %cst_15 = arith.constant 2.000000e-01 : f32
      %19 = vector.broadcast %cst_15 : f32 to vector<2x32xf32>
      %20 = arith.mulf %19, %16 : vector<2x32xf32>
      %21 = arith.select %18, %16, %20 : vector<2x32xi1>, vector<2x32xf32>
      %c0_16 = arith.constant 0 : index
      %c0_17 = arith.constant 0 : index
      %22 = vector.load %arg5[%c0_16, %c0_17] : memref<2x32xf32, #tpu.memory_space<vmem>>, vector<2x32xf32>
      tpu.vector_store %arg5[%c0_16, %c0_17], %21 {strides = array<i32>} : memref<2x32xf32, #tpu.memory_space<vmem>>, vector<2x32xf32>,
    } else {
    }
    return
  }
  func.func @transform_0(%arg0: i32, %arg1: i32) -> (i32, i32) {
    %c0_i32 = arith.constant 0 : i32
    %c0_i32_0 = arith.constant 0 : i32
    return %c0_i32, %arg1 : i32, i32
  }
  func.func @transform_1(%arg0: i32, %arg1: i32) -> (i32, i32) {
    %c0_i32 = arith.constant 0 : i32
    return %arg0, %arg1 : i32, i32
  }
  func.func @transform_2(%arg0: i32, %arg1: i32) -> (i32, i32) {
    %c0_i32 = arith.constant 0 : i32
    %c0_i32_0 = arith.constant 0 : i32
    return %c0_i32, %arg0 : i32, i32
  }
  func.func @transform_3(%arg0: i32, %arg1: i32) -> (i32, i32) {
    %c0_i32 = arith.constant 0 : i32
    %c0_i32_0 = arith.constant 0 : i32
    return %c0_i32, %arg0 : i32, i32
  }
}

module attributes {stable_mosaic.version = 11 : i64} {
  func.func @_heads_kernel(%arg0: i32, %arg1: memref<2x32xf32, #tpu.memory_space<vmem>>, %arg2: memref<32x16xf32, #tpu.memory_space<vmem>>, %arg3: memref<1x16xf32, #tpu.memory_space<vmem>>, %arg4: memref<2x16xf32, #tpu.memory_space<vmem>>) attributes {dimension_semantics = [#tpu.dimension_semantics<arbitrary>], iteration_bounds = array<i64: 1>, scalar_prefetch = 0 : i64, scratch_operands = 0 : i64, tpu.core_type = #tpu.core_type<tc>, window_params = [{pipeline_mode = #tpu.pipeline_mode<synchronous>, transform_indices = @transform_0, window_bounds = array<i64: 2, 32>}, {pipeline_mode = #tpu.pipeline_mode<synchronous>, transform_indices = @transform_1, window_bounds = array<i64: 32, 16>}, {pipeline_mode = #tpu.pipeline_mode<synchronous>, transform_indices = @transform_2, window_bounds = array<i64: 1, 16>}, {pipeline_mode = #tpu.pipeline_mode<synchronous>, transform_indices = @transform_3, window_bounds = array<i64: 2, 16>}]} {
    %c0 = arith.constant 0 : index
    %c0_0 = arith.constant 0 : index
    %0 = vector.load %arg1[%c0, %c0_0] : memref<2x32xf32, #tpu.memory_space<vmem>>, vector<2x32xf32>
    %c0_1 = arith.constant 0 : index
    %c0_2 = arith.constant 0 : index
    %1 = vector.load %arg2[%c0_1, %c0_2] : memref<32x16xf32, #tpu.memory_space<vmem>>, vector<32x16xf32>
    %cst = arith.constant dense<0.000000e+00> : vector<2x16xf32>
    %2 = tpu.matmul %0, %1, %cst {dimension_numbers = #tpu.dot_dimension_numbers<[1], [0], [0], [1], [0, 0, 1, 1], [], []>} : vector<2x32xf32>, vector<32x16xf32>, vector<2x16xf32> -> vector<2x16xf32>
    %c0_3 = arith.constant 0 : index
    %c0_4 = arith.constant 0 : index
    %3 = vector.load %arg3[%c0_3, %c0_4] : memref<1x16xf32, #tpu.memory_space<vmem>>, vector<1x16xf32>
    %4 = vector.broadcast %3 : vector<1x16xf32> to vector<2x16xf32>
    %5 = arith.addf %2, %4 : vector<2x16xf32>
    %c0_5 = arith.constant 0 : index
    %c0_6 = arith.constant 0 : index
    %6 = vector.load %arg4[%c0_5, %c0_6] : memref<2x16xf32, #tpu.memory_space<vmem>>, vector<2x16xf32>
    tpu.vector_store %arg4[%c0_5, %c0_6], %5 {strides = array<i32>} : memref<2x16xf32, #tpu.memory_space<vmem>>, vector<2x16xf32>,
    return
  }
  func.func @transform_0(%arg0: i32) -> (i32, i32) {
    %c0_i32 = arith.constant 0 : i32
    %c0_i32_0 = arith.constant 0 : i32
    %c0_i32_1 = arith.constant 0 : i32
    return %c0_i32, %c0_i32_0 : i32, i32
  }
  func.func @transform_1(%arg0: i32) -> (i32, i32) {
    %c0_i32 = arith.constant 0 : i32
    %c0_i32_0 = arith.constant 0 : i32
    %c0_i32_1 = arith.constant 0 : i32
    return %c0_i32, %c0_i32_0 : i32, i32
  }
  func.func @transform_2(%arg0: i32) -> (i32, i32) {
    %c0_i32 = arith.constant 0 : i32
    %c0_i32_0 = arith.constant 0 : i32
    %c0_i32_1 = arith.constant 0 : i32
    return %c0_i32, %c0_i32_0 : i32, i32
  }
  func.func @transform_3(%arg0: i32) -> (i32, i32) {
    %c0_i32 = arith.constant 0 : i32
    %c0_i32_0 = arith.constant 0 : i32
    %c0_i32_1 = arith.constant 0 : i32
    return %c0_i32, %c0_i32_0 : i32, i32
  }
}

</mosaic_0001>

<llo_original>
// kernel: encoder_forward.4
$region0: #{encoder_forward.4}
  #allocation0 [shape = 'u32[]', space=smem, size = 0x4, offset = 0x4, fixed_abs, tag = 'smem constant byte address 0x4 - core index']
  #allocation1 [shape = 'u32[144,128]{1,0:T(1,128)}', space=vmem, size = 0x12000, scoped, tag = 'internal scratch']
  #allocation2 [shape = 'f32[100,192]{1,0:T(8,128)}', space=vmem, size = 0x1a000, scoped, tag = 'scratch operand']
  %s0 = inlined_call_operand.vmem [shape: f32[2,1,4,260], index: 0, kind: input, shape index: {}]
  %s1 = inlined_call_operand.vmem [shape: f32[16,100], index: 1, kind: input, shape index: {}]
  %s2 = inlined_call_operand.vmem [shape: f32[16,1], index: 2, kind: input, shape index: {}]
  %s3 = inlined_call_operand.vmem [shape: f32[2,16,192], index: 3, kind: output, shape index: {}]
  %s4 = sld [smem:[#allocation0]]
  $region45: #{encoder_forward.4} parent=0
    _
  %s6 = ssub.s32 1, %s4
  %s7 = scalar_select 0, %s6, %s4
  loop: start=0, step=1, limit=4
  $region2: #{encoder_forward.4} parent=0 // loop_pre_header
    _
  $region3: #{encoder_forward.4} parent=0 // loop_header
    %s9 = sphi 0, %s13
    %p10 = scmp.ge.s32.totalorder %s9, 4
    %s16 = sphi 0, %s28
    %s17 = sphi 0, %s24
    %s18 = sphi 0, %s16
    %s19 = sphi 0, %s17
    %s20 = sphi 0, %s18
    %s21 = sphi 0, %s19
    %s33 = sphi 0, %s35
    %s36 = sphi 0, %s33
    %s37 = sphi 0, %s36
    %s53 = sphi 0, %s37
    %s57 = sphi 0, %s57
    %s59 = sphi 0, %s57
    %s60 = sphi 0, %s59
    %s74 = sphi 0, %s60
    %s78 = sphi 0, %s78
    %s80 = sphi 0, %s78
    %s81 = sphi 0, %s80
    %s95 = sphi 0, %s81
    %s103 = sphi 0, %s105
    %s106 = sphi 0, %s103
    %s107 = sphi 0, %s106
    %s123 = sphi 0, %s107
  $region4: #{encoder_forward.4} parent=0 // loop_header_branch
    %12 = sbr.rel (%p10) target = $region8
  $region5: #{encoder_forward.4} parent=0 // loop_body
    %s14 = ssub.s32 %s9, 1
    %s15 = ssub.s32 %s9, 2
    %s22 = sadd.s32 1, %s17
    %p23 = scmp.ge.s32.totalorder %s22, 1
    %s24 = scalar_select %p23, 0, %s22
    %s25 = sadd.s32 1, %s16
    %s26 = scalar_select %p23, %s25, %s16
    %p27 = scmp.ge.s32.totalorder %s26, 2
    %s28 = scalar_select %p27, 0, %s26
    %s29 = ssub.s32 %s16, %s28
    %s30 = ssub.s32 %s17, %s24
    %s31 = sor.u32 %s29, %s30
    %p32 = scmp.eq.s32.totalorder %s31, 0
    %s34 = sadd.s32 %s33, 1
    %s35 = scalar_select %p32, %s33, %s34
    %p38 = pneg %p32
    %p39 = scmp.eq.s32.totalorder %s9, 1
    %p40 = por %p38, %p39
    %p41 = scmp.ne.s32.totalorder %s33, %s36
    %p42 = scmp.eq.s32.totalorder %s9, 0
    %p43 = por %p41, %p42
    %p44 = scmp.ne.s32.totalorder %s33, %s36
    %p45 = scmp.eq.s32.totalorder %s14, 1
    %p46 = por %p44, %p45
    %p47 = scmp.ne.s32.totalorder %s36, %s37
    %p48 = scmp.eq.s32.totalorder %s14, 0
    %p49 = por %p47, %p48
    %p50 = scmp.ne.s32.totalorder %s36, %s37
    %p51 = scmp.eq.s32.totalorder %s15, 1
    %p52 = por %p50, %p51
    %p54 = scmp.ne.s32.totalorder %s37, %s53
    %p55 = scmp.eq.s32.totalorder %s15, 0
    %p56 = por %p54, %p55
    %s58 = sadd.s32 %s57, 1
    %p61 = scmp.eq.s32.totalorder %s9, 1
    %p62 = scmp.ne.s32.totalorder %s57, %s59
    %p63 = scmp.eq.s32.totalorder %s9, 0
    %p64 = por %p62, %p63
    %p65 = scmp.ne.s32.totalorder %s57, %s59
    %p66 = scmp.eq.s32.totalorder %s14, 1
    %p67 = por %p65, %p66
    %p68 = scmp.ne.s32.totalorder %s59, %s60
    %p69 = scmp.eq.s32.totalorder %s14, 0
    %p70 = por %p68, %p69
    %p71 = scmp.ne.s32.totalorder %s59, %s60
    %p72 = scmp.eq.s32.totalorder %s15, 1
    %p73 = por %p71, %p72
    %p75 = scmp.ne.s32.totalorder %s60, %s74
    %p76 = scmp.eq.s32.totalorder %s15, 0
    %p77 = por %p75, %p76
    %s79 = sadd.s32 %s78, 1
    %p82 = scmp.eq.s32.totalorder %s9, 1
    %p83 = scmp.ne.s32.totalorder %s78, %s80
    %p84 = scmp.eq.s32.totalorder %s9, 0
    %p85 = por %p83, %p84
    %p86 = scmp.ne.s32.totalorder %s78, %s80
    %p87 = scmp.eq.s32.totalorder %s14, 1
    %p88 = por %p86, %p87
    %p89 = scmp.ne.s32.totalorder %s80, %s81
    %p90 = scmp.eq.s32.totalorder %s14, 0
    %p91 = por %p89, %p90
    %p92 = scmp.ne.s32.totalorder %s80, %s81
    %p93 = scmp.eq.s32.totalorder %s15, 1
    %p94 = por %p92, %p93
    %p96 = scmp.ne.s32.totalorder %s81, %s95
    %p97 = scmp.eq.s32.totalorder %s15, 0
    %p98 = por %p96, %p97
    %s99 = ssub.s32 %s16, %s28
    %s100 = ssub.s32 %s17, %s24
    %s101 = sor.u32 %s99, %s100
    %p102 = scmp.eq.s32.totalorder %s101, 0
    %s104 = sadd.s32 %s103, 1
    %s105 = scalar_select %p102, %s103, %s104
    %p108 = pneg %p102
    %p109 = scmp.eq.s32.totalorder %s9, 1
    %p110 = por %p108, %p109
    %p111 = scmp.ne.s32.totalorder %s103, %s106
    %p112 = scmp.eq.s32.totalorder %s9, 0
    %p113 = por %p111, %p112
    %p114 = scmp.ne.s32.totalorder %s103, %s106
    %p115 = scmp.eq.s32.totalorder %s14, 1
    %p116 = por %p114, %p115
    %p117 = scmp.ne.s32.totalorder %s106, %s107
    %p118 = scmp.eq.s32.totalorder %s14, 0
    %p119 = por %p117, %p118
    %p120 = scmp.ne.s32.totalorder %s106, %s107
    %p121 = scmp.eq.s32.totalorder %s15, 1
    %p122 = por %p120, %p121
    %p124 = scmp.ne.s32.totalorder %s107, %s123
    %p125 = scmp.eq.s32.totalorder %s15, 0
    %p126 = por %p124, %p125
    %p127 = scmp.le.s32.totalorder 1, %s9
    %p128 = scmp.lt.s32.totalorder %s9, 3
    %p129 = pnand %p127, %p128
    %p130 = pneg %p129
    // Predicated region
    $region9: #{encoder_forward.4} parent=5 // pred_check
      _
    $region10: #{encoder_forward.4} parent=5 // pred_check_branch
      %132 = sbr.rel (%p129) target = $region12
    $region11: #{encoder_forward.4} parent=5 // pred_region
      %s133 = ssub.s32 %s9, 1
      // Predicated region
      $region13: #{encoder_forward.4} parent=11 // pred_check
        %p134 = pneg %p70
      $region14: #{encoder_forward.4} parent=11 // pred_check_branch
        %136 = sbr.rel (%p134) target = $region16
      $region15: #{encoder_forward.4} parent=11 // pred_region
        _
      $region16: #{encoder_forward.4} parent=11 // pred_fallthru
        _
      // Predicated region
      $region17: #{encoder_forward.4} parent=11 // pred_check
        %p137 = pneg %p91
      $region18: #{encoder_forward.4} parent=11 // pred_check_branch
        %139 = sbr.rel (%p137) target = $region20
      $region19: #{encoder_forward.4} parent=11 // pred_region
        _
      $region20: #{encoder_forward.4} parent=11 // pred_fallthru
        _
    $region12: #{encoder_forward.4} parent=5 // pred_fallthru
      _
    %p140 = scmp.lt.s32.totalorder %s9, 2
    // Predicated region
    $region21: #{encoder_forward.4} parent=5 // pred_check
      %p141 = pneg %p140
    $region22: #{encoder_forward.4} parent=5 // pred_check_branch
      %143 = sbr.rel (%p141) target = $region24
    $region23: #{encoder_forward.4} parent=5 // pred_region
      // Predicated region
      $region25: #{encoder_forward.4} parent=23 // pred_check
        %p144 = pneg %p43
      $region26: #{encoder_forward.4} parent=23 // pred_check_branch
        %146 = sbr.rel (%p144) target = $region28
      $region27: #{encoder_forward.4} parent=23 // pred_region
        %p147 = scmp.lt.s32.totalorder %s16, 1
        %s148 = scalar_select %p147, %s16, 1
        %p149 = scmp.lt.s32.totalorder %s17, 0
        %s150 = scalar_select %p149, %s17, 0
        %s151 = smul.addr %s150, 3
        %s152 = smul.addr %s148, 3
        %s153 = sadd.s32 %s151, %s152
        %s154 = smul.addr %s153, 4
        %s155 = scalar_lea.vmem %s0, %s154
      $region28: #{encoder_forward.4} parent=23 // pred_fallthru
        _
    $region24: #{encoder_forward.4} parent=5 // pred_fallthru
      _
    %p156 = scmp.le.s32.totalorder 1, %s9
    %p157 = scmp.lt.s32.totalorder %s9, 3
    %p158 = pnand %p156, %p157
    %p159 = pneg %p158
    // Predicated region
    $region29: #{encoder_forward.4} parent=5 // pred_check
      _
    $region30: #{encoder_forward.4} parent=5 // pred_check_branch
      %161 = sbr.rel (%p158) target = $region32
    $region31: #{encoder_forward.4} parent=5 // pred_region
      %s162 = ssub.s32 %s9, 1
      %p163 = scmp.lt.s32.totalorder %s18, 1
      %s164 = scalar_select %p163, %s18, 1
      %p165 = scmp.lt.s32.totalorder %s19, 0
      %s166 = scalar_select %p165, %s19, 0
      %s167 = smul.addr %s166, 3
      %s168 = smul.addr %s164, 3
      %s169 = sadd.s32 %s167, %s168
      %s170 = smul.addr %s169, 4
      %s171 = scalar_lea.vmem %s0, %s170
      %p172 = pneg %p49
      %p173 = pneg %p46
      %p174 = pneg %p70
      %p175 = pneg %p67
      %p176 = pneg %p91
      %p177 = pneg %p88
      %p178 = pneg %p119
      %p179 = pneg %p116
      %s180 = smul.u32 2, %s19
      %p181 = scmp.lt.s32.totalorder %s18, 1
      %s182 = scalar_select %p181, %s18, 1
      %p183 = scmp.lt.s32.totalorder %s180, 1
      %s184 = scalar_select %p183, %s180, 1
      %s185 = smul.addr %s182, 4
      %s186 = sadd.s32 %s184, %s185
      %s187 = smul.addr %s186, 8
      %s188 = scalar_lea.vmem %s3, %s187
      %p189 = scmp.lt.s32.totalorder %s18, 1
      %s190 = scalar_select %p189, %s18, 1
      %p191 = scmp.lt.s32.totalorder %s19, 0
      %s192 = scalar_select %p191, %s19, 0
      %s193 = smul.addr %s192, 3
      %s194 = smul.addr %s190, 3
      %s195 = sadd.s32 %s193, %s194
      %s196 = smul.addr %s195, 4
      %s197 = scalar_lea.vmem %s0, %s196
      %s198 = smul.u32 2, %s19
      %p199 = scmp.lt.s32.totalorder %s18, 1
      %s200 = scalar_select %p199, %s18, 1
      %p201 = scmp.lt.s32.totalorder %s198, 1
      %s202 = scalar_select %p201, %s198, 1
      %s203 = smul.addr %s200, 4
      %s204 = sadd.s32 %s202, %s203
      %s205 = smul.addr %s204, 8
      %s206 = scalar_lea.vmem %s3, %s205
      %s207 = smul.u32 2, %s19
      %v208 = vld [vmem:[%s197] sm:$0xff]
      %v210 = vcombine.high %v208, %v208
      %212 = vst [vmem:[#allocation2] sm:$0xf] %v208
      %vm213 = vcmask 519168
      %214 = vst.msk [vmem:[#allocation2 + $0x8] sm:$0xf] %vm213, %v210
      %v215 = vld [vmem:[%s197] sm:$0xff]
      %v217 = vcombine.low %v215, %v215
      %218 = vrot.lane.b32.xlu0 %v217, 127
      %v219 = vpop.permute.xlu0 %218
      %220 = vrot.lane.b32.xlu0 %v215, 127
      %v221 = vpop.permute.xlu0 %220
      %vm222 = vcmask 1039360
      %v223 = vsel %vm222, %v219, %v221
      %226 = vst [vmem:[#allocation2] sm:$0xf0] %v223
      %vm227 = vcmask 523268
      %228 = vst.msk [vmem:[#allocation2 + $0x8] sm:$0xf0] %vm227, %v221
      %v229 = vld [vmem:[%s197] sm:$0xff]
      %v231 = vcombine.high %v229, %v229
      %232 = vrot.lane.b32.xlu0 %v229, 126
      %v233 = vpop.permute.xlu0 %232
      %234 = vrot.lane.b32.xlu0 %v231, 126
      %v235 = vpop.permute.xlu0 %234
      %vm236 = vcmask 1031168
      %v237 = vsel %vm236, %v233, %v235
      %240 = vst [vmem:[#allocation2 + $0x10] sm:$0xf] %v237
      %241 = vst.msk [vmem:[#allocation2 + $0x18] sm:$0xf] %vm213, %v235
      %v242 = vld [vmem:[%s197] sm:$0xff]
      %v244 = vcombine.low %v242, %v242
      %245 = vrot.lane.b32.xlu0 %v244, 125
      %v246 = vpop.permute.xlu0 %245
      %247 = vrot.lane.b32.xlu0 %v242, 125
      %v248 = vpop.permute.xlu0 %247
      %vm249 = vcmask 1022976
      %v250 = vsel %vm249, %v246, %v248
      %253 = vst [vmem:[#allocation2 + $0x10] sm:$0xf0] %v250
      %254 = vst.msk [vmem:[#allocation2 + $0x18] sm:$0xf0] %vm227, %v248
      %v255 = vld [vmem:[%s197] sm:$0xff]
      %v257 = vcombine.high %v255, %v255
      %258 = vrot.lane.b32.xlu0 %v255, 124
      %v259 = vpop.permute.xlu0 %258
      %260 = vrot.lane.b32.xlu0 %v257, 124
      %v261 = vpop.permute.xlu0 %260
      %vm262 = vcmask 1014784
      %v263 = vsel %vm262, %v259, %v261
      %266 = vst [vmem:[#allocation2 + $0x20] sm:$0xf] %v263
      %267 = vst.msk [vmem:[#allocation2 + $0x28] sm:$0xf] %vm213, %v261
      %v268 = vld [vmem:[%s197] sm:$0xff]
      %v270 = vcombine.low %v268, %v268
      %271 = vrot.lane.b32.xlu0 %v270, 112
      %v272 = vpop.permute.xlu0 %271
      %273 = vrot.lane.b32.xlu0 %v268, 112
      %v274 = vpop.permute.xlu0 %273
      %vm275 = vcmask 916480
      %v276 = vsel %vm275, %v272, %v274
      %279 = vst [vmem:[#allocation2 + $0x20] sm:$0xf0] %v276
      %280 = vst.msk [vmem:[#allocation2 + $0x28] sm:$0xf0] %vm227, %v274
      %v281 = vld [vmem:[%s197] sm:$0xff]
      %v283 = vcombine.high %v281, %v281
      %284 = vrot.lane.b32.xlu0 %v281, 111
      %v285 = vpop.permute.xlu0 %284
      %286 = vrot.lane.b32.xlu0 %v283, 111
      %v287 = vpop.permute.xlu0 %286
      %vm288 = vcmask 908288
      %v289 = vsel %vm288, %v285, %v287
      %292 = vst [vmem:[#allocation2 + $0x30] sm:$0xf] %v289
      %293 = vst.msk [vmem:[#allocation2 + $0x38] sm:$0xf] %vm213, %v287
      %v294 = vld [vmem:[%s197] sm:$0xff]
      %v296 = vcombine.low %v294, %v294
      %297 = vrot.lane.b32.xlu0 %v296, 110
      %v298 = vpop.permute.xlu0 %297
      %299 = vrot.lane.b32.xlu0 %v294, 110
      %v300 = vpop.permute.xlu0 %299
      %vm301 = vcmask 900096
      %v302 = vsel %vm301, %v298, %v300
      %305 = vst [vmem:[#allocation2 + $0x30] sm:$0xf0] %v302
      %306 = vst.msk [vmem:[#allocation2 + $0x38] sm:$0xf0] %vm227, %v300
      %v307 = vld [vmem:[%s197] sm:$0xff]
      %v309 = vcombine.high %v307, %v307
      %310 = vrot.lane.b32.xlu0 %v307, 109
      %v311 = vpop.permute.xlu0 %310
      %312 = vrot.lane.b32.xlu0 %v309, 109
      %v313 = vpop.permute.xlu0 %312
      %vm314 = vcmask 891904
      %v315 = vsel %vm314, %v311, %v313
      %318 = vst [vmem:[#allocation2 + $0x40] sm:$0xf] %v315
      %319 = vst.msk [vmem:[#allocation2 + $0x48] sm:$0xf] %vm213, %v313
      %v320 = vld [vmem:[%s197] sm:$0xff]
      %v322 = vcombine.low %v320, %v320
      %323 = vrot.lane.b32.xlu0 %v322, 108
      %v324 = vpop.permute.xlu0 %323
      %325 = vrot.lane.b32.xlu0 %v320, 108
      %v326 = vpop.permute.xlu0 %325
      %vm327 = vcmask 883712
      %v328 = vsel %vm327, %v324, %v326
      %331 = vst [vmem:[#allocation2 + $0x40] sm:$0xf0] %v328
      %332 = vst.msk [vmem:[#allocation2 + $0x48] sm:$0xf0] %vm227, %v326
      %v333 = vld [vmem:[%s197] sm:$0xff]
      %v335 = vcombine.high %v333, %v333
      %336 = vrot.lane.b32.xlu0 %v333, 96
      %v337 = vpop.permute.xlu0 %336
      %338 = vrot.lane.b32.xlu0 %v335, 96
      %v339 = vpop.permute.xlu0 %338
      %vm340 = vcmask 785408
      %v341 = vsel %vm340, %v337, %v339
      %344 = vst [vmem:[#allocation2 + $0x50] sm:$0xf] %v341
      %345 = vst.msk [vmem:[#allocation2 + $0x58] sm:$0xf] %vm213, %v339
      %v346 = vld [vmem:[%s197] sm:$0xff]
      %v348 = vcombine.low %v346, %v346
      %349 = vrot.lane.b32.xlu0 %v348, 95
      %v350 = vpop.permute.xlu0 %349
      %351 = vrot.lane.b32.xlu0 %v346, 95
      %v352 = vpop.permute.xlu0 %351
      %vm353 = vcmask 777216
      %v354 = vsel %vm353, %v350, %v352
      %357 = vst [vmem:[#allocation2 + $0x50] sm:$0xf0] %v354
      %358 = vst.msk [vmem:[#allocation2 + $0x58] sm:$0xf0] %vm227, %v352
      %v359 = vld [vmem:[%s197] sm:$0xff]
      %v361 = vcombine.high %v359, %v359
      %362 = vrot.lane.b32.xlu0 %v359, 94
      %v363 = vpop.permute.xlu0 %362
      %364 = vrot.lane.b32.xlu0 %v361, 94
      %v365 = vpop.permute.xlu0 %364
      %vm366 = vcmask 769024
      %v367 = vsel %vm366, %v363, %v365
      %370 = vst [vmem:[#allocation2 + $0x60] sm:$0xf] %v367
      %371 = vst.msk [vmem:[#allocation2 + $0x68] sm:$0xf] %vm213, %v365
      %v372 = vld [vmem:[%s197] sm:$0xff]
      %v374 = vcombine.low %v372, %v372
      %375 = vrot.lane.b32.xlu0 %v374, 93
      %v376 = vpop.permute.xlu0 %375
      %377 = vrot.lane.b32.xlu0 %v372, 93
      %v378 = vpop.permute.xlu0 %377
      %vm379 = vcmask 760832
      %v380 = vsel %vm379, %v376, %v378
      %383 = vst [vmem:[#allocation2 + $0x60] sm:$0xf0] %v380
      %384 = vst.msk [vmem:[#allocation2 + $0x68] sm:$0xf0] %vm227, %v378
      %v385 = vld [vmem:[%s197] sm:$0xff]
      %v387 = vcombine.high %v385, %v385
      %388 = vrot.lane.b32.xlu0 %v385, 92
      %v389 = vpop.permute.xlu0 %388
      %390 = vrot.lane.b32.xlu0 %v387, 92
      %v391 = vpop.permute.xlu0 %390
      %vm392 = vcmask 752640
      %v393 = vsel %vm392, %v389, %v391
      %396 = vst [vmem:[#allocation2 + $0x70] sm:$0xf] %v393
      %397 = vst.msk [vmem:[#allocation2 + $0x78] sm:$0xf] %vm213, %v391
      %v398 = vld [vmem:[%s197] sm:$0xff]
      %v400 = vcombine.low %v398, %v398
      %401 = vrot.lane.b32.xlu0 %v400, 80
      %v402 = vpop.permute.xlu0 %401
      %403 = vrot.lane.b32.xlu0 %v398, 80
      %v404 = vpop.permute.xlu0 %403
      %vm405 = vcmask 654336
      %v406 = vsel %vm405, %v402, %v404
      %409 = vst [vmem:[#allocation2 + $0x70] sm:$0xf0] %v406
      %410 = vst.msk [vmem:[#allocation2 + $0x78] sm:$0xf0] %vm227, %v404
      %v411 = vld [vmem:[%s197] sm:$0xff]
      %v413 = vcombine.high %v411, %v411
      %414 = vrot.lane.b32.xlu0 %v411, 79
      %v415 = vpop.permute.xlu0 %414
      %416 = vrot.lane.b32.xlu0 %v413, 79
      %v417 = vpop.permute.xlu0 %416
      %vm418 = vcmask 646144
      %v419 = vsel %vm418, %v415, %v417
      %422 = vst [vmem:[#allocation2 + $0x80] sm:$0xf] %v419
      %423 = vst.msk [vmem:[#allocation2 + $0x88] sm:$0xf] %vm213, %v417
      %v424 = vld [vmem:[%s197] sm:$0xff]
      %v426 = vcombine.low %v424, %v424
      %427 = vrot.lane.b32.xlu0 %v426, 78
      %v428 = vpop.permute.xlu0 %427
      %429 = vrot.lane.b32.xlu0 %v424, 78
      %v430 = vpop.permute.xlu0 %429
      %vm431 = vcmask 637952
      %v432 = vsel %vm431, %v428, %v430
      %435 = vst [vmem:[#allocation2 + $0x80] sm:$0xf0] %v432
      %436 = vst.msk [vmem:[#allocation2 + $0x88] sm:$0xf0] %vm227, %v430
      %v437 = vld [vmem:[%s197] sm:$0xff]
      %v439 = vcombine.high %v437, %v437
      %440 = vrot.lane.b32.xlu0 %v437, 77
      %v441 = vpop.permute.xlu0 %440
      %442 = vrot.lane.b32.xlu0 %v439, 77
      %v443 = vpop.permute.xlu0 %442
      %vm444 = vcmask 629760
      %v445 = vsel %vm444, %v441, %v443
      %448 = vst [vmem:[#allocation2 + $0x90] sm:$0xf] %v445
      %449 = vst.msk [vmem:[#allocation2 + $0x98] sm:$0xf] %vm213, %v443
      %v450 = vld [vmem:[%s197] sm:$0xff]
      %v452 = vcombine.low %v450, %v450
      %453 = vrot.lane.b32.xlu0 %v452, 76
      %v454 = vpop.permute.xlu0 %453
      %455 = vrot.lane.b32.xlu0 %v450, 76
      %v456 = vpop.permute.xlu0 %455
      %vm457 = vcmask 621568
      %v458 = vsel %vm457, %v454, %v456
      %461 = vst [vmem:[#allocation2 + $0x90] sm:$0xf0] %v458
      %462 = vst.msk [vmem:[#allocation2 + $0x98] sm:$0xf0] %vm227, %v456
      %v463 = vld [vmem:[%s197] sm:$0xff]
      %v465 = vcombine.high %v463, %v463
      %466 = vrot.lane.b32.xlu0 %v463, 64
      %v467 = vpop.permute.xlu0 %466
      %468 = vrot.lane.b32.xlu0 %v465, 64
      %v469 = vpop.permute.xlu0 %468
      %vm470 = vcmask 523264
      %v471 = vsel %vm470, %v467, %v469
      %474 = vst [vmem:[#allocation2 + $0xa0] sm:$0xf] %v471
      %475 = vst.msk [vmem:[#allocation2 + $0xa8] sm:$0xf] %vm213, %v469
      %v476 = vld [vmem:[%s197] sm:$0xff]
      %v477 = vld [vmem:[%s197 + $0x8] sm:$0xf]
      %v480 = vcombine.low %v476, %v476
      %v481 = vcombine.low %v477, %v477
      %482 = vrot.lane.b32.xlu0 %v480, 63
      %v483 = vpop.permute.xlu0 %482
      %484 = vrot.lane.b32.xlu0 %v476, 63
      %v485 = vpop.permute.xlu0 %484
      %486 = vrot.lane.b32.xlu0 %v481, 63
      %v487 = vpop.permute.xlu0 %486
      %vm488 = vcmask 515072
      %v489 = vsel %vm488, %v483, %v485
      %v490 = vsel %vm488, %v485, %v487
      %493 = vst [vmem:[#allocation2 + $0xa0] sm:$0xf0] %v489
      %494 = vst.msk [vmem:[#allocation2 + $0xa8] sm:$0xf0] %vm227, %v490
      %v495 = vld [vmem:[%s197] sm:$0xff]
      %v496 = vld [vmem:[%s197 + $0x8] sm:$0xf]
      %v499 = vcombine.high %v495, %v495
      %500 = vrot.lane.b32.xlu0 %v495, 62
      %v501 = vpop.permute.xlu0 %500
      %502 = vrot.lane.b32.xlu0 %v499, 62
      %v503 = vpop.permute.xlu0 %502
      %504 = vrot.lane.b32.xlu0 %v496, 62
      %v505 = vpop.permute.xlu0 %504
      %vm506 = vcmask 506880
      %v507 = vsel %vm506, %v501, %v503
      %v508 = vsel %vm506, %v503, %v505
      %511 = vst [vmem:[#allocation2 + $0xb0] sm:$0xf] %v507
      %512 = vst.msk [vmem:[#allocation2 + $0xb8] sm:$0xf] %vm213, %v508
      %v513 = vld [vmem:[%s197] sm:$0xff]
      %v514 = vld [vmem:[%s197 + $0x8] sm:$0xf]
      %v517 = vcombine.low %v513, %v513
      %v518 = vcombine.low %v514, %v514
      %519 = vrot.lane.b32.xlu0 %v517, 61
      %v520 = vpop.permute.xlu0 %519
      %521 = vrot.lane.b32.xlu0 %v513, 61
      %v522 = vpop.permute.xlu0 %521
      %523 = vrot.lane.b32.xlu0 %v518, 61
      %v524 = vpop.permute.xlu0 %523
      %vm525 = vcmask 498688
      %v526 = vsel %vm525, %v520, %v522
      %v527 = vsel %vm525, %v522, %v524
      %530 = vst [vmem:[#allocation2 + $0xb0] sm:$0xf0] %v526
      %531 = vst.msk [vmem:[#allocation2 + $0xb8] sm:$0xf0] %vm227, %v527
      %v532 = vld [vmem:[%s197] sm:$0xff]
      %v533 = vld [vmem:[%s197 + $0x8] sm:$0xf]
      %v536 = vcombine.high %v532, %v532
      %537 = vrot.lane.b32.xlu0 %v532, 60
      %v538 = vpop.permute.xlu0 %537
      %539 = vrot.lane.b32.xlu0 %v536, 60
      %v540 = vpop.permute.xlu0 %539
      %541 = vrot.lane.b32.xlu0 %v533, 60
      %v542 = vpop.permute.xlu0 %541
      %vm543 = vcmask 490496
      %v544 = vsel %vm543, %v538, %v540
      %v545 = vsel %vm543, %v540, %v542
      %548 = vst [vmem:[#allocation2 + $0xc0] sm:$0xf] %v544
      %549 = vst.msk [vmem:[#allocation2 + $0xc8] sm:$0xf] %vm213, %v545
      %v550 = vld [vmem:[%s1] sm:$0xff]
      %v551 = vld [vmem:[%s1 + $0x8] sm:$0xff]
      %v552 = vld [vmem:[#allocation2] sm:$0xff]
      %v553 = vld [vmem:[#allocation2 + $0x8] sm:$0xff]
      %v554 = vld [vmem:[#allocation2 + $0x10] sm:$0xff]
      %v555 = vld [vmem:[#allocation2 + $0x18] sm:$0xff]
      %v556 = vld [vmem:[#allocation2 + $0x20] sm:$0xff]
      %v557 = vld [vmem:[#allocation2 + $0x28] sm:$0xff]
      %v558 = vld [vmem:[#allocation2 + $0x30] sm:$0xff]
      %v559 = vld [vmem:[#allocation2 + $0x38] sm:$0xff]
      %v560 = vld [vmem:[#allocation2 + $0x40] sm:$0xff]
      %v561 = vld [vmem:[#allocation2 + $0x48] sm:$0xff]
      %v562 = vld [vmem:[#allocation2 + $0x50] sm:$0xff]
      %v563 = vld [vmem:[#allocation2 + $0x58] sm:$0xff]
      %v564 = vld [vmem:[#allocation2 + $0x60] sm:$0xff]
      %v565 = vld [vmem:[#allocation2 + $0x68] sm:$0xff]
      %v566 = vld [vmem:[#allocation2 + $0x70] sm:$0xff]
      %v567 = vld [vmem:[#allocation2 + $0x78] sm:$0xff]
      %v568 = vld [vmem:[#allocation2 + $0x80] sm:$0xff]
      %v569 = vld [vmem:[#allocation2 + $0x88] sm:$0xff]
      %v570 = vld [vmem:[#allocation2 + $0x90] sm:$0xff]
      %v571 = vld [vmem:[#allocation2 + $0x98] sm:$0xff]
      %v572 = vld [vmem:[#allocation2 + $0xa0] sm:$0xff]
      %v573 = vld [vmem:[#allocation2 + $0xa8] sm:$0xff]
      %v574 = vld [vmem:[#allocation2 + $0xb0] sm:$0xff]
      %v575 = vld [vmem:[#allocation2 + $0xb8] sm:$0xff]
      %v576 = vld [vmem:[#allocation2 + $0xc0] sm:$0xf]
      %v577 = vld [vmem:[#allocation2 + $0xc8] sm:$0xf]
      %v578 = vld [vmem:[%s2] sm:$0xff]
      %v579 = vld [vmem:[%s2 + $0x8] sm:$0xff]
      %581 = vset.pattern.permute.xlu0 0
      %582 = vperm.xlu0 %581, %v578
      %v583 = vpop.permute.xlu0 %582
      %586 = vset.pattern.permute.xlu0 0
      %587 = vperm.xlu0 %586, %v579
      %v588 = vpop.permute.xlu0 %587
      %vm590 = vcmask 818176
      %v592 = vsel %vm590, %v550, 0
      %v595 = vsel %vm590, %v551, 0
      %vm597 = vcmask 1043456
      %v599 = vsel %vm597, %v576, 0
      %v602 = vsel %vm597, %v577, 0
      %604 = vmatprep.subr.mxu0 0.0
      %605 = vmatpush1.msra.mxu0 0.0
      %606 = vmatprep.subr.mxu0 0.0
      %607 = vmatpush1.msra.mxu0 0.0
      %608 = vmatprep.subr.mxu0 0.0
      %609 = vmatpush1.msra.mxu0 0.0
      %610 = vmatprep.subr.mxu0 %v602
      %611 = vmatpush1.msra.mxu0 %v599
      %612 = vmatprep.subr.mxu0 %v575
      %613 = vmatpush1.msra.mxu0 %v574
      %614 = vmatprep.subr.mxu0 %v573
      %615 = vmatpush1.msra.mxu0 %v572
      %616 = vmatprep.subr.mxu0 %v571
      %617 = vmatpush1.msra.mxu0 %v570
      %618 = vmatprep.subr.mxu0 %v569
      %619 = vmatpush1.msra.mxu0 %v568
      %620 = vmatprep.subr.mxu0 %v567
      %621 = vmatpush1.msra.mxu0 %v566
      %622 = vmatprep.subr.mxu0 %v565
      %623 = vmatpush1.msra.mxu0 %v564
      %624 = vmatprep.subr.mxu0 %v563
      %625 = vmatpush1.msra.mxu0 %v562
      %626 = vmatprep.subr.mxu0 %v561
      %627 = vmatpush1.msra.mxu0 %v560
      %628 = vmatprep.subr.mxu0 %v559
      %629 = vmatpush1.msra.mxu0 %v558
      %630 = vmatprep.subr.mxu0 %v557
      %631 = vmatpush1.msra.mxu0 %v556
      %632 = vmatprep.subr.mxu0 %v555
      %633 = vmatpush1.msra.mxu0 %v554
      %634 = vmatprep.subr.mxu0 %v553
      %635 = vmatpush1.msra.mxu0 %v552
      %636 = vmatprep.subr.mxu0 0.0
      %637 = vmatpush2.msra.mxu0 0.0
      %638 = vmatprep.subr.mxu0 0.0
      %639 = vmatpush2.msra.mxu0 0.0
      %640 = vmatprep.subr.mxu0 0.0
      %641 = vmatpush2.msra.mxu0 0.0
      %642 = vmatprep.subr.mxu0 0.0
      %643 = vmatpush2.msra.mxu0 0.0
      %644 = vmatprep.subr.mxu0 0.0
      %645 = vmatpush2.msra.mxu0 0.0
      %646 = vmatprep.subr.mxu0 0.0
      %647 = vmatpush2.msra.mxu0 0.0
      %648 = vmatprep.subr.mxu0 0.0
      %649 = vmatpush2.msra.mxu0 0.0
      %650 = vmatprep.subr.mxu0 0.0
      %651 = vmatpush2.msra.mxu0 0.0
      %652 = vmatprep.subr.mxu0 0.0
      %653 = vmatpush2.msra.mxu0 0.0
      %654 = vmatprep.subr.mxu0 0.0
      %655 = vmatpush2.msra.mxu0 0.0
      %656 = vmatprep.subr.mxu0 0.0
      %657 = vmatpush2.msra.mxu0 0.0
      %658 = vmatprep.subr.mxu0 0.0
      %659 = vmatpush2.msra.mxu0 0.0
      %660 = vmatprep.subr.mxu0 0.0
      %661 = vmatpush2.msra.mxu0 0.0
      %662 = vmatprep.subr.mxu0 0.0
      %663 = vmatpush2.msra.mxu0 0.0
      %664 = vmatprep.subr.mxu0 0.0
      %665 = vmatpush2.msra.mxu0 0.0
      %666 = vmatprep.subr.mxu0 0.0
      %667 = vmatpush2.msra.mxu0 0.0
      %668 = vmatprep.mubr.f32.mxu0 0.0
      %669 = vmatmul.mubr.f32.gmra.mxu0 %v592
      %v670 = vpop.f32.mrf.mxu0
      %v671 = vadd.f32 %v583, %v670
      %v672 = vpop.f32.mrf.mxu0
      %v673 = vadd.f32 %v583, %v672
      %674 = vmatprep.mubr.f32.mxu0 0.0
      %675 = vmatmul.mubr.f32.gmra.mxu0 %v595
      %v676 = vpop.f32.mrf.mxu0
      %v677 = vadd.f32 %v588, %v676
      %v678 = vpop.f32.mrf.mxu0
      %v679 = vadd.f32 %v588, %v678
      %680 = vdwg.mxu0
      %v681 = vmax.f32 %v671, 0.0
      %v682 = vmax.f32 %v673, 0.0
      %v683 = vmax.f32 %v677, 0.0
      %v684 = vmax.f32 %v679, 0.0
      %685 = vst [vmem:[%s206] sm:$0xff] %v681
      %686 = vst.msk [vmem:[%s206 + $0x8] sm:$0xff] %vm470, %v682
      %687 = vst [vmem:[%s206 + $0x10] sm:$0xff] %v683
      %688 = vst.msk [vmem:[%s206 + $0x18] sm:$0xff] %vm470, %v684
      %s689 = smul.u32 2, %s19
      %p690 = scmp.lt.s32.totalorder %s18, 1
      %s691 = scalar_select %p690, %s18, 1
      %p692 = scmp.lt.s32.totalorder %s689, 1
      %s693 = scalar_select %p692, %s689, 1
      %s694 = smul.addr %s691, 4
      %s695 = sadd.s32 %s693, %s694
      %s696 = smul.addr %s695, 8
      %s697 = scalar_lea.vmem %s3, %s696
      // Predicated region
      $region33: #{encoder_forward.4} parent=31 // pred_check
        %p698 = pneg %p116
      $region34: #{encoder_forward.4} parent=31 // pred_check_branch
        %700 = sbr.rel (%p698) target = $region36
      $region35: #{encoder_forward.4} parent=31 // pred_region
        %s701 = smul.u32 2, %s19
      $region36: #{encoder_forward.4} parent=31 // pred_fallthru
        _
    $region32: #{encoder_forward.4} parent=5 // pred_fallthru
      _
    %p702 = scmp.le.s32.totalorder 2, %s9
    // Predicated region
    $region37: #{encoder_forward.4} parent=5 // pred_check
      %p703 = pneg %p702
    $region38: #{encoder_forward.4} parent=5 // pred_check_branch
      %705 = sbr.rel (%p703) target = $region40
    $region39: #{encoder_forward.4} parent=5 // pred_region
      %s706 = ssub.s32 %s9, 2
      // Predicated region
      $region41: #{encoder_forward.4} parent=39 // pred_check
        %p707 = pneg %p122
      $region42: #{encoder_forward.4} parent=39 // pred_check_branch
        %709 = sbr.rel (%p707) target = $region44
      $region43: #{encoder_forward.4} parent=39 // pred_region
        %s710 = smul.u32 2, %s21
        %p711 = scmp.lt.s32.totalorder %s20, 1
        %s712 = scalar_select %p711, %s20, 1
        %p713 = scmp.lt.s32.totalorder %s710, 1
        %s714 = scalar_select %p713, %s710, 1
        %s715 = smul.addr %s712, 4
        %s716 = sadd.s32 %s714, %s715
        %s717 = smul.addr %s716, 8
        %s718 = scalar_lea.vmem %s3, %s717
      $region44: #{encoder_forward.4} parent=39 // pred_fallthru
        _
    $region40: #{encoder_forward.4} parent=5 // pred_fallthru
      _
  $region6: #{encoder_forward.4} parent=0 // loop_footer
    %s13 = sadd.s32 1, %s9
  $region7: #{encoder_forward.4} parent=0 // loop_footer_branch
    %8 = sbr.rel target = $region3
  $region8: #{encoder_forward.4} parent=0 // loop_exit
    _

// kernel: encoder_forward.5
$region0: #{encoder_forward.5}
  #allocation0 [shape = 'u32[]', space=smem, size = 0x4, offset = 0x4, fixed_abs, tag = 'smem constant byte address 0x4 - core index']
  #allocation1 [shape = 'u32[144,128]{1,0:T(1,128)}', space=vmem, size = 0x12000, scoped, tag = 'internal scratch']
  #allocation2 [shape = 'f32[400,128]{1,0:T(8,128)}', space=vmem, size = 0x32000, scoped, tag = 'scratch operand']
  %s0 = inlined_call_operand.vmem [shape: f32[2,1,16,196], index: 0, kind: input, shape index: {}]
  %s1 = inlined_call_operand.vmem [shape: f32[32,400], index: 1, kind: input, shape index: {}]
  %s2 = inlined_call_operand.vmem [shape: f32[32,1], index: 2, kind: input, shape index: {}]
  %s3 = inlined_call_operand.vmem [shape: bf16[2,32,128], index: 3, kind: output, shape index: {}]
  %s4 = sld [smem:[#allocation0]]
  $region45: #{encoder_forward.5} parent=0
    _
  %s6 = ssub.s32 1, %s4
  %s7 = scalar_select 0, %s6, %s4
  loop: start=0, step=1, limit=4
  $region2: #{encoder_forward.5} parent=0 // loop_pre_header
    _
  $region3: #{encoder_forward.5} parent=0 // loop_header
    %s9 = sphi 0, %s13
    %p10 = scmp.ge.s32.totalorder %s9, 4
    %s16 = sphi 0, %s28
    %s17 = sphi 0, %s24
    %s18 = sphi 0, %s16
    %s19 = sphi 0, %s17
    %s20 = sphi 0, %s18
    %s21 = sphi 0, %s19
    %s33 = sphi 0, %s35
    %s36 = sphi 0, %s33
    %s37 = sphi 0, %s36
    %s53 = sphi 0, %s37
    %s57 = sphi 0, %s57
    %s59 = sphi 0, %s57
    %s60 = sphi 0, %s59
    %s74 = sphi 0, %s60
    %s78 = sphi 0, %s78
    %s80 = sphi 0, %s78
    %s81 = sphi 0, %s80
    %s95 = sphi 0, %s81
    %s103 = sphi 0, %s105
    %s106 = sphi 0, %s103
    %s107 = sphi 0, %s106
    %s123 = sphi 0, %s107
  $region4: #{encoder_forward.5} parent=0 // loop_header_branch
    %12 = sbr.rel (%p10) target = $region8
  $region5: #{encoder_forward.5} parent=0 // loop_body
    %s14 = ssub.s32 %s9, 1
    %s15 = ssub.s32 %s9, 2
    %s22 = sadd.s32 1, %s17
    %p23 = scmp.ge.s32.totalorder %s22, 1
    %s24 = scalar_select %p23, 0, %s22
    %s25 = sadd.s32 1, %s16
    %s26 = scalar_select %p23, %s25, %s16
    %p27 = scmp.ge.s32.totalorder %s26, 2
    %s28 = scalar_select %p27, 0, %s26
    %s29 = ssub.s32 %s16, %s28
    %s30 = ssub.s32 %s17, %s24
    %s31 = sor.u32 %s29, %s30
    %p32 = scmp.eq.s32.totalorder %s31, 0
    %s34 = sadd.s32 %s33, 1
    %s35 = scalar_select %p32, %s33, %s34
    %p38 = pneg %p32
    %p39 = scmp.eq.s32.totalorder %s9, 1
    %p40 = por %p38, %p39
    %p41 = scmp.ne.s32.totalorder %s33, %s36
    %p42 = scmp.eq.s32.totalorder %s9, 0
    %p43 = por %p41, %p42
    %p44 = scmp.ne.s32.totalorder %s33, %s36
    %p45 = scmp.eq.s32.totalorder %s14, 1
    %p46 = por %p44, %p45
    %p47 = scmp.ne.s32.totalorder %s36, %s37
    %p48 = scmp.eq.s32.totalorder %s14, 0
    %p49 = por %p47, %p48
    %p50 = scmp.ne.s32.totalorder %s36, %s37
    %p51 = scmp.eq.s32.totalorder %s15, 1
    %p52 = por %p50, %p51
    %p54 = scmp.ne.s32.totalorder %s37, %s53
    %p55 = scmp.eq.s32.totalorder %s15, 0
    %p56 = por %p54, %p55
    %s58 = sadd.s32 %s57, 1
    %p61 = scmp.eq.s32.totalorder %s9, 1
    %p62 = scmp.ne.s32.totalorder %s57, %s59
    %p63 = scmp.eq.s32.totalorder %s9, 0
    %p64 = por %p62, %p63
    %p65 = scmp.ne.s32.totalorder %s57, %s59
    %p66 = scmp.eq.s32.totalorder %s14, 1
    %p67 = por %p65, %p66
    %p68 = scmp.ne.s32.totalorder %s59, %s60
    %p69 = scmp.eq.s32.totalorder %s14, 0
    %p70 = por %p68, %p69
    %p71 = scmp.ne.s32.totalorder %s59, %s60
    %p72 = scmp.eq.s32.totalorder %s15, 1
    %p73 = por %p71, %p72
    %p75 = scmp.ne.s32.totalorder %s60, %s74
    %p76 = scmp.eq.s32.totalorder %s15, 0
    %p77 = por %p75, %p76
    %s79 = sadd.s32 %s78, 1
    %p82 = scmp.eq.s32.totalorder %s9, 1
    %p83 = scmp.ne.s32.totalorder %s78, %s80
    %p84 = scmp.eq.s32.totalorder %s9, 0
    %p85 = por %p83, %p84
    %p86 = scmp.ne.s32.totalorder %s78, %s80
    %p87 = scmp.eq.s32.totalorder %s14, 1
    %p88 = por %p86, %p87
    %p89 = scmp.ne.s32.totalorder %s80, %s81
    %p90 = scmp.eq.s32.totalorder %s14, 0
    %p91 = por %p89, %p90
    %p92 = scmp.ne.s32.totalorder %s80, %s81
    %p93 = scmp.eq.s32.totalorder %s15, 1
    %p94 = por %p92, %p93
    %p96 = scmp.ne.s32.totalorder %s81, %s95
    %p97 = scmp.eq.s32.totalorder %s15, 0
    %p98 = por %p96, %p97
    %s99 = ssub.s32 %s16, %s28
    %s100 = ssub.s32 %s17, %s24
    %s101 = sor.u32 %s99, %s100
    %p102 = scmp.eq.s32.totalorder %s101, 0
    %s104 = sadd.s32 %s103, 1
    %s105 = scalar_select %p102, %s103, %s104
    %p108 = pneg %p102
    %p109 = scmp.eq.s32.totalorder %s9, 1
    %p110 = por %p108, %p109
    %p111 = scmp.ne.s32.totalorder %s103, %s106
    %p112 = scmp.eq.s32.totalorder %s9, 0
    %p113 = por %p111, %p112
    %p114 = scmp.ne.s32.totalorder %s103, %s106
    %p115 = scmp.eq.s32.totalorder %s14, 1
    %p116 = por %p114, %p115
    %p117 = scmp.ne.s32.totalorder %s106, %s107
    %p118 = scmp.eq.s32.totalorder %s14, 0
    %p119 = por %p117, %p118
    %p120 = scmp.ne.s32.totalorder %s106, %s107
    %p121 = scmp.eq.s32.totalorder %s15, 1
    %p122 = por %p120, %p121
    %p124 = scmp.ne.s32.totalorder %s107, %s123
    %p125 = scmp.eq.s32.totalorder %s15, 0
    %p126 = por %p124, %p125
    %p127 = scmp.le.s32.totalorder 1, %s9
    %p128 = scmp.lt.s32.totalorder %s9, 3
    %p129 = pnand %p127, %p128
    %p130 = pneg %p129
    // Predicated region
    $region9: #{encoder_forward.5} parent=5 // pred_check
      _
    $region10: #{encoder_forward.5} parent=5 // pred_check_branch
      %132 = sbr.rel (%p129) target = $region12
    $region11: #{encoder_forward.5} parent=5 // pred_region
      %s133 = ssub.s32 %s9, 1
      // Predicated region
      $region13: #{encoder_forward.5} parent=11 // pred_check
        %p134 = pneg %p70
      $region14: #{encoder_forward.5} parent=11 // pred_check_branch
        %136 = sbr.rel (%p134) target = $region16
      $region15: #{encoder_forward.5} parent=11 // pred_region
        _
      $region16: #{encoder_forward.5} parent=11 // pred_fallthru
        _
      // Predicated region
      $region17: #{encoder_forward.5} parent=11 // pred_check
        %p137 = pneg %p91
      $region18: #{encoder_forward.5} parent=11 // pred_check_branch
        %139 = sbr.rel (%p137) target = $region20
      $region19: #{encoder_forward.5} parent=11 // pred_region
        _
      $region20: #{encoder_forward.5} parent=11 // pred_fallthru
        _
    $region12: #{encoder_forward.5} parent=5 // pred_fallthru
      _
    %p140 = scmp.lt.s32.totalorder %s9, 2
    // Predicated region
    $region21: #{encoder_forward.5} parent=5 // pred_check
      %p141 = pneg %p140
    $region22: #{encoder_forward.5} parent=5 // pred_check_branch
      %143 = sbr.rel (%p141) target = $region24
    $region23: #{encoder_forward.5} parent=5 // pred_region
      // Predicated region
      $region25: #{encoder_forward.5} parent=23 // pred_check
        %p144 = pneg %p43
      $region26: #{encoder_forward.5} parent=23 // pred_check_branch
        %146 = sbr.rel (%p144) target = $region28
      $region27: #{encoder_forward.5} parent=23 // pred_region
        %p147 = scmp.lt.s32.totalorder %s16, 1
        %s148 = scalar_select %p147, %s16, 1
        %p149 = scmp.lt.s32.totalorder %s17, 0
        %s150 = scalar_select %p149, %s17, 0
        %s151 = smul.addr %s150, 4
        %s152 = smul.addr %s148, 4
        %s153 = sadd.s32 %s151, %s152
        %s154 = smul.addr %s153, 8
        %s155 = scalar_lea.vmem %s0, %s154
      $region28: #{encoder_forward.5} parent=23 // pred_fallthru
        _
    $region24: #{encoder_forward.5} parent=5 // pred_fallthru
      _
    %p156 = scmp.le.s32.totalorder 1, %s9
    %p157 = scmp.lt.s32.totalorder %s9, 3
    %p158 = pnand %p156, %p157
    %p159 = pneg %p158
    // Predicated region
    $region29: #{encoder_forward.5} parent=5 // pred_check
      _
    $region30: #{encoder_forward.5} parent=5 // pred_check_branch
      %161 = sbr.rel (%p158) target = $region32
    $region31: #{encoder_forward.5} parent=5 // pred_region
      %s162 = ssub.s32 %s9, 1
      %p163 = scmp.lt.s32.totalorder %s18, 1
      %s164 = scalar_select %p163, %s18, 1
      %p165 = scmp.lt.s32.totalorder %s19, 0
      %s166 = scalar_select %p165, %s19, 0
      %s167 = smul.addr %s166, 4
      %s168 = smul.addr %s164, 4
      %s169 = sadd.s32 %s167, %s168
      %s170 = smul.addr %s169, 8
      %s171 = scalar_lea.vmem %s0, %s170
      %p172 = pneg %p49
      %p173 = pneg %p46
      %p174 = pneg %p70
      %p175 = pneg %p67
      %p176 = pneg %p91
      %p177 = pneg %p88
      %p178 = pneg %p119
      %p179 = pneg %p116
      %p180 = scmp.lt.s32.totalorder %s18, 1
      %s181 = scalar_select %p180, %s18, 1
      %p182 = scmp.lt.s32.totalorder %s19, 0
      %s183 = scalar_select %p182, %s19, 0
      %s184 = smul.addr %s181, 4
      %s185 = sadd.s32 %s183, %s184
      %s186 = smul.addr %s185, 4
      %s187 = scalar_lea.vmem %s3, %s186
      %p188 = scmp.lt.s32.totalorder %s18, 1
      %s189 = scalar_select %p188, %s18, 1
      %p190 = scmp.lt.s32.totalorder %s19, 0
      %s191 = scalar_select %p190, %s19, 0
      %s192 = smul.addr %s191, 4
      %s193 = smul.addr %s189, 4
      %s194 = sadd.s32 %s192, %s193
      %s195 = smul.addr %s194, 8
      %s196 = scalar_lea.vmem %s0, %s195
      %p197 = scmp.lt.s32.totalorder %s18, 1
      %s198 = scalar_select %p197, %s18, 1
      %p199 = scmp.lt.s32.totalorder %s19, 0
      %s200 = scalar_select %p199, %s19, 0
      %s201 = smul.addr %s198, 4
      %s202 = sadd.s32 %s200, %s201
      %s203 = smul.addr %s202, 4
      %s204 = scalar_lea.vmem %s3, %s203
      %v205 = vld [vmem:[%s196] sm:$0xff]
      %v206 = vld [vmem:[%s196 + $0x10] sm:$0xff]
      %207 = vst [vmem:[#allocation2] sm:$0xff] %v205
      %208 = vst [vmem:[#allocation2 + $0x8] sm:$0xff] %v206
      %v209 = vld [vmem:[%s196] sm:$0xff]
      %v210 = vld [vmem:[%s196 + $0x8] sm:$0xff]
      %v211 = vld [vmem:[%s196 + $0x10] sm:$0xff]
      %v212 = vld [vmem:[%s196 + $0x18] sm:$0xff]
      %217 = vrot.lane.b32.xlu0 %v209, 127
      %v218 = vpop.permute.xlu0 %217
      %219 = vrot.lane.b32.xlu0 %v210, 127
      %v220 = vpop.permute.xlu0 %219
      %221 = vrot.lane.b32.xlu0 %v211, 127
      %v222 = vpop.permute.xlu0 %221
      %223 = vrot.lane.b32.xlu0 %v212, 127
      %v224 = vpop.permute.xlu0 %223
      %vm225 = vcmask 1039360
      %v226 = vsel %vm225, %v218, %v220
      %v227 = vsel %vm225, %v222, %v224
      %230 = vst [vmem:[#allocation2 + $0x10] sm:$0xff] %v226
      %231 = vst [vmem:[#allocation2 + $0x18] sm:$0xff] %v227
      %v232 = vld [vmem:[%s196] sm:$0xff]
      %v233 = vld [vmem:[%s196 + $0x8] sm:$0xff]
      %v234 = vld [vmem:[%s196 + $0x10] sm:$0xff]
      %v235 = vld [vmem:[%s196 + $0x18] sm:$0xff]
      %240 = vrot.lane.b32.xlu0 %v232, 126
      %v241 = vpop.permute.xlu0 %240
      %242 = vrot.lane.b32.xlu0 %v233, 126
      %v243 = vpop.permute.xlu0 %242
      %244 = vrot.lane.b32.xlu0 %v234, 126
      %v245 = vpop.permute.xlu0 %244
      %246 = vrot.lane.b32.xlu0 %v235, 126
      %v247 = vpop.permute.xlu0 %246
      %vm248 = vcmask 1031168
      %v249 = vsel %vm248, %v241, %v243
      %v250 = vsel %vm248, %v245, %v247
      %253 = vst [vmem:[#allocation2 + $0x20] sm:$0xff] %v249
      %254 = vst [vmem:[#allocation2 + $0x28] sm:$0xff] %v250
      %v255 = vld [vmem:[%s196] sm:$0xff]
      %v256 = vld [vmem:[%s196 + $0x8] sm:$0xff]
      %v257 = vld [vmem:[%s196 + $0x10] sm:$0xff]
      %v258 = vld [vmem:[%s196 + $0x18] sm:$0xff]
      %263 = vrot.lane.b32.xlu0 %v255, 125
      %v264 = vpop.permute.xlu0 %263
      %265 = vrot.lane.b32.xlu0 %v256, 125
      %v266 = vpop.permute.xlu0 %265
      %267 = vrot.lane.b32.xlu0 %v257, 125
      %v268 = vpop.permute.xlu0 %267
      %269 = vrot.lane.b32.xlu0 %v258, 125
      %v270 = vpop.permute.xlu0 %269
      %vm271 = vcmask 1022976
      %v272 = vsel %vm271, %v264, %v266
      %v273 = vsel %vm271, %v268, %v270
      %276 = vst [vmem:[#allocation2 + $0x30] sm:$0xff] %v272
      %277 = vst [vmem:[#allocation2 + $0x38] sm:$0xff] %v273
      %v278 = vld [vmem:[%s196] sm:$0xff]
      %v279 = vld [vmem:[%s196 + $0x8] sm:$0xff]
      %v280 = vld [vmem:[%s196 + $0x10] sm:$0xff]
      %v281 = vld [vmem:[%s196 + $0x18] sm:$0xff]
      %286 = vrot.lane.b32.xlu0 %v278, 124
      %v287 = vpop.permute.xlu0 %286
      %288 = vrot.lane.b32.xlu0 %v279, 124
      %v289 = vpop.permute.xlu0 %288
      %290 = vrot.lane.b32.xlu0 %v280, 124
      %v291 = vpop.permute.xlu0 %290
      %292 = vrot.lane.b32.xlu0 %v281, 124
      %v293 = vpop.permute.xlu0 %292
      %vm294 = vcmask 1014784
      %v295 = vsel %vm294, %v287, %v289
      %v296 = vsel %vm294, %v291, %v293
      %299 = vst [vmem:[#allocation2 + $0x40] sm:$0xff] %v295
      %300 = vst [vmem:[#allocation2 + $0x48] sm:$0xff] %v296
      %v301 = vld [vmem:[%s196] sm:$0xff]
      %v302 = vld [vmem:[%s196 + $0x8] sm:$0xff]
      %v303 = vld [vmem:[%s196 + $0x10] sm:$0xff]
      %v304 = vld [vmem:[%s196 + $0x18] sm:$0xff]
      %309 = vrot.lane.b32.xlu0 %v301, 112
      %v310 = vpop.permute.xlu0 %309
      %311 = vrot.lane.b32.xlu0 %v302, 112
      %v312 = vpop.permute.xlu0 %311
      %313 = vrot.lane.b32.xlu0 %v303, 112
      %v314 = vpop.permute.xlu0 %313
      %315 = vrot.lane.b32.xlu0 %v304, 112
      %v316 = vpop.permute.xlu0 %315
      %vm317 = vcmask 916480
      %v318 = vsel %vm317, %v310, %v312
      %v319 = vsel %vm317, %v314, %v316
      %322 = vst [vmem:[#allocation2 + $0x50] sm:$0xff] %v318
      %323 = vst [vmem:[#allocation2 + $0x58] sm:$0xff] %v319
      %v324 = vld [vmem:[%s196] sm:$0xff]
      %v325 = vld [vmem:[%s196 + $0x8] sm:$0xff]
      %v326 = vld [vmem:[%s196 + $0x10] sm:$0xff]
      %v327 = vld [vmem:[%s196 + $0x18] sm:$0xff]
      %332 = vrot.lane.b32.xlu0 %v324, 111
      %v333 = vpop.permute.xlu0 %332
      %334 = vrot.lane.b32.xlu0 %v325, 111
      %v335 = vpop.permute.xlu0 %334
      %336 = vrot.lane.b32.xlu0 %v326, 111
      %v337 = vpop.permute.xlu0 %336
      %338 = vrot.lane.b32.xlu0 %v327, 111
      %v339 = vpop.permute.xlu0 %338
      %vm340 = vcmask 908288
      %v341 = vsel %vm340, %v333, %v335
      %v342 = vsel %vm340, %v337, %v339
      %345 = vst [vmem:[#allocation2 + $0x60] sm:$0xff] %v341
      %346 = vst [vmem:[#allocation2 + $0x68] sm:$0xff] %v342
      %v347 = vld [vmem:[%s196] sm:$0xff]
      %v348 = vld [vmem:[%s196 + $0x8] sm:$0xff]
      %v349 = vld [vmem:[%s196 + $0x10] sm:$0xff]
      %v350 = vld [vmem:[%s196 + $0x18] sm:$0xff]
      %355 = vrot.lane.b32.xlu0 %v347, 110
      %v356 = vpop.permute.xlu0 %355
      %357 = vrot.lane.b32.xlu0 %v348, 110
      %v358 = vpop.permute.xlu0 %357
      %359 = vrot.lane.b32.xlu0 %v349, 110
      %v360 = vpop.permute.xlu0 %359
      %361 = vrot.lane.b32.xlu0 %v350, 110
      %v362 = vpop.permute.xlu0 %361
      %vm363 = vcmask 900096
      %v364 = vsel %vm363, %v356, %v358
      %v365 = vsel %vm363, %v360, %v362
      %368 = vst [vmem:[#allocation2 + $0x70] sm:$0xff] %v364
      %369 = vst [vmem:[#allocation2 + $0x78] sm:$0xff] %v365
      %v370 = vld [vmem:[%s196] sm:$0xff]
      %v371 = vld [vmem:[%s196 + $0x8] sm:$0xff]
      %v372 = vld [vmem:[%s196 + $0x10] sm:$0xff]
      %v373 = vld [vmem:[%s196 + $0x18] sm:$0xff]
      %378 = vrot.lane.b32.xlu0 %v370, 109
      %v379 = vpop.permute.xlu0 %378
      %380 = vrot.lane.b32.xlu0 %v371, 109
      %v381 = vpop.permute.xlu0 %380
      %382 = vrot.lane.b32.xlu0 %v372, 109
      %v383 = vpop.permute.xlu0 %382
      %384 = vrot.lane.b32.xlu0 %v373, 109
      %v385 = vpop.permute.xlu0 %384
      %vm386 = vcmask 891904
      %v387 = vsel %vm386, %v379, %v381
      %v388 = vsel %vm386, %v383, %v385
      %391 = vst [vmem:[#allocation2 + $0x80] sm:$0xff] %v387
      %392 = vst [vmem:[#allocation2 + $0x88] sm:$0xff] %v388
      %v393 = vld [vmem:[%s196] sm:$0xff]
      %v394 = vld [vmem:[%s196 + $0x8] sm:$0xff]
      %v395 = vld [vmem:[%s196 + $0x10] sm:$0xff]
      %v396 = vld [vmem:[%s196 + $0x18] sm:$0xff]
      %401 = vrot.lane.b32.xlu0 %v393, 108
      %v402 = vpop.permute.xlu0 %401
      %403 = vrot.lane.b32.xlu0 %v394, 108
      %v404 = vpop.permute.xlu0 %403
      %405 = vrot.lane.b32.xlu0 %v395, 108
      %v406 = vpop.permute.xlu0 %405
      %407 = vrot.lane.b32.xlu0 %v396, 108
      %v408 = vpop.permute.xlu0 %407
      %vm409 = vcmask 883712
      %v410 = vsel %vm409, %v402, %v404
      %v411 = vsel %vm409, %v406, %v408
      %414 = vst [vmem:[#allocation2 + $0x90] sm:$0xff] %v410
      %415 = vst [vmem:[#allocation2 + $0x98] sm:$0xff] %v411
      %v416 = vld [vmem:[%s196] sm:$0xff]
      %v417 = vld [vmem:[%s196 + $0x8] sm:$0xff]
      %v418 = vld [vmem:[%s196 + $0x10] sm:$0xff]
      %v419 = vld [vmem:[%s196 + $0x18] sm:$0xff]
      %424 = vrot.lane.b32.xlu0 %v416, 96
      %v425 = vpop.permute.xlu0 %424
      %426 = vrot.lane.b32.xlu0 %v417, 96
      %v427 = vpop.permute.xlu0 %426
      %428 = vrot.lane.b32.xlu0 %v418, 96
      %v429 = vpop.permute.xlu0 %428
      %430 = vrot.lane.b32.xlu0 %v419, 96
      %v431 = vpop.permute.xlu0 %430
      %vm432 = vcmask 785408
      %v433 = vsel %vm432, %v425, %v427
      %v434 = vsel %vm432, %v429, %v431
      %437 = vst [vmem:[#allocation2 + $0xa0] sm:$0xff] %v433
      %438 = vst [vmem:[#allocation2 + $0xa8] sm:$0xff] %v434
      %v439 = vld [vmem:[%s196] sm:$0xff]
      %v440 = vld [vmem:[%s196 + $0x8] sm:$0xff]
      %v441 = vld [vmem:[%s196 + $0x10] sm:$0xff]
      %v442 = vld [vmem:[%s196 + $0x18] sm:$0xff]
      %447 = vrot.lane.b32.xlu0 %v439, 95
      %v448 = vpop.permute.xlu0 %447
      %449 = vrot.lane.b32.xlu0 %v440, 95
      %v450 = vpop.permute.xlu0 %449
      %451 = vrot.lane.b32.xlu0 %v441, 95
      %v452 = vpop.permute.xlu0 %451
      %453 = vrot.lane.b32.xlu0 %v442, 95
      %v454 = vpop.permute.xlu0 %453
      %vm455 = vcmask 777216
      %v456 = vsel %vm455, %v448, %v450
      %v457 = vsel %vm455, %v452, %v454
      %460 = vst [vmem:[#allocation2 + $0xb0] sm:$0xff] %v456
      %461 = vst [vmem:[#allocation2 + $0xb8] sm:$0xff] %v457
      %v462 = vld [vmem:[%s196] sm:$0xff]
      %v463 = vld [vmem:[%s196 + $0x8] sm:$0xff]
      %v464 = vld [vmem:[%s196 + $0x10] sm:$0xff]
      %v465 = vld [vmem:[%s196 + $0x18] sm:$0xff]
      %470 = vrot.lane.b32.xlu0 %v462, 94
      %v471 = vpop.permute.xlu0 %470
      %472 = vrot.lane.b32.xlu0 %v463, 94
      %v473 = vpop.permute.xlu0 %472
      %474 = vrot.lane.b32.xlu0 %v464, 94
      %v475 = vpop.permute.xlu0 %474
      %476 = vrot.lane.b32.xlu0 %v465, 94
      %v477 = vpop.permute.xlu0 %476
      %vm478 = vcmask 769024
      %v479 = vsel %vm478, %v471, %v473
      %v480 = vsel %vm478, %v475, %v477
      %483 = vst [vmem:[#allocation2 + $0xc0] sm:$0xff] %v479
      %484 = vst [vmem:[#allocation2 + $0xc8] sm:$0xff] %v480
      %v485 = vld [vmem:[%s196] sm:$0xff]
      %v486 = vld [vmem:[%s196 + $0x8] sm:$0xff]
      %v487 = vld [vmem:[%s196 + $0x10] sm:$0xff]
      %v488 = vld [vmem:[%s196 + $0x18] sm:$0xff]
      %493 = vrot.lane.b32.xlu0 %v485, 93
      %v494 = vpop.permute.xlu0 %493
      %495 = vrot.lane.b32.xlu0 %v486, 93
      %v496 = vpop.permute.xlu0 %495
      %497 = vrot.lane.b32.xlu0 %v487, 93
      %v498 = vpop.permute.xlu0 %497
      %499 = vrot.lane.b32.xlu0 %v488, 93
      %v500 = vpop.permute.xlu0 %499
      %vm501 = vcmask 760832
      %v502 = vsel %vm501, %v494, %v496
      %v503 = vsel %vm501, %v498, %v500
      %506 = vst [vmem:[#allocation2 + $0xd0] sm:$0xff] %v502
      %507 = vst [vmem:[#allocation2 + $0xd8] sm:$0xff] %v503
      %v508 = vld [vmem:[%s196] sm:$0xff]
      %v509 = vld [vmem:[%s196 + $0x8] sm:$0xff]
      %v510 = vld [vmem:[%s196 + $0x10] sm:$0xff]
      %v511 = vld [vmem:[%s196 + $0x18] sm:$0xff]
      %516 = vrot.lane.b32.xlu0 %v508, 92
      %v517 = vpop.permute.xlu0 %516
      %518 = vrot.lane.b32.xlu0 %v509, 92
      %v519 = vpop.permute.xlu0 %518
      %520 = vrot.lane.b32.xlu0 %v510, 92
      %v521 = vpop.permute.xlu0 %520
      %522 = vrot.lane.b32.xlu0 %v511, 92
      %v523 = vpop.permute.xlu0 %522
      %vm524 = vcmask 752640
      %v525 = vsel %vm524, %v517, %v519
      %v526 = vsel %vm524, %v521, %v523
      %529 = vst [vmem:[#allocation2 + $0xe0] sm:$0xff] %v525
      %530 = vst [vmem:[#allocation2 + $0xe8] sm:$0xff] %v526
      %v531 = vld [vmem:[%s196] sm:$0xff]
      %v532 = vld [vmem:[%s196 + $0x8] sm:$0xff]
      %v533 = vld [vmem:[%s196 + $0x10] sm:$0xff]
      %v534 = vld [vmem:[%s196 + $0x18] sm:$0xff]
      %539 = vrot.lane.b32.xlu0 %v531, 80
      %v540 = vpop.permute.xlu0 %539
      %541 = vrot.lane.b32.xlu0 %v532, 80
      %v542 = vpop.permute.xlu0 %541
      %543 = vrot.lane.b32.xlu0 %v533, 80
      %v544 = vpop.permute.xlu0 %543
      %545 = vrot.lane.b32.xlu0 %v534, 80
      %v546 = vpop.permute.xlu0 %545
      %vm547 = vcmask 654336
      %v548 = vsel %vm547, %v540, %v542
      %v549 = vsel %vm547, %v544, %v546
      %552 = vst [vmem:[#allocation2 + $0xf0] sm:$0xff] %v548
      %553 = vst [vmem:[#allocation2 + $0xf8] sm:$0xff] %v549
      %v554 = vld [vmem:[%s196] sm:$0xff]
      %v555 = vld [vmem:[%s196 + $0x8] sm:$0xff]
      %v556 = vld [vmem:[%s196 + $0x10] sm:$0xff]
      %v557 = vld [vmem:[%s196 + $0x18] sm:$0xff]
      %562 = vrot.lane.b32.xlu0 %v554, 79
      %v563 = vpop.permute.xlu0 %562
      %564 = vrot.lane.b32.xlu0 %v555, 79
      %v565 = vpop.permute.xlu0 %564
      %566 = vrot.lane.b32.xlu0 %v556, 79
      %v567 = vpop.permute.xlu0 %566
      %568 = vrot.lane.b32.xlu0 %v557, 79
      %v569 = vpop.permute.xlu0 %568
      %vm570 = vcmask 646144
      %v571 = vsel %vm570, %v563, %v565
      %v572 = vsel %vm570, %v567, %v569
      %575 = vst [vmem:[#allocation2 + $0x100] sm:$0xff] %v571
      %576 = vst [vmem:[#allocation2 + $0x108] sm:$0xff] %v572
      %v577 = vld [vmem:[%s196] sm:$0xff]
      %v578 = vld [vmem:[%s196 + $0x8] sm:$0xff]
      %v579 = vld [vmem:[%s196 + $0x10] sm:$0xff]
      %v580 = vld [vmem:[%s196 + $0x18] sm:$0xff]
      %585 = vrot.lane.b32.xlu0 %v577, 78
      %v586 = vpop.permute.xlu0 %585
      %587 = vrot.lane.b32.xlu0 %v578, 78
      %v588 = vpop.permute.xlu0 %587
      %589 = vrot.lane.b32.xlu0 %v579, 78
      %v590 = vpop.permute.xlu0 %589
      %591 = vrot.lane.b32.xlu0 %v580, 78
      %v592 = vpop.permute.xlu0 %591
      %vm593 = vcmask 637952
      %v594 = vsel %vm593, %v586, %v588
      %v595 = vsel %vm593, %v590, %v592
      %598 = vst [vmem:[#allocation2 + $0x110] sm:$0xff] %v594
      %599 = vst [vmem:[#allocation2 + $0x118] sm:$0xff] %v595
      %v600 = vld [vmem:[%s196] sm:$0xff]
      %v601 = vld [vmem:[%s196 + $0x8] sm:$0xff]
      %v602 = vld [vmem:[%s196 + $0x10] sm:$0xff]
      %v603 = vld [vmem:[%s196 + $0x18] sm:$0xff]
      %608 = vrot.lane.b32.xlu0 %v600, 77
      %v609 = vpop.permute.xlu0 %608
      %610 = vrot.lane.b32.xlu0 %v601, 77
      %v611 = vpop.permute.xlu0 %610
      %612 = vrot.lane.b32.xlu0 %v602, 77
      %v613 = vpop.permute.xlu0 %612
      %614 = vrot.lane.b32.xlu0 %v603, 77
      %v615 = vpop.permute.xlu0 %614
      %vm616 = vcmask 629760
      %v617 = vsel %vm616, %v609, %v611
      %v618 = vsel %vm616, %v613, %v615
      %621 = vst [vmem:[#allocation2 + $0x120] sm:$0xff] %v617
      %622 = vst [vmem:[#allocation2 + $0x128] sm:$0xff] %v618
      %v623 = vld [vmem:[%s196] sm:$0xff]
      %v624 = vld [vmem:[%s196 + $0x8] sm:$0xff]
      %v625 = vld [vmem:[%s196 + $0x10] sm:$0xff]
      %v626 = vld [vmem:[%s196 + $0x18] sm:$0xff]
      %631 = vrot.lane.b32.xlu0 %v623, 76
      %v632 = vpop.permute.xlu0 %631
      %633 = vrot.lane.b32.xlu0 %v624, 76
      %v634 = vpop.permute.xlu0 %633
      %635 = vrot.lane.b32.xlu0 %v625, 76
      %v636 = vpop.permute.xlu0 %635
      %637 = vrot.lane.b32.xlu0 %v626, 76
      %v638 = vpop.permute.xlu0 %637
      %vm639 = vcmask 621568
      %v640 = vsel %vm639, %v632, %v634
      %v641 = vsel %vm639, %v636, %v638
      %644 = vst [vmem:[#allocation2 + $0x130] sm:$0xff] %v640
      %645 = vst [vmem:[#allocation2 + $0x138] sm:$0xff] %v641
      %v646 = vld [vmem:[%s196] sm:$0xff]
      %v647 = vld [vmem:[%s196 + $0x8] sm:$0xff]
      %v648 = vld [vmem:[%s196 + $0x10] sm:$0xff]
      %v649 = vld [vmem:[%s196 + $0x18] sm:$0xff]
      %654 = vrot.lane.b32.xlu0 %v646, 64
      %v655 = vpop.permute.xlu0 %654
      %656 = vrot.lane.b32.xlu0 %v647, 64
      %v657 = vpop.permute.xlu0 %656
      %658 = vrot.lane.b32.xlu0 %v648, 64
      %v659 = vpop.permute.xlu0 %658
      %660 = vrot.lane.b32.xlu0 %v649, 64
      %v661 = vpop.permute.xlu0 %660
      %vm662 = vcmask 523264
      %v663 = vsel %vm662, %v655, %v657
      %v664 = vsel %vm662, %v659, %v661
      %667 = vst [vmem:[#allocation2 + $0x140] sm:$0xff] %v663
      %668 = vst [vmem:[#allocation2 + $0x148] sm:$0xff] %v664
      %v669 = vld [vmem:[%s196] sm:$0xff]
      %v670 = vld [vmem:[%s196 + $0x8] sm:$0xff]
      %v671 = vld [vmem:[%s196 + $0x10] sm:$0xff]
      %v672 = vld [vmem:[%s196 + $0x18] sm:$0xff]
      %677 = vrot.lane.b32.xlu0 %v669, 63
      %v678 = vpop.permute.xlu0 %677
      %679 = vrot.lane.b32.xlu0 %v670, 63
      %v680 = vpop.permute.xlu0 %679
      %681 = vrot.lane.b32.xlu0 %v671, 63
      %v682 = vpop.permute.xlu0 %681
      %683 = vrot.lane.b32.xlu0 %v672, 63
      %v684 = vpop.permute.xlu0 %683
      %vm685 = vcmask 515072
      %v686 = vsel %vm685, %v678, %v680
      %v687 = vsel %vm685, %v682, %v684
      %690 = vst [vmem:[#allocation2 + $0x150] sm:$0xff] %v686
      %691 = vst [vmem:[#allocation2 + $0x158] sm:$0xff] %v687
      %v692 = vld [vmem:[%s196] sm:$0xff]
      %v693 = vld [vmem:[%s196 + $0x8] sm:$0xff]
      %v694 = vld [vmem:[%s196 + $0x10] sm:$0xff]
      %v695 = vld [vmem:[%s196 + $0x18] sm:$0xff]
      %700 = vrot.lane.b32.xlu0 %v692, 62
      %v701 = vpop.permute.xlu0 %700
      %702 = vrot.lane.b32.xlu0 %v693, 62
      %v703 = vpop.permute.xlu0 %702
      %704 = vrot.lane.b32.xlu0 %v694, 62
      %v705 = vpop.permute.xlu0 %704
      %706 = vrot.lane.b32.xlu0 %v695, 62
      %v707 = vpop.permute.xlu0 %706
      %vm708 = vcmask 506880
      %v709 = vsel %vm708, %v701, %v703
      %v710 = vsel %vm708, %v705, %v707
      %713 = vst [vmem:[#allocation2 + $0x160] sm:$0xff] %v709
      %714 = vst [vmem:[#allocation2 + $0x168] sm:$0xff] %v710
      %v715 = vld [vmem:[%s196] sm:$0xff]
      %v716 = vld [vmem:[%s196 + $0x8] sm:$0xff]
      %v717 = vld [vmem:[%s196 + $0x10] sm:$0xff]
      %v718 = vld [vmem:[%s196 + $0x18] sm:$0xff]
      %723 = vrot.lane.b32.xlu0 %v715, 61
      %v724 = vpop.permute.xlu0 %723
      %725 = vrot.lane.b32.xlu0 %v716, 61
      %v726 = vpop.permute.xlu0 %725
      %727 = vrot.lane.b32.xlu0 %v717, 61
      %v728 = vpop.permute.xlu0 %727
      %729 = vrot.lane.b32.xlu0 %v718, 61
      %v730 = vpop.permute.xlu0 %729
      %vm731 = vcmask 498688
      %v732 = vsel %vm731, %v724, %v726
      %v733 = vsel %vm731, %v728, %v730
      %736 = vst [vmem:[#allocation2 + $0x170] sm:$0xff] %v732
      %737 = vst [vmem:[#allocation2 + $0x178] sm:$0xff] %v733
      %v738 = vld [vmem:[%s196] sm:$0xff]
      %v739 = vld [vmem:[%s196 + $0x8] sm:$0xff]
      %v740 = vld [vmem:[%s196 + $0x10] sm:$0xff]
      %v741 = vld [vmem:[%s196 + $0x18] sm:$0xff]
      %746 = vrot.lane.b32.xlu0 %v738, 60
      %v747 = vpop.permute.xlu0 %746
      %748 = vrot.lane.b32.xlu0 %v739, 60
      %v749 = vpop.permute.xlu0 %748
      %750 = vrot.lane.b32.xlu0 %v740, 60
      %v751 = vpop.permute.xlu0 %750
      %752 = vrot.lane.b32.xlu0 %v741, 60
      %v753 = vpop.permute.xlu0 %752
      %vm754 = vcmask 490496
      %v755 = vsel %vm754, %v747, %v749
      %v756 = vsel %vm754, %v751, %v753
      %759 = vst [vmem:[#allocation2 + $0x180] sm:$0xff] %v755
      %760 = vst [vmem:[#allocation2 + $0x188] sm:$0xff] %v756
      %v761 = vld [vmem:[%s1] sm:$0xff]
      %v762 = vld [vmem:[%s1 + $0x8] sm:$0xff]
      %v763 = vld [vmem:[%s1 + $0x10] sm:$0xff]
      %v764 = vld [vmem:[%s1 + $0x18] sm:$0xff]
      %v765 = vld [vmem:[%s1 + $0x20] sm:$0xff]
      %v766 = vld [vmem:[%s1 + $0x28] sm:$0xff]
      %v767 = vld [vmem:[%s1 + $0x30] sm:$0xff]
      %v768 = vld [vmem:[%s1 + $0x38] sm:$0xff]
      %v769 = vld [vmem:[%s1 + $0x40] sm:$0xff]
      %v770 = vld [vmem:[%s1 + $0x48] sm:$0xff]
      %v771 = vld [vmem:[%s1 + $0x50] sm:$0xff]
      %v772 = vld [vmem:[%s1 + $0x58] sm:$0xff]
      %v773 = vld [vmem:[%s1 + $0x60] sm:$0xff]
      %v774 = vld [vmem:[%s1 + $0x68] sm:$0xff]
      %v775 = vld [vmem:[%s1 + $0x70] sm:$0xff]
      %v776 = vld [vmem:[%s1 + $0x78] sm:$0xff]
      %v777 = vld [vmem:[#allocation2] sm:$0xff]
      %v778 = vld [vmem:[#allocation2 + $0x8] sm:$0xff]
      %v779 = vld [vmem:[#allocation2 + $0x10] sm:$0xff]
      %v780 = vld [vmem:[#allocation2 + $0x18] sm:$0xff]
      %v781 = vld [vmem:[#allocation2 + $0x20] sm:$0xff]
      %v782 = vld [vmem:[#allocation2 + $0x28] sm:$0xff]
      %v783 = vld [vmem:[#allocation2 + $0x30] sm:$0xff]
      %v784 = vld [vmem:[#allocation2 + $0x38] sm:$0xff]
      %v785 = vld [vmem:[#allocation2 + $0x40] sm:$0xff]
      %v786 = vld [vmem:[#allocation2 + $0x48] sm:$0xff]
      %v787 = vld [vmem:[#allocation2 + $0x50] sm:$0xff]
      %v788 = vld [vmem:[#allocation2 + $0x58] sm:$0xff]
      %v789 = vld [vmem:[#allocation2 + $0x60] sm:$0xff]
      %v790 = vld [vmem:[#allocation2 + $0x68] sm:$0xff]
      %v791 = vld [vmem:[#allocation2 + $0x70] sm:$0xff]
      %v792 = vld [vmem:[#allocation2 + $0x78] sm:$0xff]
      %v793 = vld [vmem:[#allocation2 + $0x80] sm:$0xff]
      %v794 = vld [vmem:[#allocation2 + $0x88] sm:$0xff]
      %v795 = vld [vmem:[#allocation2 + $0x90] sm:$0xff]
      %v796 = vld [vmem:[#allocation2 + $0x98] sm:$0xff]
      %v797 = vld [vmem:[#allocation2 + $0xa0] sm:$0xff]
      %v798 = vld [vmem:[#allocation2 + $0xa8] sm:$0xff]
      %v799 = vld [vmem:[#allocation2 + $0xb0] sm:$0xff]
      %v800 = vld [vmem:[#allocation2 + $0xb8] sm:$0xff]
      %v801 = vld [vmem:[#allocation2 + $0xc0] sm:$0xff]
      %v802 = vld [vmem:[#allocation2 + $0xc8] sm:$0xff]
      %v803 = vld [vmem:[#allocation2 + $0xd0] sm:$0xff]
      %v804 = vld [vmem:[#allocation2 + $0xd8] sm:$0xff]
      %v805 = vld [vmem:[#allocation2 + $0xe0] sm:$0xff]
      %v806 = vld [vmem:[#allocation2 + $0xe8] sm:$0xff]
      %v807 = vld [vmem:[#allocation2 + $0xf0] sm:$0xff]
      %v808 = vld [vmem:[#allocation2 + $0xf8] sm:$0xff]
      %v809 = vld [vmem:[#allocation2 + $0x100] sm:$0xff]
      %v810 = vld [vmem:[#allocation2 + $0x108] sm:$0xff]
      %v811 = vld [vmem:[#allocation2 + $0x110] sm:$0xff]
      %v812 = vld [vmem:[#allocation2 + $0x118] sm:$0xff]
      %v813 = vld [vmem:[#allocation2 + $0x120] sm:$0xff]
      %v814 = vld [vmem:[#allocation2 + $0x128] sm:$0xff]
      %v815 = vld [vmem:[#allocation2 + $0x130] sm:$0xff]
      %v816 = vld [vmem:[#allocation2 + $0x138] sm:$0xff]
      %v817 = vld [vmem:[#allocation2 + $0x140] sm:$0xff]
      %v818 = vld [vmem:[#allocation2 + $0x148] sm:$0xff]
      %v819 = vld [vmem:[#allocation2 + $0x150] sm:$0xff]
      %v820 = vld [vmem:[#allocation2 + $0x158] sm:$0xff]
      %v821 = vld [vmem:[#allocation2 + $0x160] sm:$0xff]
      %v822 = vld [vmem:[#allocation2 + $0x168] sm:$0xff]
      %v823 = vld [vmem:[#allocation2 + $0x170] sm:$0xff]
      %v824 = vld [vmem:[#allocation2 + $0x178] sm:$0xff]
      %v825 = vld [vmem:[#allocation2 + $0x180] sm:$0xff]
      %v826 = vld [vmem:[#allocation2 + $0x188] sm:$0xff]
      %v827 = vld [vmem:[%s2] sm:$0xff]
      %v828 = vld [vmem:[%s2 + $0x8] sm:$0xff]
      %v829 = vld [vmem:[%s2 + $0x10] sm:$0xff]
      %v830 = vld [vmem:[%s2 + $0x18] sm:$0xff]
      %832 = vset.pattern.permute.xlu0 0
      %833 = vperm.xlu0 %832, %v827
      %v834 = vpop.permute.xlu0 %833
      %837 = vset.pattern.permute.xlu0 0
      %838 = vperm.xlu0 %837, %v828
      %v839 = vpop.permute.xlu0 %838
      %842 = vset.pattern.permute.xlu0 0
      %843 = vperm.xlu0 %842, %v829
      %v844 = vpop.permute.xlu0 %843
      %847 = vset.pattern.permute.xlu0 0
      %848 = vperm.xlu0 %847, %v830
      %v849 = vpop.permute.xlu0 %848
      %vm851 = vcmask 130048
      %v853 = vsel %vm851, %v764, 0
      %v856 = vsel %vm851, %v768, 0
      %v859 = vsel %vm851, %v772, 0
      %v862 = vsel %vm851, %v776, 0
      %864 = vmatprep.subr.mxu0 0.0
      %865 = vmatpush1.msra.mxu0 %v792
      %866 = vmatprep.subr.mxu0 0.0
      %867 = vmatpush1.msra.mxu0 %v791
      %868 = vmatprep.subr.mxu0 0.0
      %869 = vmatpush1.msra.mxu0 %v790
      %870 = vmatprep.subr.mxu0 0.0
      %871 = vmatpush1.msra.mxu0 %v789
      %872 = vmatprep.subr.mxu0 0.0
      %873 = vmatpush1.msra.mxu0 %v788
      %874 = vmatprep.subr.mxu0 0.0
      %875 = vmatpush1.msra.mxu0 %v787
      %876 = vmatprep.subr.mxu0 0.0
      %877 = vmatpush1.msra.mxu0 %v786
      %878 = vmatprep.subr.mxu0 0.0
      %879 = vmatpush1.msra.mxu0 %v785
      %880 = vmatprep.subr.mxu0 0.0
      %881 = vmatpush1.msra.mxu0 %v784
      %882 = vmatprep.subr.mxu0 0.0
      %883 = vmatpush1.msra.mxu0 %v783
      %884 = vmatprep.subr.mxu0 0.0
      %885 = vmatpush1.msra.mxu0 %v782
      %886 = vmatprep.subr.mxu0 0.0
      %887 = vmatpush1.msra.mxu0 %v781
      %888 = vmatprep.subr.mxu0 0.0
      %889 = vmatpush1.msra.mxu0 %v780
      %890 = vmatprep.subr.mxu0 0.0
      %891 = vmatpush1.msra.mxu0 %v779
      %892 = vmatprep.subr.mxu0 0.0
      %893 = vmatpush1.msra.mxu0 %v778
      %894 = vmatprep.subr.mxu0 0.0
      %895 = vmatpush1.msra.mxu0 %v777
      %896 = vmatprep.subr.mxu0 0.0
      %897 = vmatpush2.msra.mxu0 %v808
      %898 = vmatprep.subr.mxu0 0.0
      %899 = vmatpush2.msra.mxu0 %v807
      %900 = vmatprep.subr.mxu0 0.0
      %901 = vmatpush2.msra.mxu0 %v806
      %902 = vmatprep.subr.mxu0 0.0
      %903 = vmatpush2.msra.mxu0 %v805
      %904 = vmatprep.subr.mxu0 0.0
      %905 = vmatpush2.msra.mxu0 %v804
      %906 = vmatprep.subr.mxu0 0.0
      %907 = vmatpush2.msra.mxu0 %v803
      %908 = vmatprep.subr.mxu0 0.0
      %909 = vmatpush2.msra.mxu0 %v802
      %910 = vmatprep.subr.mxu0 0.0
      %911 = vmatpush2.msra.mxu0 %v801
      %912 = vmatprep.subr.mxu0 0.0
      %913 = vmatpush2.msra.mxu0 %v800
      %914 = vmatprep.subr.mxu0 0.0
      %915 = vmatpush2.msra.mxu0 %v799
      %916 = vmatprep.subr.mxu0 0.0
      %917 = vmatpush2.msra.mxu0 %v798
      %918 = vmatprep.subr.mxu0 0.0
      %919 = vmatpush2.msra.mxu0 %v797
      %920 = vmatprep.subr.mxu0 0.0
      %921 = vmatpush2.msra.mxu0 %v796
      %922 = vmatprep.subr.mxu0 0.0
      %923 = vmatpush2.msra.mxu0 %v795
      %924 = vmatprep.subr.mxu0 0.0
      %925 = vmatpush2.msra.mxu0 %v794
      %926 = vmatprep.subr.mxu0 0.0
      %927 = vmatpush2.msra.mxu0 %v793
      %928 = vmatprep.mubr.f32.mxu0 %v762
      %929 = vmatmul.mubr.f32.gmra.mxu0 %v761
      %v930 = vpop.f32.mrf.mxu0
      %v931 = vadd.f32 %v834, %v930
      %v932 = vpop.f32.mrf.mxu0
      %933 = vmatprep.mubr.f32.mxu0 %v766
      %934 = vmatmul.mubr.f32.gmra.mxu0 %v765
      %v935 = vpop.f32.mrf.mxu0
      %v936 = vadd.f32 %v839, %v935
      %v937 = vpop.f32.mrf.mxu0
      %938 = vmatprep.mubr.f32.mxu0 %v770
      %939 = vmatmul.mubr.f32.gmra.mxu0 %v769
      %v940 = vpop.f32.mrf.mxu0
      %v941 = vadd.f32 %v844, %v940
      %v942 = vpop.f32.mrf.mxu0
      %943 = vmatprep.mubr.f32.mxu0 %v774
      %944 = vmatmul.mubr.f32.gmra.mxu0 %v773
      %v945 = vpop.f32.mrf.mxu0
      %v946 = vadd.f32 %v849, %v945
      %v947 = vpop.f32.mrf.mxu0
      %948 = vdwg.mxu0
      %949 = vmatprep.subr.mxu0 0.0
      %950 = vmatpush1.msra.mxu0 %v824
      %951 = vmatprep.subr.mxu0 0.0
      %952 = vmatpush1.msra.mxu0 %v823
      %953 = vmatprep.subr.mxu0 0.0
      %954 = vmatpush1.msra.mxu0 %v822
      %955 = vmatprep.subr.mxu0 0.0
      %956 = vmatpush1.msra.mxu0 %v821
      %957 = vmatprep.subr.mxu0 0.0
      %958 = vmatpush1.msra.mxu0 %v820
      %959 = vmatprep.subr.mxu0 0.0
      %960 = vmatpush1.msra.mxu0 %v819
      %961 = vmatprep.subr.mxu0 0.0
      %962 = vmatpush1.msra.mxu0 %v818
      %963 = vmatprep.subr.mxu0 0.0
      %964 = vmatpush1.msra.mxu0 %v817
      %965 = vmatprep.subr.mxu0 0.0
      %966 = vmatpush1.msra.mxu0 %v816
      %967 = vmatprep.subr.mxu0 0.0
      %968 = vmatpush1.msra.mxu0 %v815
      %969 = vmatprep.subr.mxu0 0.0
      %970 = vmatpush1.msra.mxu0 %v814
      %971 = vmatprep.subr.mxu0 0.0
      %972 = vmatpush1.msra.mxu0 %v813
      %973 = vmatprep.subr.mxu0 0.0
      %974 = vmatpush1.msra.mxu0 %v812
      %975 = vmatprep.subr.mxu0 0.0
      %976 = vmatpush1.msra.mxu0 %v811
      %977 = vmatprep.subr.mxu0 0.0
      %978 = vmatpush1.msra.mxu0 %v810
      %979 = vmatprep.subr.mxu0 0.0
      %980 = vmatpush1.msra.mxu0 %v809
      %981 = vmatprep.subr.mxu0 0.0
      %982 = vmatpush2.msra.mxu0 0.0
      %983 = vmatprep.subr.mxu0 0.0
      %984 = vmatpush2.msra.mxu0 0.0
      %985 = vmatprep.subr.mxu0 0.0
      %986 = vmatpush2.msra.mxu0 0.0
      %987 = vmatprep.subr.mxu0 0.0
      %988 = vmatpush2.msra.mxu0 0.0
      %989 = vmatprep.subr.mxu0 0.0
      %990 = vmatpush2.msra.mxu0 0.0
      %991 = vmatprep.subr.mxu0 0.0
      %992 = vmatpush2.msra.mxu0 0.0
      %993 = vmatprep.subr.mxu0 0.0
      %994 = vmatpush2.msra.mxu0 0.0
      %995 = vmatprep.subr.mxu0 0.0
      %996 = vmatpush2.msra.mxu0 0.0
      %997 = vmatprep.subr.mxu0 0.0
      %998 = vmatpush2.msra.mxu0 0.0
      %999 = vmatprep.subr.mxu0 0.0
      %1000 = vmatpush2.msra.mxu0 0.0
      %1001 = vmatprep.subr.mxu0 0.0
      %1002 = vmatpush2.msra.mxu0 0.0
      %1003 = vmatprep.subr.mxu0 0.0
      %1004 = vmatpush2.msra.mxu0 0.0
      %1005 = vmatprep.subr.mxu0 0.0
      %1006 = vmatpush2.msra.mxu0 0.0
      %1007 = vmatprep.subr.mxu0 0.0
      %1008 = vmatpush2.msra.mxu0 0.0
      %1009 = vmatprep.subr.mxu0 0.0
      %1010 = vmatpush2.msra.mxu0 %v826
      %1011 = vmatprep.subr.mxu0 0.0
      %1012 = vmatpush2.msra.mxu0 %v825
      %1013 = vmatprep.mubr.f32.mxu0 %v853
      %1014 = vmatmul.mubr.f32.gmra.mxu0 %v763
      %v1015 = vpop.f32.mrf.mxu0
      %v1016 = vadd.f32 %v931, %v1015
      %v1017 = vpop.f32.mrf.mxu0
      %1018 = vmatprep.mubr.f32.mxu0 %v856
      %1019 = vmatmul.mubr.f32.gmra.mxu0 %v767
      %v1020 = vpop.f32.mrf.mxu0
      %v1021 = vadd.f32 %v936, %v1020
      %v1022 = vpop.f32.mrf.mxu0
      %1023 = vmatprep.mubr.f32.mxu0 %v859
      %1024 = vmatmul.mubr.f32.gmra.mxu0 %v771
      %v1025 = vpop.f32.mrf.mxu0
      %v1026 = vadd.f32 %v941, %v1025
      %v1027 = vpop.f32.mrf.mxu0
      %1028 = vmatprep.mubr.f32.mxu0 %v862
      %1029 = vmatmul.mubr.f32.gmra.mxu0 %v775
      %v1030 = vpop.f32.mrf.mxu0
      %v1031 = vadd.f32 %v946, %v1030
      %v1032 = vpop.f32.mrf.mxu0
      %1033 = vdwg.mxu0
      %v1034 = vmax.f32 %v1016, 0.0
      %v1035 = vmax.f32 %v1021, 0.0
      %v1036 = vmax.f32 %v1026, 0.0
      %v1037 = vmax.f32 %v1031, 0.0
      %v1038 = vpack.c.bf16 %v1035, %v1034
      %v1039 = vpack.c.bf16 %v1037, %v1036
      %v1042 = vunpack.c.l.b16 %v1038
      %v1043 = vunpack.c.h.b16 %v1038
      %v1044 = vunpack.c.l.b16 %v1039
      %v1045 = vunpack.c.h.b16 %v1039
      %v1046 = vpack.c.b16 %v1042, %v1042
      %v1047 = vpack.c.b16 %v1043, %v1043
      %v1048 = vpack.c.b16 %v1044, %v1044
      %v1049 = vpack.c.b16 %v1045, %v1045
      %1054 = vst [vmem:[%s204] sm:$0xf] %v1046
      %1055 = vst [vmem:[%s204 + $0x4] sm:$0xf] %v1047
      %1056 = vst [vmem:[%s204 + $0x8] sm:$0xf] %v1048
      %1057 = vst [vmem:[%s204 + $0xc] sm:$0xf] %v1049
      %p1058 = scmp.lt.s32.totalorder %s18, 1
      %s1059 = scalar_select %p1058, %s18, 1
      %p1060 = scmp.lt.s32.totalorder %s19, 0
      %s1061 = scalar_select %p1060, %s19, 0
      %s1062 = smul.addr %s1059, 4
      %s1063 = sadd.s32 %s1061, %s1062
      %s1064 = smul.addr %s1063, 4
      %s1065 = scalar_lea.vmem %s3, %s1064
      // Predicated region
      $region33: #{encoder_forward.5} parent=31 // pred_check
        %p1066 = pneg %p116
      $region34: #{encoder_forward.5} parent=31 // pred_check_branch
        %1068 = sbr.rel (%p1066) target = $region36
      $region35: #{encoder_forward.5} parent=31 // pred_region
        _
      $region36: #{encoder_forward.5} parent=31 // pred_fallthru
        _
    $region32: #{encoder_forward.5} parent=5 // pred_fallthru
      _
    %p1069 = scmp.le.s32.totalorder 2, %s9
    // Predicated region
    $region37: #{encoder_forward.5} parent=5 // pred_check
      %p1070 = pneg %p1069
    $region38: #{encoder_forward.5} parent=5 // pred_check_branch
      %1072 = sbr.rel (%p1070) target = $region40
    $region39: #{encoder_forward.5} parent=5 // pred_region
      %s1073 = ssub.s32 %s9, 2
      // Predicated region
      $region41: #{encoder_forward.5} parent=39 // pred_check
        %p1074 = pneg %p122
      $region42: #{encoder_forward.5} parent=39 // pred_check_branch
        %1076 = sbr.rel (%p1074) target = $region44
      $region43: #{encoder_forward.5} parent=39 // pred_region
        %p1077 = scmp.lt.s32.totalorder %s20, 1
        %s1078 = scalar_select %p1077, %s20, 1
        %p1079 = scmp.lt.s32.totalorder %s21, 0
        %s1080 = scalar_select %p1079, %s21, 0
        %s1081 = smul.addr %s1078, 4
        %s1082 = sadd.s32 %s1080, %s1081
        %s1083 = smul.addr %s1082, 4
        %s1084 = scalar_lea.vmem %s3, %s1083
      $region44: #{encoder_forward.5} parent=39 // pred_fallthru
        _
    $region40: #{encoder_forward.5} parent=5 // pred_fallthru
      _
  $region6: #{encoder_forward.5} parent=0 // loop_footer
    %s13 = sadd.s32 1, %s9
  $region7: #{encoder_forward.5} parent=0 // loop_footer_branch
    %8 = sbr.rel target = $region3
  $region8: #{encoder_forward.5} parent=0 // loop_exit
    _

// kernel: encoder_forward.6
$region0: #{encoder_forward.6}
  #allocation0 [shape = 'u32[]', space=smem, size = 0x4, offset = 0x4, fixed_abs, tag = 'smem constant byte address 0x4 - core index']
  #allocation1 [shape = 'u32[144,128]{1,0:T(1,128)}', space=vmem, size = 0x12000, scoped, tag = 'internal scratch']
  #allocation2 [shape = 'f32[2,32]{1,0:T(2,128)}', space=vmem, size = 0x400, scoped, tag = 'scratch operand']
  %s0 = inlined_call_operand.vmem [shape: bf16[2,2048], index: 0, kind: input, shape index: {}]
  %s1 = inlined_call_operand.vmem [shape: bf16[32,2048], index: 1, kind: input, shape index: {}]
  %s2 = inlined_call_operand.vmem [shape: f32[1,32], index: 2, kind: input, shape index: {}]
  %s3 = inlined_call_operand.vmem [shape: f32[2,32], index: 3, kind: output, shape index: {}]
  %s4 = sld [smem:[#allocation0]]
  $region30: #{encoder_forward.6} parent=0
    _
  %s6 = ssub.s32 1, %s4
  %s7 = scalar_select 0, %s6, %s4
  // Predicated region
  $region2: #{encoder_forward.6} parent=0 // pred_check
    _
  $region3: #{encoder_forward.6} parent=0 // pred_check_branch
    %9 = sbr.rel (0) target = $region5
  $region4: #{encoder_forward.6} parent=0 // pred_region
    _
  $region5: #{encoder_forward.6} parent=0 // pred_fallthru
    _
  // Predicated region
  $region6: #{encoder_forward.6} parent=0 // pred_check
    _
  $region7: #{encoder_forward.6} parent=0 // pred_check_branch
    %11 = sbr.rel (0) target = $region9
  $region8: #{encoder_forward.6} parent=0 // pred_region
    _
  $region9: #{encoder_forward.6} parent=0 // pred_fallthru
    _
  // Predicated region
  $region10: #{encoder_forward.6} parent=0 // pred_check
    _
  $region11: #{encoder_forward.6} parent=0 // pred_check_branch
    %13 = sbr.rel (0) target = $region13
  $region12: #{encoder_forward.6} parent=0 // pred_region
    _
  $region13: #{encoder_forward.6} parent=0 // pred_fallthru
    _
  %p15 = scmp.eq.s32.totalorder 0, 0
  // Predicated region
  $region14: #{encoder_forward.6} parent=0 // pred_check
    %p16 = pneg %p15
  $region15: #{encoder_forward.6} parent=0 // pred_check_branch
    %18 = sbr.rel (%p16) target = $region17
  $region16: #{encoder_forward.6} parent=0 // pred_region
    %vm19 = vcmask 254976
    %20 = vst.msk [vmem:[#allocation2] sm:$0x3] %vm19, 0.0
  $region17: #{encoder_forward.6} parent=0 // pred_fallthru
    _
  %v21 = vld [vmem:[#allocation2] sm:$0x3]
  %v22 = vld [vmem:[%s0] sm:$0xff]
  %v23 = vld [vmem:[%s0 + $0x8] sm:$0xff]
  %v24 = vld [vmem:[%s1] sm:$0xff]
  %v25 = vld [vmem:[%s1 + $0x8] sm:$0xff]
  %v26 = vld [vmem:[%s1 + $0x10] sm:$0xff]
  %v27 = vld [vmem:[%s1 + $0x18] sm:$0xff]
  %v28 = vld [vmem:[%s1 + $0x20] sm:$0xff]
  %v29 = vld [vmem:[%s1 + $0x28] sm:$0xff]
  %v30 = vld [vmem:[%s1 + $0x30] sm:$0xff]
  %v31 = vld [vmem:[%s1 + $0x38] sm:$0xff]
  %v32 = vld [vmem:[%s1 + $0x40] sm:$0xff]
  %v33 = vld [vmem:[%s1 + $0x48] sm:$0xff]
  %v34 = vld [vmem:[%s1 + $0x50] sm:$0xff]
  %v35 = vld [vmem:[%s1 + $0x58] sm:$0xff]
  %v36 = vld [vmem:[%s1 + $0x60] sm:$0xff]
  %v37 = vld [vmem:[%s1 + $0x68] sm:$0xff]
  %v38 = vld [vmem:[%s1 + $0x70] sm:$0xff]
  %v39 = vld [vmem:[%s1 + $0x78] sm:$0xff]
  %v40 = vld [vmem:[%s1 + $0x80] sm:$0xff]
  %v41 = vld [vmem:[%s1 + $0x88] sm:$0xff]
  %v42 = vld [vmem:[%s1 + $0x90] sm:$0xff]
  %v43 = vld [vmem:[%s1 + $0x98] sm:$0xff]
  %v44 = vld [vmem:[%s1 + $0xa0] sm:$0xff]
  %v45 = vld [vmem:[%s1 + $0xa8] sm:$0xff]
  %v46 = vld [vmem:[%s1 + $0xb0] sm:$0xff]
  %v47 = vld [vmem:[%s1 + $0xb8] sm:$0xff]
  %v48 = vld [vmem:[%s1 + $0xc0] sm:$0xff]
  %v49 = vld [vmem:[%s1 + $0xc8] sm:$0xff]
  %v50 = vld [vmem:[%s1 + $0xd0] sm:$0xff]
  %v51 = vld [vmem:[%s1 + $0xd8] sm:$0xff]
  %v52 = vld [vmem:[%s1 + $0xe0] sm:$0xff]
  %v53 = vld [vmem:[%s1 + $0xe8] sm:$0xff]
  %v54 = vld [vmem:[%s1 + $0xf0] sm:$0xff]
  %v55 = vld [vmem:[%s1 + $0xf8] sm:$0xff]
  %v58 = vcombine.high %v22, %v22
  %v60 = vunpack.c.l.s4 1966171168
  %v61 = vunpack.c.0.s8 %v60
  %v62 = vlaneseq
  %v63 = vshrl.u32 %v62, 7
  %v64 = vsub.s32 %v61, %v63
  %v65 = vrot.slane %v22, %v64
  %v67 = vunpack.c.l.s4 1966171168
  %v68 = vunpack.c.0.s8 %v67
  %v69 = vlaneseq
  %v70 = vshrl.u32 %v69, 7
  %v71 = vsub.s32 %v68, %v70
  %v72 = vrot.slane %v58, %v71
  %v73 = vcombine.high %v65, %v65
  %v74 = vcombine.high %v72, %v72
  %v76 = vunpack.c.l.s4 1966171168
  %v77 = vunpack.c.0.s8 %v76
  %v78 = vlaneseq
  %v79 = vshrl.u32 %v78, 7
  %v80 = vsub.s32 %v77, %v79
  %v81 = vrot.slane %v65, %v80
  %v83 = vunpack.c.l.s4 1966171168
  %v84 = vunpack.c.0.s8 %v83
  %v85 = vlaneseq
  %v86 = vshrl.u32 %v85, 7
  %v87 = vsub.s32 %v84, %v86
  %v88 = vrot.slane %v72, %v87
  %v90 = vunpack.c.l.s4 1966171168
  %v91 = vunpack.c.0.s8 %v90
  %v92 = vlaneseq
  %v93 = vshrl.u32 %v92, 7
  %v94 = vsub.s32 %v91, %v93
  %v95 = vrot.slane %v73, %v94
  %v97 = vunpack.c.l.s4 1966171168
  %v98 = vunpack.c.0.s8 %v97
  %v99 = vlaneseq
  %v100 = vshrl.u32 %v99, 7
  %v101 = vsub.s32 %v98, %v100
  %v102 = vrot.slane %v74, %v101
  %v103 = vcombine.high %v81, %v81
  %v104 = vcombine.high %v88, %v88
  %v105 = vcombine.high %v95, %v95
  %v106 = vcombine.high %v102, %v102
  %v107 = vcombine.high %v23, %v23
  %v109 = vunpack.c.l.s4 1966171168
  %v110 = vunpack.c.0.s8 %v109
  %v111 = vlaneseq
  %v112 = vshrl.u32 %v111, 7
  %v113 = vsub.s32 %v110, %v112
  %v114 = vrot.slane %v23, %v113
  %v116 = vunpack.c.l.s4 1966171168
  %v117 = vunpack.c.0.s8 %v116
  %v118 = vlaneseq
  %v119 = vshrl.u32 %v118, 7
  %v120 = vsub.s32 %v117, %v119
  %v121 = vrot.slane %v107, %v120
  %v122 = vcombine.high %v114, %v114
  %v123 = vcombine.high %v121, %v121
  %v125 = vunpack.c.l.s4 1966171168
  %v126 = vunpack.c.0.s8 %v125
  %v127 = vlaneseq
  %v128 = vshrl.u32 %v127, 7
  %v129 = vsub.s32 %v126, %v128
  %v130 = vrot.slane %v114, %v129
  %v132 = vunpack.c.l.s4 1966171168
  %v133 = vunpack.c.0.s8 %v132
  %v134 = vlaneseq
  %v135 = vshrl.u32 %v134, 7
  %v136 = vsub.s32 %v133, %v135
  %v137 = vrot.slane %v121, %v136
  %v139 = vunpack.c.l.s4 1966171168
  %v140 = vunpack.c.0.s8 %v139
  %v141 = vlaneseq
  %v142 = vshrl.u32 %v141, 7
  %v143 = vsub.s32 %v140, %v142
  %v144 = vrot.slane %v122, %v143
  %v146 = vunpack.c.l.s4 1966171168
  %v147 = vunpack.c.0.s8 %v146
  %v148 = vlaneseq
  %v149 = vshrl.u32 %v148, 7
  %v150 = vsub.s32 %v147, %v149
  %v151 = vrot.slane %v123, %v150
  %v152 = vcombine.high %v130, %v130
  %v153 = vcombine.high %v137, %v137
  %v154 = vcombine.high %v144, %v144
  %v155 = vcombine.high %v151, %v151
  %v204 = vunpack.c.l.b16 %v24
  %v205 = vunpack.c.h.b16 %v24
  %v206 = vunpack.c.l.b16 %v25
  %v207 = vunpack.c.h.b16 %v25
  %v208 = vunpack.c.l.b16 %v26
  %v209 = vunpack.c.h.b16 %v26
  %v210 = vunpack.c.l.b16 %v27
  %v211 = vunpack.c.h.b16 %v27
  %v212 = vunpack.c.l.b16 %v28
  %v213 = vunpack.c.h.b16 %v28
  %v214 = vunpack.c.l.b16 %v29
  %v215 = vunpack.c.h.b16 %v29
  %v216 = vunpack.c.l.b16 %v30
  %v217 = vunpack.c.h.b16 %v30
  %v218 = vunpack.c.l.b16 %v31
  %v219 = vunpack.c.h.b16 %v31
  %v220 = vunpack.c.l.b16 %v32
  %v221 = vunpack.c.h.b16 %v32
  %v222 = vunpack.c.l.b16 %v33
  %v223 = vunpack.c.h.b16 %v33
  %v224 = vunpack.c.l.b16 %v34
  %v225 = vunpack.c.h.b16 %v34
  %v226 = vunpack.c.l.b16 %v35
  %v227 = vunpack.c.h.b16 %v35
  %v228 = vunpack.c.l.b16 %v36
  %v229 = vunpack.c.h.b16 %v36
  %v230 = vunpack.c.l.b16 %v37
  %v231 = vunpack.c.h.b16 %v37
  %v232 = vunpack.c.l.b16 %v38
  %v233 = vunpack.c.h.b16 %v38
  %v234 = vunpack.c.l.b16 %v39
  %v235 = vunpack.c.h.b16 %v39
  %v236 = vunpack.c.l.b16 %v40
  %v237 = vunpack.c.h.b16 %v40
  %v238 = vunpack.c.l.b16 %v41
  %v239 = vunpack.c.h.b16 %v41
  %v240 = vunpack.c.l.b16 %v42
  %v241 = vunpack.c.h.b16 %v42
  %v242 = vunpack.c.l.b16 %v43
  %v243 = vunpack.c.h.b16 %v43
  %v244 = vunpack.c.l.b16 %v44
  %v245 = vunpack.c.h.b16 %v44
  %v246 = vunpack.c.l.b16 %v45
  %v247 = vunpack.c.h.b16 %v45
  %v248 = vunpack.c.l.b16 %v46
  %v249 = vunpack.c.h.b16 %v46
  %v250 = vunpack.c.l.b16 %v47
  %v251 = vunpack.c.h.b16 %v47
  %v252 = vunpack.c.l.b16 %v48
  %v253 = vunpack.c.h.b16 %v48
  %v254 = vunpack.c.l.b16 %v49
  %v255 = vunpack.c.h.b16 %v49
  %v256 = vunpack.c.l.b16 %v50
  %v257 = vunpack.c.h.b16 %v50
  %v258 = vunpack.c.l.b16 %v51
  %v259 = vunpack.c.h.b16 %v51
  %v260 = vunpack.c.l.b16 %v52
  %v261 = vunpack.c.h.b16 %v52
  %v262 = vunpack.c.l.b16 %v53
  %v263 = vunpack.c.h.b16 %v53
  %v264 = vunpack.c.l.b16 %v54
  %v265 = vunpack.c.h.b16 %v54
  %v266 = vunpack.c.l.b16 %v55
  %v267 = vunpack.c.h.b16 %v55
  %v268 = vpack.c.b16 %v220, %v204
  %v269 = vpack.c.b16 %v221, %v205
  %v270 = vpack.c.b16 %v222, %v206
  %v271 = vpack.c.b16 %v223, %v207
  %v272 = vpack.c.b16 %v224, %v208
  %v273 = vpack.c.b16 %v225, %v209
  %v274 = vpack.c.b16 %v226, %v210
  %v275 = vpack.c.b16 %v227, %v211
  %v276 = vpack.c.b16 %v228, %v212
  %v277 = vpack.c.b16 %v229, %v213
  %v278 = vpack.c.b16 %v230, %v214
  %v279 = vpack.c.b16 %v231, %v215
  %v280 = vpack.c.b16 %v232, %v216
  %v281 = vpack.c.b16 %v233, %v217
  %v282 = vpack.c.b16 %v234, %v218
  %v283 = vpack.c.b16 %v235, %v219
  %v284 = vpack.c.b16 %v252, %v236
  %v285 = vpack.c.b16 %v253, %v237
  %v286 = vpack.c.b16 %v254, %v238
  %v287 = vpack.c.b16 %v255, %v239
  %v288 = vpack.c.b16 %v256, %v240
  %v289 = vpack.c.b16 %v257, %v241
  %v290 = vpack.c.b16 %v258, %v242
  %v291 = vpack.c.b16 %v259, %v243
  %v292 = vpack.c.b16 %v260, %v244
  %v293 = vpack.c.b16 %v261, %v245
  %v294 = vpack.c.b16 %v262, %v246
  %v295 = vpack.c.b16 %v263, %v247
  %v296 = vpack.c.b16 %v264, %v248
  %v297 = vpack.c.b16 %v265, %v249
  %v298 = vpack.c.b16 %v266, %v250
  %v299 = vpack.c.b16 %v267, %v251
  %332 = vmatprep.subr.bf16.mxu0 0
  %333 = vmatpush1.bf16.xpose.msra.mxu0 0
  %334 = vmatprep.subr.bf16.mxu0 0
  %335 = vmatpush1.bf16.xpose.msra.mxu0 0
  %336 = vmatprep.subr.bf16.mxu0 0
  %337 = vmatpush1.bf16.xpose.msra.mxu0 0
  %338 = vmatprep.subr.bf16.mxu0 0
  %339 = vmatpush1.bf16.xpose.msra.mxu0 0
  %340 = vmatprep.subr.bf16.mxu0 0
  %341 = vmatpush1.bf16.xpose.msra.mxu0 0
  %342 = vmatprep.subr.bf16.mxu0 0
  %343 = vmatpush1.bf16.xpose.msra.mxu0 0
  %344 = vmatprep.subr.bf16.mxu0 %v285
  %345 = vmatpush1.bf16.xpose.msra.mxu0 %v284
  %346 = vmatprep.subr.bf16.mxu0 %v269
  %347 = vmatpush1.bf16.xpose.msra.mxu0 %v268
  %348 = vmatprep.subr.bf16.mxu0 0
  %349 = vmatpush2.bf16.xpose.msra.mxu0 0
  %350 = vmatprep.subr.bf16.mxu0 0
  %351 = vmatpush2.bf16.xpose.msra.mxu0 0
  %352 = vmatprep.subr.bf16.mxu0 0
  %353 = vmatpush2.bf16.xpose.msra.mxu0 0
  %354 = vmatprep.subr.bf16.mxu0 0
  %355 = vmatpush2.bf16.xpose.msra.mxu0 0
  %356 = vmatprep.subr.bf16.mxu0 0
  %357 = vmatpush2.bf16.xpose.msra.mxu0 0
  %358 = vmatprep.subr.bf16.mxu0 0
  %359 = vmatpush2.bf16.xpose.msra.mxu0 0
  %360 = vmatprep.subr.bf16.mxu0 0
  %361 = vmatpush2.bf16.xpose.msra.mxu0 0
  %362 = vmatprep.subr.bf16.mxu0 0
  %363 = vmatpush2.bf16.xpose.msra.mxu0 0
  %364 = vmatprep.mubr.bf16.mxu0 %v95
  %365 = vmatmul.mubr.bf16.gmra.mxu0 %v81
  %v366 = vpop.f32.mrf.mxu0
  %v367 = vadd.f32 0.0, %v366
  %v368 = vpop.f32.mrf.mxu0
  %v369 = vpop.f32.mrf.mxu0
  %v370 = vpop.f32.mrf.mxu0
  %371 = vdwg.mxu0
  %372 = vmatprep.subr.bf16.mxu0 0
  %373 = vmatpush1.bf16.xpose.msra.mxu0 0
  %374 = vmatprep.subr.bf16.mxu0 0
  %375 = vmatpush1.bf16.xpose.msra.mxu0 0
  %376 = vmatprep.subr.bf16.mxu0 0
  %377 = vmatpush1.bf16.xpose.msra.mxu0 0
  %378 = vmatprep.subr.bf16.mxu0 0
  %379 = vmatpush1.bf16.xpose.msra.mxu0 0
  %380 = vmatprep.subr.bf16.mxu0 0
  %381 = vmatpush1.bf16.xpose.msra.mxu0 0
  %382 = vmatprep.subr.bf16.mxu0 0
  %383 = vmatpush1.bf16.xpose.msra.mxu0 0
  %384 = vmatprep.subr.bf16.mxu0 %v287
  %385 = vmatpush1.bf16.xpose.msra.mxu0 %v286
  %386 = vmatprep.subr.bf16.mxu0 %v271
  %387 = vmatpush1.bf16.xpose.msra.mxu0 %v270
  %388 = vmatprep.subr.bf16.mxu0 0
  %389 = vmatpush2.bf16.xpose.msra.mxu0 0
  %390 = vmatprep.subr.bf16.mxu0 0
  %391 = vmatpush2.bf16.xpose.msra.mxu0 0
  %392 = vmatprep.subr.bf16.mxu0 0
  %393 = vmatpush2.bf16.xpose.msra.mxu0 0
  %394 = vmatprep.subr.bf16.mxu0 0
  %395 = vmatpush2.bf16.xpose.msra.mxu0 0
  %396 = vmatprep.subr.bf16.mxu0 0
  %397 = vmatpush2.bf16.xpose.msra.mxu0 0
  %398 = vmatprep.subr.bf16.mxu0 0
  %399 = vmatpush2.bf16.xpose.msra.mxu0 0
  %400 = vmatprep.subr.bf16.mxu0 0
  %401 = vmatpush2.bf16.xpose.msra.mxu0 0
  %402 = vmatprep.subr.bf16.mxu0 0
  %403 = vmatpush2.bf16.xpose.msra.mxu0 0
  %404 = vmatprep.mubr.bf16.mxu0 %v105
  %405 = vmatmul.mubr.bf16.gmra.mxu0 %v103
  %v406 = vpop.f32.mrf.mxu0
  %v407 = vadd.f32 %v367, %v406
  %v408 = vpop.f32.mrf.mxu0
  %v409 = vpop.f32.mrf.mxu0
  %v410 = vpop.f32.mrf.mxu0
  %411 = vdwg.mxu0
  %412 = vmatprep.subr.bf16.mxu0 0
  %413 = vmatpush1.bf16.xpose.msra.mxu0 0
  %414 = vmatprep.subr.bf16.mxu0 0
  %415 = vmatpush1.bf16.xpose.msra.mxu0 0
  %416 = vmatprep.subr.bf16.mxu0 0
  %417 = vmatpush1.bf16.xpose.msra.mxu0 0
  %418 = vmatprep.subr.bf16.mxu0 0
  %419 = vmatpush1.bf16.xpose.msra.mxu0 0
  %420 = vmatprep.subr.bf16.mxu0 0
  %421 = vmatpush1.bf16.xpose.msra.mxu0 0
  %422 = vmatprep.subr.bf16.mxu0 0
  %423 = vmatpush1.bf16.xpose.msra.mxu0 0
  %424 = vmatprep.subr.bf16.mxu0 %v289
  %425 = vmatpush1.bf16.xpose.msra.mxu0 %v288
  %426 = vmatprep.subr.bf16.mxu0 %v273
  %427 = vmatpush1.bf16.xpose.msra.mxu0 %v272
  %428 = vmatprep.subr.bf16.mxu0 0
  %429 = vmatpush2.bf16.xpose.msra.mxu0 0
  %430 = vmatprep.subr.bf16.mxu0 0
  %431 = vmatpush2.bf16.xpose.msra.mxu0 0
  %432 = vmatprep.subr.bf16.mxu0 0
  %433 = vmatpush2.bf16.xpose.msra.mxu0 0
  %434 = vmatprep.subr.bf16.mxu0 0
  %435 = vmatpush2.bf16.xpose.msra.mxu0 0
  %436 = vmatprep.subr.bf16.mxu0 0
  %437 = vmatpush2.bf16.xpose.msra.mxu0 0
  %438 = vmatprep.subr.bf16.mxu0 0
  %439 = vmatpush2.bf16.xpose.msra.mxu0 0
  %440 = vmatprep.subr.bf16.mxu0 0
  %441 = vmatpush2.bf16.xpose.msra.mxu0 0
  %442 = vmatprep.subr.bf16.mxu0 0
  %443 = vmatpush2.bf16.xpose.msra.mxu0 0
  %444 = vmatprep.mubr.bf16.mxu0 %v102
  %445 = vmatmul.mubr.bf16.gmra.mxu0 %v88
  %v446 = vpop.f32.mrf.mxu0
  %v447 = vadd.f32 %v407, %v446
  %v448 = vpop.f32.mrf.mxu0
  %v449 = vpop.f32.mrf.mxu0
  %v450 = vpop.f32.mrf.mxu0
  %451 = vdwg.mxu0
  %452 = vmatprep.subr.bf16.mxu0 0
  %453 = vmatpush1.bf16.xpose.msra.mxu0 0
  %454 = vmatprep.subr.bf16.mxu0 0
  %455 = vmatpush1.bf16.xpose.msra.mxu0 0
  %456 = vmatprep.subr.bf16.mxu0 0
  %457 = vmatpush1.bf16.xpose.msra.mxu0 0
  %458 = vmatprep.subr.bf16.mxu0 0
  %459 = vmatpush1.bf16.xpose.msra.mxu0 0
  %460 = vmatprep.subr.bf16.mxu0 0
  %461 = vmatpush1.bf16.xpose.msra.mxu0 0
  %462 = vmatprep.subr.bf16.mxu0 0
  %463 = vmatpush1.bf16.xpose.msra.mxu0 0
  %464 = vmatprep.subr.bf16.mxu0 %v291
  %465 = vmatpush1.bf16.xpose.msra.mxu0 %v290
  %466 = vmatprep.subr.bf16.mxu0 %v275
  %467 = vmatpush1.bf16.xpose.msra.mxu0 %v274
  %468 = vmatprep.subr.bf16.mxu0 0
  %469 = vmatpush2.bf16.xpose.msra.mxu0 0
  %470 = vmatprep.subr.bf16.mxu0 0
  %471 = vmatpush2.bf16.xpose.msra.mxu0 0
  %472 = vmatprep.subr.bf16.mxu0 0
  %473 = vmatpush2.bf16.xpose.msra.mxu0 0
  %474 = vmatprep.subr.bf16.mxu0 0
  %475 = vmatpush2.bf16.xpose.msra.mxu0 0
  %476 = vmatprep.subr.bf16.mxu0 0
  %477 = vmatpush2.bf16.xpose.msra.mxu0 0
  %478 = vmatprep.subr.bf16.mxu0 0
  %479 = vmatpush2.bf16.xpose.msra.mxu0 0
  %480 = vmatprep.subr.bf16.mxu0 0
  %481 = vmatpush2.bf16.xpose.msra.mxu0 0
  %482 = vmatprep.subr.bf16.mxu0 0
  %483 = vmatpush2.bf16.xpose.msra.mxu0 0
  %484 = vmatprep.mubr.bf16.mxu0 %v106
  %485 = vmatmul.mubr.bf16.gmra.mxu0 %v104
  %v486 = vpop.f32.mrf.mxu0
  %v487 = vadd.f32 %v447, %v486
  %v488 = vpop.f32.mrf.mxu0
  %v489 = vpop.f32.mrf.mxu0
  %v490 = vpop.f32.mrf.mxu0
  %491 = vdwg.mxu0
  %492 = vmatprep.subr.bf16.mxu0 0
  %493 = vmatpush1.bf16.xpose.msra.mxu0 0
  %494 = vmatprep.subr.bf16.mxu0 0
  %495 = vmatpush1.bf16.xpose.msra.mxu0 0
  %496 = vmatprep.subr.bf16.mxu0 0
  %497 = vmatpush1.bf16.xpose.msra.mxu0 0
  %498 = vmatprep.subr.bf16.mxu0 0
  %499 = vmatpush1.bf16.xpose.msra.mxu0 0
  %500 = vmatprep.subr.bf16.mxu0 0
  %501 = vmatpush1.bf16.xpose.msra.mxu0 0
  %502 = vmatprep.subr.bf16.mxu0 0
  %503 = vmatpush1.bf16.xpose.msra.mxu0 0
  %504 = vmatprep.subr.bf16.mxu0 %v293
  %505 = vmatpush1.bf16.xpose.msra.mxu0 %v292
  %506 = vmatprep.subr.bf16.mxu0 %v277
  %507 = vmatpush1.bf16.xpose.msra.mxu0 %v276
  %508 = vmatprep.subr.bf16.mxu0 0
  %509 = vmatpush2.bf16.xpose.msra.mxu0 0
  %510 = vmatprep.subr.bf16.mxu0 0
  %511 = vmatpush2.bf16.xpose.msra.mxu0 0
  %512 = vmatprep.subr.bf16.mxu0 0
  %513 = vmatpush2.bf16.xpose.msra.mxu0 0
  %514 = vmatprep.subr.bf16.mxu0 0
  %515 = vmatpush2.bf16.xpose.msra.mxu0 0
  %516 = vmatprep.subr.bf16.mxu0 0
  %517 = vmatpush2.bf16.xpose.msra.mxu0 0
  %518 = vmatprep.subr.bf16.mxu0 0
  %519 = vmatpush2.bf16.xpose.msra.mxu0 0
  %520 = vmatprep.subr.bf16.mxu0 0
  %521 = vmatpush2.bf16.xpose.msra.mxu0 0
  %522 = vmatprep.subr.bf16.mxu0 0
  %523 = vmatpush2.bf16.xpose.msra.mxu0 0
  %524 = vmatprep.mubr.bf16.mxu0 %v144
  %525 = vmatmul.mubr.bf16.gmra.mxu0 %v130
  %v526 = vpop.f32.mrf.mxu0
  %v527 = vadd.f32 %v487, %v526
  %v528 = vpop.f32.mrf.mxu0
  %v529 = vpop.f32.mrf.mxu0
  %v530 = vpop.f32.mrf.mxu0
  %531 = vdwg.mxu0
  %532 = vmatprep.subr.bf16.mxu0 0
  %533 = vmatpush1.bf16.xpose.msra.mxu0 0
  %534 = vmatprep.subr.bf16.mxu0 0
  %535 = vmatpush1.bf16.xpose.msra.mxu0 0
  %536 = vmatprep.subr.bf16.mxu0 0
  %537 = vmatpush1.bf16.xpose.msra.mxu0 0
  %538 = vmatprep.subr.bf16.mxu0 0
  %539 = vmatpush1.bf16.xpose.msra.mxu0 0
  %540 = vmatprep.subr.bf16.mxu0 0
  %541 = vmatpush1.bf16.xpose.msra.mxu0 0
  %542 = vmatprep.subr.bf16.mxu0 0
  %543 = vmatpush1.bf16.xpose.msra.mxu0 0
  %544 = vmatprep.subr.bf16.mxu0 %v295
  %545 = vmatpush1.bf16.xpose.msra.mxu0 %v294
  %546 = vmatprep.subr.bf16.mxu0 %v279
  %547 = vmatpush1.bf16.xpose.msra.mxu0 %v278
  %548 = vmatprep.subr.bf16.mxu0 0
  %549 = vmatpush2.bf16.xpose.msra.mxu0 0
  %550 = vmatprep.subr.bf16.mxu0 0
  %551 = vmatpush2.bf16.xpose.msra.mxu0 0
  %552 = vmatprep.subr.bf16.mxu0 0
  %553 = vmatpush2.bf16.xpose.msra.mxu0 0
  %554 = vmatprep.subr.bf16.mxu0 0
  %555 = vmatpush2.bf16.xpose.msra.mxu0 0
  %556 = vmatprep.subr.bf16.mxu0 0
  %557 = vmatpush2.bf16.xpose.msra.mxu0 0
  %558 = vmatprep.subr.bf16.mxu0 0
  %559 = vmatpush2.bf16.xpose.msra.mxu0 0
  %560 = vmatprep.subr.bf16.mxu0 0
  %561 = vmatpush2.bf16.xpose.msra.mxu0 0
  %562 = vmatprep.subr.bf16.mxu0 0
  %563 = vmatpush2.bf16.xpose.msra.mxu0 0
  %564 = vmatprep.mubr.bf16.mxu0 %v154
  %565 = vmatmul.mubr.bf16.gmra.mxu0 %v152
  %v566 = vpop.f32.mrf.mxu0
  %v567 = vadd.f32 %v527, %v566
  %v568 = vpop.f32.mrf.mxu0
  %v569 = vpop.f32.mrf.mxu0
  %v570 = vpop.f32.mrf.mxu0
  %571 = vdwg.mxu0
  %572 = vmatprep.subr.bf16.mxu0 0
  %573 = vmatpush1.bf16.xpose.msra.mxu0 0
  %574 = vmatprep.subr.bf16.mxu0 0
  %575 = vmatpush1.bf16.xpose.msra.mxu0 0
  %576 = vmatprep.subr.bf16.mxu0 0
  %577 = vmatpush1.bf16.xpose.msra.mxu0 0
  %578 = vmatprep.subr.bf16.mxu0 0
  %579 = vmatpush1.bf16.xpose.msra.mxu0 0
  %580 = vmatprep.subr.bf16.mxu0 0
  %581 = vmatpush1.bf16.xpose.msra.mxu0 0
  %582 = vmatprep.subr.bf16.mxu0 0
  %583 = vmatpush1.bf16.xpose.msra.mxu0 0
  %584 = vmatprep.subr.bf16.mxu0 %v297
  %585 = vmatpush1.bf16.xpose.msra.mxu0 %v296
  %586 = vmatprep.subr.bf16.mxu0 %v281
  %587 = vmatpush1.bf16.xpose.msra.mxu0 %v280
  %588 = vmatprep.subr.bf16.mxu0 0
  %589 = vmatpush2.bf16.xpose.msra.mxu0 0
  %590 = vmatprep.subr.bf16.mxu0 0
  %591 = vmatpush2.bf16.xpose.msra.mxu0 0
  %592 = vmatprep.subr.bf16.mxu0 0
  %593 = vmatpush2.bf16.xpose.msra.mxu0 0
  %594 = vmatprep.subr.bf16.mxu0 0
  %595 = vmatpush2.bf16.xpose.msra.mxu0 0
  %596 = vmatprep.subr.bf16.mxu0 0
  %597 = vmatpush2.bf16.xpose.msra.mxu0 0
  %598 = vmatprep.subr.bf16.mxu0 0
  %599 = vmatpush2.bf16.xpose.msra.mxu0 0
  %600 = vmatprep.subr.bf16.mxu0 0
  %601 = vmatpush2.bf16.xpose.msra.mxu0 0
  %602 = vmatprep.subr.bf16.mxu0 0
  %603 = vmatpush2.bf16.xpose.msra.mxu0 0
  %604 = vmatprep.mubr.bf16.mxu0 %v151
  %605 = vmatmul.mubr.bf16.gmra.mxu0 %v137
  %v606 = vpop.f32.mrf.mxu0
  %v607 = vadd.f32 %v567, %v606
  %v608 = vpop.f32.mrf.mxu0
  %v609 = vpop.f32.mrf.mxu0
  %v610 = vpop.f32.mrf.mxu0
  %611 = vdwg.mxu0
  %612 = vmatprep.subr.bf16.mxu0 0
  %613 = vmatpush1.bf16.xpose.msra.mxu0 0
  %614 = vmatprep.subr.bf16.mxu0 0
  %615 = vmatpush1.bf16.xpose.msra.mxu0 0
  %616 = vmatprep.subr.bf16.mxu0 0
  %617 = vmatpush1.bf16.xpose.msra.mxu0 0
  %618 = vmatprep.subr.bf16.mxu0 0
  %619 = vmatpush1.bf16.xpose.msra.mxu0 0
  %620 = vmatprep.subr.bf16.mxu0 0
  %621 = vmatpush1.bf16.xpose.msra.mxu0 0
  %622 = vmatprep.subr.bf16.mxu0 0
  %623 = vmatpush1.bf16.xpose.msra.mxu0 0
  %624 = vmatprep.subr.bf16.mxu0 %v299
  %625 = vmatpush1.bf16.xpose.msra.mxu0 %v298
  %626 = vmatprep.subr.bf16.mxu0 %v283
  %627 = vmatpush1.bf16.xpose.msra.mxu0 %v282
  %628 = vmatprep.subr.bf16.mxu0 0
  %629 = vmatpush2.bf16.xpose.msra.mxu0 0
  %630 = vmatprep.subr.bf16.mxu0 0
  %631 = vmatpush2.bf16.xpose.msra.mxu0 0
  %632 = vmatprep.subr.bf16.mxu0 0
  %633 = vmatpush2.bf16.xpose.msra.mxu0 0
  %634 = vmatprep.subr.bf16.mxu0 0
  %635 = vmatpush2.bf16.xpose.msra.mxu0 0
  %636 = vmatprep.subr.bf16.mxu0 0
  %637 = vmatpush2.bf16.xpose.msra.mxu0 0
  %638 = vmatprep.subr.bf16.mxu0 0
  %639 = vmatpush2.bf16.xpose.msra.mxu0 0
  %640 = vmatprep.subr.bf16.mxu0 0
  %641 = vmatpush2.bf16.xpose.msra.mxu0 0
  %642 = vmatprep.subr.bf16.mxu0 0
  %643 = vmatpush2.bf16.xpose.msra.mxu0 0
  %644 = vmatprep.mubr.bf16.mxu0 %v155
  %645 = vmatmul.mubr.bf16.gmra.mxu0 %v153
  %v646 = vpop.f32.mrf.mxu0
  %v647 = vadd.f32 %v607, %v646
  %v648 = vpop.f32.mrf.mxu0
  %v649 = vpop.f32.mrf.mxu0
  %v650 = vpop.f32.mrf.mxu0
  %651 = vdwg.mxu0
  %v652 = vadd.f32 %v21, %v647
  %vm653 = vcmask 254976
  %654 = vst.msk [vmem:[#allocation2] sm:$0x3] %vm653, %v652
  // Predicated region
  $region18: #{encoder_forward.6} parent=0 // pred_check
    %p655 = pneg %p15
  $region19: #{encoder_forward.6} parent=0 // pred_check_branch
    %657 = sbr.rel (%p655) target = $region21
  $region20: #{encoder_forward.6} parent=0 // pred_region
    %v658 = vld [vmem:[#allocation2] sm:$0x3]
    %v659 = vld [vmem:[%s2] sm:$0x1]
    %v661 = vlaneseq
    %v662 = vshrl.u32 %v661, 7
    %v663 = vsub.s32 0, %v662
    %v664 = vrot.slane %v659, %v663
    %v666 = vadd.f32 %v658, %v664
    %vm667 = vcmp.gt.f32.partialorder %v666, 0.0
    %v668 = vmul.f32 %v666, 0.2
    %v669 = vsel %vm667, %v666, %v668
    %670 = vst.msk [vmem:[%s3] sm:$0x3] %vm653, %v669
  $region21: #{encoder_forward.6} parent=0 // pred_fallthru
    _
  // Predicated region
  $region22: #{encoder_forward.6} parent=0 // pred_check
    _
  $region23: #{encoder_forward.6} parent=0 // pred_check_branch
    %672 = sbr.rel (0) target = $region25
  $region24: #{encoder_forward.6} parent=0 // pred_region
    _
  $region25: #{encoder_forward.6} parent=0 // pred_fallthru
    _
  // Predicated region
  $region26: #{encoder_forward.6} parent=0 // pred_check
    _
  $region27: #{encoder_forward.6} parent=0 // pred_check_branch
    %674 = sbr.rel (0) target = $region29
  $region28: #{encoder_forward.6} parent=0 // pred_region
    _
  $region29: #{encoder_forward.6} parent=0 // pred_fallthru
    _

// kernel: encoder_forward.7
$region0: #{encoder_forward.7}
  #allocation0 [shape = 'u32[]', space=smem, size = 0x4, offset = 0x4, fixed_abs, tag = 'smem constant byte address 0x4 - core index']
  #allocation1 [shape = 'u32[144,128]{1,0:T(1,128)}', space=vmem, size = 0x12000, scoped, tag = 'internal scratch']
  %s0 = inlined_call_operand.vmem [shape: f32[2,32], index: 0, kind: input, shape index: {}]
  %s1 = inlined_call_operand.vmem [shape: f32[32,16], index: 1, kind: input, shape index: {}]
  %s2 = inlined_call_operand.vmem [shape: f32[1,16], index: 2, kind: input, shape index: {}]
  %s3 = inlined_call_operand.vmem [shape: f32[2,16], index: 3, kind: output, shape index: {}]
  %s4 = sld [smem:[#allocation0]]
  $region22: #{encoder_forward.7} parent=0
    _
  %s6 = ssub.s32 1, %s4
  %s7 = scalar_select 0, %s6, %s4
  // Predicated region
  $region2: #{encoder_forward.7} parent=0 // pred_check
    _
  $region3: #{encoder_forward.7} parent=0 // pred_check_branch
    %9 = sbr.rel (0) target = $region5
  $region4: #{encoder_forward.7} parent=0 // pred_region
    _
  $region5: #{encoder_forward.7} parent=0 // pred_fallthru
    _
  // Predicated region
  $region6: #{encoder_forward.7} parent=0 // pred_check
    _
  $region7: #{encoder_forward.7} parent=0 // pred_check_branch
    %11 = sbr.rel (0) target = $region9
  $region8: #{encoder_forward.7} parent=0 // pred_region
    _
  $region9: #{encoder_forward.7} parent=0 // pred_fallthru
    _
  // Predicated region
  $region10: #{encoder_forward.7} parent=0 // pred_check
    _
  $region11: #{encoder_forward.7} parent=0 // pred_check_branch
    %13 = sbr.rel (0) target = $region13
  $region12: #{encoder_forward.7} parent=0 // pred_region
    _
  $region13: #{encoder_forward.7} parent=0 // pred_fallthru
    _
  %v14 = vld [vmem:[%s0] sm:$0x3]
  %v15 = vld [vmem:[%s1] sm:$0xff]
  %v16 = vld [vmem:[%s1 + $0x8] sm:$0xff]
  %v17 = vld [vmem:[%s1 + $0x10] sm:$0xff]
  %v18 = vld [vmem:[%s1 + $0x18] sm:$0xff]
  %v19 = vld [vmem:[%s2] sm:$0x1]
  %v21 = vlaneseq
  %v22 = vshrl.u32 %v21, 7
  %v23 = vsub.s32 0, %v22
  %v24 = vrot.slane %v19, %v23
  %vm26 = vcmask 261120
  %v28 = vsel %vm26, %v14, 0
  %30 = vmatprep.subr.mxu0 0.0
  %31 = vmatpush1.msra.mxu0 0.0
  %32 = vmatprep.subr.mxu0 0.0
  %33 = vmatpush1.msra.mxu0 0.0
  %34 = vmatprep.subr.mxu0 0.0
  %35 = vmatpush1.msra.mxu0 0.0
  %36 = vmatprep.subr.mxu0 0.0
  %37 = vmatpush1.msra.mxu0 0.0
  %38 = vmatprep.subr.mxu0 0.0
  %39 = vmatpush1.msra.mxu0 0.0
  %40 = vmatprep.subr.mxu0 0.0
  %41 = vmatpush1.msra.mxu0 0.0
  %42 = vmatprep.subr.mxu0 0.0
  %43 = vmatpush1.msra.mxu0 0.0
  %44 = vmatprep.subr.mxu0 0.0
  %45 = vmatpush1.msra.mxu0 0.0
  %46 = vmatprep.subr.mxu0 0.0
  %47 = vmatpush1.msra.mxu0 0.0
  %48 = vmatprep.subr.mxu0 0.0
  %49 = vmatpush1.msra.mxu0 0.0
  %50 = vmatprep.subr.mxu0 0.0
  %51 = vmatpush1.msra.mxu0 0.0
  %52 = vmatprep.subr.mxu0 0.0
  %53 = vmatpush1.msra.mxu0 0.0
  %54 = vmatprep.subr.mxu0 0.0
  %55 = vmatpush1.msra.mxu0 %v18
  %56 = vmatprep.subr.mxu0 0.0
  %57 = vmatpush1.msra.mxu0 %v17
  %58 = vmatprep.subr.mxu0 0.0
  %59 = vmatpush1.msra.mxu0 %v16
  %60 = vmatprep.subr.mxu0 0.0
  %61 = vmatpush1.msra.mxu0 %v15
  %62 = vmatprep.subr.mxu0 0.0
  %63 = vmatpush2.msra.mxu0 0.0
  %64 = vmatprep.subr.mxu0 0.0
  %65 = vmatpush2.msra.mxu0 0.0
  %66 = vmatprep.subr.mxu0 0.0
  %67 = vmatpush2.msra.mxu0 0.0
  %68 = vmatprep.subr.mxu0 0.0
  %69 = vmatpush2.msra.mxu0 0.0
  %70 = vmatprep.subr.mxu0 0.0
  %71 = vmatpush2.msra.mxu0 0.0
  %72 = vmatprep.subr.mxu0 0.0
  %73 = vmatpush2.msra.mxu0 0.0
  %74 = vmatprep.subr.mxu0 0.0
  %75 = vmatpush2.msra.mxu0 0.0
  %76 = vmatprep.subr.mxu0 0.0
  %77 = vmatpush2.msra.mxu0 0.0
  %78 = vmatprep.subr.mxu0 0.0
  %79 = vmatpush2.msra.mxu0 0.0
  %80 = vmatprep.subr.mxu0 0.0
  %81 = vmatpush2.msra.mxu0 0.0
  %82 = vmatprep.subr.mxu0 0.0
  %83 = vmatpush2.msra.mxu0 0.0
  %84 = vmatprep.subr.mxu0 0.0
  %85 = vmatpush2.msra.mxu0 0.0
  %86 = vmatprep.subr.mxu0 0.0
  %87 = vmatpush2.msra.mxu0 0.0
  %88 = vmatprep.subr.mxu0 0.0
  %89 = vmatpush2.msra.mxu0 0.0
  %90 = vmatprep.subr.mxu0 0.0
  %91 = vmatpush2.msra.mxu0 0.0
  %92 = vmatprep.subr.mxu0 0.0
  %93 = vmatpush2.msra.mxu0 0.0
  %94 = vmatprep.mubr.f32.mxu0 0.0
  %95 = vmatmul.mubr.f32.gmra.mxu0 %v28
  %v96 = vpop.f32.mrf.mxu0
  %v97 = vadd.f32 %v24, %v96
  %v98 = vpop.f32.mrf.mxu0
  %99 = vdwg.mxu0
  %vm100 = vcmask 123904
  %101 = vst.msk [vmem:[%s3] sm:$0x3] %vm100, %v97
  // Predicated region
  $region14: #{encoder_forward.7} parent=0 // pred_check
    _
  $region15: #{encoder_forward.7} parent=0 // pred_check_branch
    %103 = sbr.rel (0) target = $region17
  $region16: #{encoder_forward.7} parent=0 // pred_region
    _
  $region17: #{encoder_forward.7} parent=0 // pred_fallthru
    _
  // Predicated region
  $region18: #{encoder_forward.7} parent=0 // pred_check
    _
  $region19: #{encoder_forward.7} parent=0 // pred_check_branch
    %105 = sbr.rel (0) target = $region21
  $region20: #{encoder_forward.7} parent=0 // pred_region
    _
  $region21: #{encoder_forward.7} parent=0 // pred_fallthru
    _

</llo_original>
